<compile_context>
chip_gen: v7x
topology: tpu7x:2x2x1
jax: 0.10.0
libtpu: 0.0.40
codegen_flags: <defaults>
</compile_context>

<pallas_src>
import math
import functools

import jax
import jax.numpy as jnp
from jax import lax
from jax.experimental import pallas as pl
from jax.experimental.pallas import tpu as pltpu

EPS = 1e-6                      # matches LayerNormalization(eps=10**-6)
VMEM_LIMIT = 48 * 1024 * 1024   # safe on v7x (64 MiB/TC), uses v5e/v6e headroom


def _tile(dim, target, align):
    """Largest tile <= target that divides `dim` and is `align`-aligned, else full dim."""
    if dim <= target:
        return dim
    t = (target // align) * align
    while t >= align:
        if dim % t == 0:
            return t
        t -= align
    return dim


# ----------------------- linear (optionally LN-fused) ----------------------- #

def _linear_kernel(*refs, relu, has_res, has_ln, single_k):
    x_ref, w_ref, b_ref = refs[0], refs[1], refs[2]
    i = 3
    if has_ln:
        la_ref, lb_ref = refs[i], refs[i + 1]
        i += 2
    if has_res:
        res_ref = refs[i]
        i += 1
    o_ref = refs[i]
    i += 1
    acc_ref = None if single_k else refs[i]

    x = x_ref[...]
    if has_ln:
        # fused pre-norm: whole K row is resident (single K tile enforced by wrapper)
        xf = x.astype(jnp.float32)
        d = xf.shape[-1]
        mean = jnp.mean(xf, axis=-1, keepdims=True)
        # torch.Tensor.std default is unbiased (ddof=1)
        var = jnp.sum((xf - mean) ** 2, axis=-1, keepdims=True) * (1.0 / (d - 1))
        inv = pl.reciprocal(jnp.sqrt(var) + EPS, approx=False)
        xf = (xf - mean) * (la_ref[...].astype(jnp.float32) * inv) \
             + lb_ref[...].astype(jnp.float32)
        x_mx = xf.astype(jnp.bfloat16)
    else:
        x_mx = x.astype(jnp.bfloat16)
    w_mx = w_ref[...].astype(jnp.bfloat16)          # bf16 MXU feed, f32 accumulate

    def epilogue(y):                                 # y is f32
        y = y + b_ref[...].astype(jnp.float32)
        if relu:
            y = jnp.maximum(y, 0.0)
        if has_res:
            y = y + res_ref[...].astype(jnp.float32)
        return y.astype(o_ref.dtype)

    if single_k:
        o_ref[...] = epilogue(
            jnp.dot(x_mx, w_mx, preferred_element_type=jnp.float32))
    else:
        k = pl.program_id(2)

        @pl.when(k == 0)
        def _():
            acc_ref[...] = jnp.zeros_like(acc_ref)

        acc_ref[...] += jnp.dot(x_mx, w_mx, preferred_element_type=jnp.float32)

        @pl.when(k == pl.num_programs(2) - 1)
        def _():
            o_ref[...] = epilogue(acc_ref[...])


def linear(x2d, w, b, residual=None, relu=False, ln=None):
    """y = [LayerNorm](x2d) @ w + b  [+ relu] [+ residual].

    LayerNorm fusion needs the whole contraction axis in one tile; otherwise a
    standalone layernorm() pass runs first.
    """
    M, K = x2d.shape
    N = w.shape[1]

    if ln is not None and K > 2048:
        # TODO(synk): very wide models fall back to an un-fused LayerNorm pass.
        x2d = layernorm(x2d, ln[0], ln[1])
        ln = None

    has_ln = ln is not None
    has_res = residual is not None

    tm = _tile(M, 512, 8)
    tn = _tile(N, 512, 128)
    tk = K if has_ln else _tile(K, 512, 128)
    single_k = (K // tk) == 1

    kernel = functools.partial(_linear_kernel, relu=relu, has_res=has_res,
                               has_ln=has_ln, single_k=single_k)

    args = [x2d, w, b.reshape(1, N)]
    if single_k:
        grid = (M // tm, N // tn)
        in_specs = [
            pl.BlockSpec((tm, tk), lambda i, j: (i, 0)),
            pl.BlockSpec((tk, tn), lambda i, j: (0, j)),
            pl.BlockSpec((1, tn), lambda i, j: (0, j)),
        ]
        if has_ln:
            in_specs += [pl.BlockSpec((1, K), lambda i, j: (0, 0)),
                         pl.BlockSpec((1, K), lambda i, j: (0, 0))]
            args += [ln[0].reshape(1, K), ln[1].reshape(1, K)]
        if has_res:
            in_specs.append(pl.BlockSpec((tm, tn), lambda i, j: (i, j)))
            args.append(residual)
        out_spec = pl.BlockSpec((tm, tn), lambda i, j: (i, j))
        scratch = []
        semantics = ("parallel", "parallel")
    else:
        grid = (M // tm, N // tn, K // tk)
        in_specs = [
            pl.BlockSpec((tm, tk), lambda i, j, k: (i, k)),
            pl.BlockSpec((tk, tn), lambda i, j, k: (k, j)),
            pl.BlockSpec((1, tn), lambda i, j, k: (0, j)),
        ]
        if has_res:
            in_specs.append(pl.BlockSpec((tm, tn), lambda i, j, k: (i, j)))
            args.append(residual)
        out_spec = pl.BlockSpec((tm, tn), lambda i, j, k: (i, j))
        scratch = [pltpu.VMEM((tm, tn), jnp.float32)]
        semantics = ("parallel", "parallel", "arbitrary")

    return pl.pallas_call(
        kernel,
        out_shape=jax.ShapeDtypeStruct((M, N), x2d.dtype),
        grid=grid,
        in_specs=in_specs,
        out_specs=out_spec,
        scratch_shapes=scratch,
        compiler_params=pltpu.CompilerParams(
            dimension_semantics=semantics,
            vmem_limit_bytes=VMEM_LIMIT,
        ),
    )(*args)


# -------------------------- standalone layer norm --------------------------- #

def _layernorm_kernel(x_ref, a_ref, b_ref, o_ref):
    x = x_ref[...].astype(jnp.float32)
    d = x.shape[-1]
    mean = jnp.mean(x, axis=-1, keepdims=True)
    var = jnp.sum((x - mean) ** 2, axis=-1, keepdims=True) * (1.0 / (d - 1))
    inv = pl.reciprocal(jnp.sqrt(var) + EPS, approx=False)   # one recip per row
    scale = a_ref[...].astype(jnp.float32) * inv              # fold alpha in
    y = (x - mean) * scale + b_ref[...].astype(jnp.float32)
    o_ref[...] = y.astype(o_ref.dtype)


def layernorm(x2d, alpha, bias):
    """x2d: (M, D); alpha/bias: (D,). Row-tiled, lane-dense (tile, D) blocks."""
    M, D = x2d.shape
    tr = _tile(M, 512, 8)
    return pl.pallas_call(
        _layernorm_kernel,
        out_shape=jax.ShapeDtypeStruct((M, D), x2d.dtype),
        grid=(M // tr,),
        in_specs=[
            pl.BlockSpec((tr, D), lambda i: (i, 0)),
            pl.BlockSpec((1, D), lambda i: (0, 0)),
            pl.BlockSpec((1, D), lambda i: (0, 0)),
        ],
        out_specs=pl.BlockSpec((tr, D), lambda i: (i, 0)),
        compiler_params=pltpu.CompilerParams(
            dimension_semantics=("parallel",),
            vmem_limit_bytes=VMEM_LIMIT,
        ),
    )(x2d, alpha.reshape(1, D), bias.reshape(1, D))


# ----------------------------- flash attention ------------------------------ #

def _mha_flash_kernel(qb_ref, kb_ref, vb_ref, bias_ref, o_ref,
                      m_sc, l_sc, acc_sc, *, heads, dk, scale):
    ki = pl.program_id(2)

    @pl.when(ki == 0)
    def _():
        m_sc[...] = jnp.full_like(m_sc, -jnp.inf)
        l_sc[...] = jnp.zeros_like(l_sc)
        acc_sc[...] = jnp.zeros_like(acc_sc)

    # scale folded into Q once per grid step; bf16 feed for the MXU
    q_all = (qb_ref[0] * scale).astype(jnp.bfloat16)    # (tq,  D)
    k_all = kb_ref[0].astype(jnp.bfloat16)              # (tkv, D)
    v_all = vb_ref[0].astype(jnp.bfloat16)              # (tkv, D)
    neg = bias_ref[0].astype(jnp.float32)                # (1, tkv) additive mask bias

    for hd in range(heads):                              # static unroll over heads
        lo, hi = hd * dk, (hd + 1) * dk
        # contract on dk of both operands (no explicit transpose of K)
        s = lax.dot_general(q_all[:, lo:hi], k_all[:, lo:hi],
                            (((1,), (1,)), ((), ())),
                            preferred_element_type=jnp.float32)
        s = s + neg                                      # hoisted mask: one VPU add

        m_prev = m_sc[hd]                                # (tq, 1)
        m_new = jnp.maximum(m_prev, jnp.max(s, axis=-1, keepdims=True))
        alpha = jnp.exp(m_prev - m_new)
        p = jnp.exp(s - m_new)                           # (tq, tkv) f32
        l_sc[hd] = alpha * l_sc[hd] + jnp.sum(p, axis=-1, keepdims=True)
        acc_sc[:, lo:hi] = alpha * acc_sc[:, lo:hi] + jnp.dot(
            p.astype(jnp.bfloat16), v_all[:, lo:hi],
            preferred_element_type=jnp.float32)
        m_sc[hd] = m_new

    @pl.when(ki == pl.num_programs(2) - 1)
    def _():
        # normalize in the (tq, D) accumulator, then one lane-dense store
        for hd in range(heads):
            lo, hi = hd * dk, (hd + 1) * dk
            acc_sc[:, lo:hi] = acc_sc[:, lo:hi] * pl.reciprocal(l_sc[hd],
                                                                approx=False)
        o_ref[0] = acc_sc[...].astype(o_ref.dtype)


def flash_attention(qkv3d, mask_bias, heads, D):
    """qkv3d: (B, S, 3D) fused projections; mask_bias: (B, 1, S) additive bias.

    Returns (B, S, D) merged-heads attention output (no HBM Q/K/V slices).
    """
    B, S, threeD = qkv3d.shape
    dk = D // heads
    tq = _tile(S, 256, 8)
    tkv = _tile(S, 256, 128)   # 128-aligned so the (1,1,tkv) bias block is legal

    kernel = functools.partial(_mha_flash_kernel, heads=heads, dk=dk,
                               scale=1.0 / math.sqrt(dk))

    if D % 128 == 0:
        # read the fused buffer directly via column-block index maps (0/1/2)
        q_arg = k_arg = v_arg = qkv3d
        q_spec = pl.BlockSpec((1, tq, D), lambda b, qi, ki: (b, qi, 0))
        k_spec = pl.BlockSpec((1, tkv, D), lambda b, qi, ki: (b, ki, 1))
        v_spec = pl.BlockSpec((1, tkv, D), lambda b, qi, ki: (b, ki, 2))
    else:
        # TODO(synk): non-lane-aligned D falls back to XLA slice materialization.
        q_arg = qkv3d[..., :D]
        k_arg = qkv3d[..., D:2 * D]
        v_arg = qkv3d[..., 2 * D:]
        q_spec = pl.BlockSpec((1, tq, D), lambda b, qi, ki: (b, qi, 0))
        k_spec = pl.BlockSpec((1, tkv, D), lambda b, qi, ki: (b, ki, 0))
        v_spec = pl.BlockSpec((1, tkv, D), lambda b, qi, ki: (b, ki, 0))

    return pl.pallas_call(
        kernel,
        out_shape=jax.ShapeDtypeStruct((B, S, D), qkv3d.dtype),
        grid=(B, S // tq, S // tkv),
        in_specs=[
            q_spec, k_spec, v_spec,
            pl.BlockSpec((1, 1, tkv), lambda b, qi, ki: (b, 0, ki)),
        ],
        out_specs=pl.BlockSpec((1, tq, D), lambda b, qi, ki: (b, qi, 0)),
        scratch_shapes=[
            pltpu.VMEM((heads, tq, 1), jnp.float32),    # running max m
            pltpu.VMEM((heads, tq, 1), jnp.float32),    # running denom l
            pltpu.VMEM((tq, D), jnp.float32),           # running numerator (lane-dense)
        ],
        compiler_params=pltpu.CompilerParams(
            dimension_semantics=("parallel", "parallel", "arbitrary"),
            vmem_limit_bytes=VMEM_LIMIT,
        ),
    )(q_arg, k_arg, v_arg, mask_bias)


# ------------------------------- model glue -------------------------------- #

def encoder_block(x2d, mask_bias, p, heads, B, S, D):
    # TODO(synk): dropout layers are identity (eval mode) — not implemented.
    # LN1 fused into the QKV matmul prologue (single K tile, D <= 2048).
    qkv = linear(x2d, p["wqkv"], p["bqkv"], ln=(p["ln1_a"], p["ln1_b"]))  # (M, 3D)
    attn = flash_attention(qkv.reshape(B, S, 3 * D), mask_bias, heads, D)
    x2d = linear(attn.reshape(B * S, D), p["wo"], p["bo"], residual=x2d)  # + residual
    # LN2 fused into FFN-1; bias+ReLU fused; residual fused into FFN-2 epilogue.
    h1 = linear(x2d, p["w1"], p["b1"], relu=True, ln=(p["ln2_a"], p["ln2_b"]))
    x2d = linear(h1, p["w2"], p["b2"], residual=x2d)
    return x2d


def encoder_forward(src, src_mask, block_params, final_norm, *, heads):
    B, S, D = src.shape
    # additive attention bias: 0 where attend, -1e9 where masked (hoisted out of kernel)
    mask_bias = (src_mask.reshape(B, 1, S).astype(jnp.float32) - 1.0) * 1e9
    x2d = src.reshape(B * S, D)
    for p in block_params:
        x2d = encoder_block(x2d, mask_bias, p, heads, B, S, D)
    out = layernorm(x2d, final_norm["a"], final_norm["b"])
    return out.reshape(B, S, D)


# --------------------------- pure-JAX reference ----------------------------- #

def _ref_layernorm(x, a, b):
    mean = x.mean(axis=-1, keepdims=True)
    std = jnp.std(x, axis=-1, keepdims=True, ddof=1)
    return a * (x - mean) / (std + EPS) + b


def _ref_mha(x, src_mask, p, heads):
    B, S, D = x.shape
    dk = D // heads
    x2 = x.reshape(B * S, D)
    qkv = x2 @ p["wqkv"] + p["bqkv"]
    q, k, v = jnp.split(qkv, 3, axis=-1)

    def split(t):
        return t.reshape(B, S, heads, dk).transpose(0, 2, 1, 3)

    q, k, v = split(q), split(k), split(v)
    s = jnp.einsum("bhqd,bhkd->bhqk", q, k) / math.sqrt(dk)
    s = jnp.where(src_mask == 0.0, -1e9, s)
    pa = jax.nn.softmax(s, axis=-1)
    o = jnp.einsum("bhqk,bhkd->bhqd", pa, v)
    o = o.transpose(0, 2, 1, 3).reshape(B * S, D)
    return (o @ p["wo"] + p["bo"]).reshape(B, S, D)


def _ref_encoder(src, src_mask, block_params, final_norm, heads):
    x = src
    B, S, D = x.shape
    for p in block_params:
        n1 = _ref_layernorm(x, p["ln1_a"], p["ln1_b"])
        x = x + _ref_mha(n1, src_mask, p, heads)
        n2 = _ref_layernorm(x, p["ln2_a"], p["ln2_b"])
        h = jnp.maximum(n2.reshape(B * S, D) @ p["w1"] + p["b1"], 0.0)
        x = x + (h @ p["w2"] + p["b2"]).reshape(B, S, D)
    return _ref_layernorm(x, final_norm["a"], final_norm["b"])


# --------------------------- deterministic params --------------------------- #

def init_block_params(key, d_model, d_ff):
    ks = jax.random.split(key, 12)

    def lin(kw, kb, din, dout):
        w = jax.random.normal(kw, (din, dout), jnp.float32) / math.sqrt(din)
        b = 0.01 * jax.random.normal(kb, (dout,), jnp.float32)
        return w, b

    wq, bq = lin(ks[0], ks[1], d_model, d_model)
    wk, bk = lin(ks[2], ks[3], d_model, d_model)
    wv, bv = lin(ks[4], ks[5], d_model, d_model)
    wo, bo = lin(ks[6], ks[7], d_model, d_model)
    w1, b1 = lin(ks[8], ks[9], d_model, d_ff)
    w2, b2 = lin(ks[10], ks[11], d_ff, d_model)
    return {
        "wqkv": jnp.concatenate([wq, wk, wv], axis=1),
        "bqkv": jnp.concatenate([bq, bk, bv], axis=0),
        "wo": wo, "bo": bo, "w1": w1, "b1": b1, "w2": w2, "b2": b2,
        "ln1_a": jnp.ones((d_model,), jnp.float32),
        "ln1_b": jnp.zeros((d_model,), jnp.float32),
        "ln2_a": jnp.ones((d_model,), jnp.float32),
        "ln2_b": jnp.zeros((d_model,), jnp.float32),
    }


if __name__ == "__main__":
    # D chosen as a multiple of 128 so qkv column-block indexing and lane-dense
    # stores are exercised; shapes stay small.
    B, S, D, H, D_FF, N_BLOCKS = 2, 8, 128, 4, 256, 2

    key = jax.random.PRNGKey(0)
    k_src, k_params = jax.random.split(key)

    src = jax.random.normal(k_src, (B, S, D), jnp.float32)

    # src_mask: (B, 1, 1, S), 1 = attend, 0 = masked (last 2 tokens of batch 1)
    src_mask = jnp.ones((B, 1, 1, S), jnp.float32)
    src_mask = src_mask.at[1, 0, 0, -2:].set(0.0)

    block_params = [
        init_block_params(jax.random.fold_in(k_params, i), D, D_FF)
        for i in range(N_BLOCKS)
    ]
    final_norm = {"a": jnp.ones((D,), jnp.float32),
                  "b": jnp.zeros((D,), jnp.float32)}

    fwd = jax.jit(functools.partial(encoder_forward, heads=H))
    out = jax.block_until_ready(fwd(src, src_mask, block_params, final_norm))

    assert out.shape == (B, S, D)
    assert jnp.all(jnp.isfinite(out))

    # cross-check against a pure-JAX f32 reference (tolerance absorbs the bf16
    # MXU operand feed; accumulation and all statistics stay in f32)
    ref = _ref_encoder(src, src_mask, block_params, final_norm, H)
    err = float(jnp.max(jnp.abs(out - ref)))
    assert err < 0.15, f"mismatch vs reference: max|diff|={err}"

    print("KERNEL_OK")
</pallas_src>

<mosaic_0001>
module attributes {stable_mosaic.version = 11 : i64} {
  func.func @_mha_flash_kernel(%arg0: i32, %arg1: i32, %arg2: i32, %arg3: memref<1x8x128xf32, #tpu.memory_space<vmem>>, %arg4: memref<1x8x128xf32, #tpu.memory_space<vmem>>, %arg5: memref<1x8x128xf32, #tpu.memory_space<vmem>>, %arg6: memref<1x1x8xf32, #tpu.memory_space<vmem>>, %arg7: memref<1x8x128xf32, #tpu.memory_space<vmem>>, %arg8: memref<4x8x1xf32, #tpu.memory_space<vmem>>, %arg9: memref<4x8x1xf32, #tpu.memory_space<vmem>>, %arg10: memref<8x128xf32, #tpu.memory_space<vmem>>) attributes {dimension_semantics = [#tpu.dimension_semantics<parallel>, #tpu.dimension_semantics<parallel>, #tpu.dimension_semantics<arbitrary>], iteration_bounds = array<i64: 2, 1, 1>, scalar_prefetch = 0 : i64, scratch_operands = 3 : i64, tpu.core_type = #tpu.core_type<tc>, window_params = [{transform_indices = @transform_0, window_bounds = array<i64: 1, 8, 128>}, {transform_indices = @transform_1, window_bounds = array<i64: 1, 8, 128>}, {transform_indices = @transform_2, window_bounds = array<i64: 1, 8, 128>}, {transform_indices = @transform_3, window_bounds = array<i64: 1, 1, 8>}, {transform_indices = @transform_4, window_bounds = array<i64: 1, 8, 128>}]} {
    %c0_i32 = arith.constant 0 : i32
    %0 = arith.cmpi eq, %arg2, %c0_i32 : i32
    %1 = arith.extui %0 : i1 to i32
    %c0_i32_0 = arith.constant 0 : i32
    %2 = arith.cmpi ne, %1, %c0_i32_0 : i32
    scf.if %2 {
      %cst_88 = arith.constant 0xFF800000 : f32
      %159 = vector.broadcast %cst_88 : f32 to vector<4x8x1xf32>
      %c0_89 = arith.constant 0 : index
      %c0_90 = arith.constant 0 : index
      %c0_91 = arith.constant 0 : index
      %160 = vector.load %arg8[%c0_89, %c0_90, %c0_91] : memref<4x8x1xf32, #tpu.memory_space<vmem>>, vector<4x8x1xf32>
      tpu.vector_store %arg8[%c0_89, %c0_90, %c0_91], %159 {strides = array<i32>} : memref<4x8x1xf32, #tpu.memory_space<vmem>>, vector<4x8x1xf32>,
      %cst_92 = arith.constant 0.000000e+00 : f32
      %161 = vector.broadcast %cst_92 : f32 to vector<4x8x1xf32>
      %c0_93 = arith.constant 0 : index
      %c0_94 = arith.constant 0 : index
      %c0_95 = arith.constant 0 : index
      %162 = vector.load %arg9[%c0_93, %c0_94, %c0_95] : memref<4x8x1xf32, #tpu.memory_space<vmem>>, vector<4x8x1xf32>
      tpu.vector_store %arg9[%c0_93, %c0_94, %c0_95], %161 {strides = array<i32>} : memref<4x8x1xf32, #tpu.memory_space<vmem>>, vector<4x8x1xf32>,
      %cst_96 = arith.constant 0.000000e+00 : f32
      %163 = vector.broadcast %cst_96 : f32 to vector<8x128xf32>
      %c0_97 = arith.constant 0 : index
      %c0_98 = arith.constant 0 : index
      %164 = vector.load %arg10[%c0_97, %c0_98] : memref<8x128xf32, #tpu.memory_space<vmem>>, vector<8x128xf32>
      tpu.vector_store %arg10[%c0_97, %c0_98], %163 {strides = array<i32>} : memref<8x128xf32, #tpu.memory_space<vmem>>, vector<8x128xf32>,
    } else {
    }
    %c0 = arith.constant 0 : index
    %c0_1 = arith.constant 0 : index
    %c0_2 = arith.constant 0 : index
    %3 = vector.load %arg3[%c0, %c0_1, %c0_2] : memref<1x8x128xf32, #tpu.memory_space<vmem>>, vector<1x8x128xf32>
    %4 = vector.shape_cast %3 : vector<1x8x128xf32> to vector<8x128xf32>
    %cst = arith.constant 0.176776692 : f32
    %5 = vector.broadcast %cst : f32 to vector<8x128xf32>
    %6 = arith.mulf %4, %5 : vector<8x128xf32>
    %7 = arith.truncf %6 : vector<8x128xf32> to vector<8x128xbf16>
    %c0_3 = arith.constant 0 : index
    %c0_4 = arith.constant 0 : index
    %c0_5 = arith.constant 0 : index
    %8 = vector.load %arg4[%c0_3, %c0_4, %c0_5] : memref<1x8x128xf32, #tpu.memory_space<vmem>>, vector<1x8x128xf32>
    %9 = vector.shape_cast %8 : vector<1x8x128xf32> to vector<8x128xf32>
    %10 = arith.truncf %9 : vector<8x128xf32> to vector<8x128xbf16>
    %c0_6 = arith.constant 0 : index
    %c0_7 = arith.constant 0 : index
    %c0_8 = arith.constant 0 : index
    %11 = vector.load %arg5[%c0_6, %c0_7, %c0_8] : memref<1x8x128xf32, #tpu.memory_space<vmem>>, vector<1x8x128xf32>
    %12 = vector.shape_cast %11 : vector<1x8x128xf32> to vector<8x128xf32>
    %13 = arith.truncf %12 : vector<8x128xf32> to vector<8x128xbf16>
    %c0_9 = arith.constant 0 : index
    %c0_10 = arith.constant 0 : index
    %c0_11 = arith.constant 0 : index
    %14 = vector.load %arg6[%c0_9, %c0_10, %c0_11] : memref<1x1x8xf32, #tpu.memory_space<vmem>>, vector<1x1x8xf32>
    %15 = vector.shape_cast %14 : vector<1x1x8xf32> to vector<1x8xf32>
    %16 = vector.extract_strided_slice %7 {offsets = [0, 0], sizes = [8, 32], strides = [1, 1]} : vector<8x128xbf16> to vector<8x32xbf16>
    %17 = vector.extract_strided_slice %10 {offsets = [0, 0], sizes = [8, 32], strides = [1, 1]} : vector<8x128xbf16> to vector<8x32xbf16>
    %cst_12 = arith.constant dense<0.000000e+00> : vector<8x8xf32>
    %18 = tpu.matmul %16, %17, %cst_12 {dimension_numbers = #tpu.dot_dimension_numbers<[1], [1], [0], [0], [0, 0, 1, 0], [], []>} : vector<8x32xbf16>, vector<8x32xbf16>, vector<8x8xf32> -> vector<8x8xf32>
    %19 = vector.broadcast %15 : vector<1x8xf32> to vector<8x8xf32>
    %20 = arith.addf %18, %19 : vector<8x8xf32>
    %c0_13 = arith.constant 0 : index
    %c0_14 = arith.constant 0 : index
    %c0_15 = arith.constant 0 : index
    %21 = vector.load %arg8[%c0_13, %c0_14, %c0_15] : memref<4x8x1xf32, #tpu.memory_space<vmem>>, vector<1x8x1xf32>
    %22 = vector.shape_cast %21 : vector<1x8x1xf32> to vector<8x1xf32>
    %cst_16 = arith.constant dense<0xFF800000> : vector<8xf32>
    %23 = vector.multi_reduction <maximumf>, %20, %cst_16 [1] : vector<8x8xf32> to vector<8xf32>
    %24 = vector.shape_cast %23 : vector<8xf32> to vector<8x1xf32>
    %25 = arith.maximumf %22, %24 : vector<8x1xf32>
    %26 = arith.subf %22, %25 : vector<8x1xf32>
    %27 = math.exp %26 : vector<8x1xf32>
    %28 = vector.broadcast %25 : vector<8x1xf32> to vector<8x8xf32>
    %29 = arith.subf %20, %28 : vector<8x8xf32>
    %30 = math.exp %29 : vector<8x8xf32>
    %c0_17 = arith.constant 0 : index
    %c0_18 = arith.constant 0 : index
    %c0_19 = arith.constant 0 : index
    %31 = vector.load %arg9[%c0_17, %c0_18, %c0_19] : memref<4x8x1xf32, #tpu.memory_space<vmem>>, vector<1x8x1xf32>
    %32 = vector.shape_cast %31 : vector<1x8x1xf32> to vector<8x1xf32>
    %33 = arith.mulf %27, %32 : vector<8x1xf32>
    %cst_20 = arith.constant dense<0.000000e+00> : vector<8xf32>
    %34 = vector.multi_reduction <add>, %30, %cst_20 [1] : vector<8x8xf32> to vector<8xf32>
    %35 = vector.shape_cast %34 : vector<8xf32> to vector<8x1xf32>
    %36 = arith.addf %33, %35 : vector<8x1xf32>
    %c0_21 = arith.constant 0 : index
    %c0_22 = arith.constant 0 : index
    %c0_23 = arith.constant 0 : index
    %37 = vector.load %arg9[%c0_21, %c0_22, %c0_23] : memref<4x8x1xf32, #tpu.memory_space<vmem>>, vector<1x8x1xf32>
    %38 = vector.shape_cast %37 : vector<1x8x1xf32> to vector<8x1xf32>
    %39 = vector.shape_cast %36 : vector<8x1xf32> to vector<1x8x1xf32>
    tpu.vector_store %arg9[%c0_21, %c0_22, %c0_23], %39 {strides = array<i32>} : memref<4x8x1xf32, #tpu.memory_space<vmem>>, vector<1x8x1xf32>,
    %c0_24 = arith.constant 0 : index
    %c0_25 = arith.constant 0 : index
    %40 = vector.load %arg10[%c0_24, %c0_25] : memref<8x128xf32, #tpu.memory_space<vmem>>, vector<8x32xf32>
    %41 = vector.broadcast %27 : vector<8x1xf32> to vector<8x32xf32>
    %42 = arith.mulf %41, %40 : vector<8x32xf32>
    %43 = arith.truncf %30 : vector<8x8xf32> to vector<8x8xbf16>
    %44 = vector.extract_strided_slice %13 {offsets = [0, 0], sizes = [8, 32], strides = [1, 1]} : vector<8x128xbf16> to vector<8x32xbf16>
    %cst_26 = arith.constant dense<0.000000e+00> : vector<8x32xf32>
    %45 = tpu.matmul %43, %44, %cst_26 {dimension_numbers = #tpu.dot_dimension_numbers<[1], [0], [0], [1], [0, 0, 1, 1], [], []>} : vector<8x8xbf16>, vector<8x32xbf16>, vector<8x32xf32> -> vector<8x32xf32>
    %46 = arith.addf %42, %45 : vector<8x32xf32>
    %c0_27 = arith.constant 0 : index
    %c0_28 = arith.constant 0 : index
    %47 = vector.load %arg10[%c0_27, %c0_28] : memref<8x128xf32, #tpu.memory_space<vmem>>, vector<8x32xf32>
    tpu.vector_store %arg10[%c0_27, %c0_28], %46 {strides = array<i32>} : memref<8x128xf32, #tpu.memory_space<vmem>>, vector<8x32xf32>,
    %c0_29 = arith.constant 0 : index
    %c0_30 = arith.constant 0 : index
    %c0_31 = arith.constant 0 : index
    %48 = vector.load %arg8[%c0_29, %c0_30, %c0_31] : memref<4x8x1xf32, #tpu.memory_space<vmem>>, vector<1x8x1xf32>
    %49 = vector.shape_cast %48 : vector<1x8x1xf32> to vector<8x1xf32>
    %50 = vector.shape_cast %25 : vector<8x1xf32> to vector<1x8x1xf32>
    tpu.vector_store %arg8[%c0_29, %c0_30, %c0_31], %50 {strides = array<i32>} : memref<4x8x1xf32, #tpu.memory_space<vmem>>, vector<1x8x1xf32>,
    %51 = vector.extract_strided_slice %7 {offsets = [0, 32], sizes = [8, 32], strides = [1, 1]} : vector<8x128xbf16> to vector<8x32xbf16>
    %52 = vector.extract_strided_slice %10 {offsets = [0, 32], sizes = [8, 32], strides = [1, 1]} : vector<8x128xbf16> to vector<8x32xbf16>
    %cst_32 = arith.constant dense<0.000000e+00> : vector<8x8xf32>
    %53 = tpu.matmul %51, %52, %cst_32 {dimension_numbers = #tpu.dot_dimension_numbers<[1], [1], [0], [0], [0, 0, 1, 0], [], []>} : vector<8x32xbf16>, vector<8x32xbf16>, vector<8x8xf32> -> vector<8x8xf32>
    %54 = vector.broadcast %15 : vector<1x8xf32> to vector<8x8xf32>
    %55 = arith.addf %53, %54 : vector<8x8xf32>
    %c1 = arith.constant 1 : index
    %c0_33 = arith.constant 0 : index
    %c0_34 = arith.constant 0 : index
    %56 = vector.load %arg8[%c1, %c0_33, %c0_34] : memref<4x8x1xf32, #tpu.memory_space<vmem>>, vector<1x8x1xf32>
    %57 = vector.shape_cast %56 : vector<1x8x1xf32> to vector<8x1xf32>
    %cst_35 = arith.constant dense<0xFF800000> : vector<8xf32>
    %58 = vector.multi_reduction <maximumf>, %55, %cst_35 [1] : vector<8x8xf32> to vector<8xf32>
    %59 = vector.shape_cast %58 : vector<8xf32> to vector<8x1xf32>
    %60 = arith.maximumf %57, %59 : vector<8x1xf32>
    %61 = arith.subf %57, %60 : vector<8x1xf32>
    %62 = math.exp %61 : vector<8x1xf32>
    %63 = vector.broadcast %60 : vector<8x1xf32> to vector<8x8xf32>
    %64 = arith.subf %55, %63 : vector<8x8xf32>
    %65 = math.exp %64 : vector<8x8xf32>
    %c1_36 = arith.constant 1 : index
    %c0_37 = arith.constant 0 : index
    %c0_38 = arith.constant 0 : index
    %66 = vector.load %arg9[%c1_36, %c0_37, %c0_38] : memref<4x8x1xf32, #tpu.memory_space<vmem>>, vector<1x8x1xf32>
    %67 = vector.shape_cast %66 : vector<1x8x1xf32> to vector<8x1xf32>
    %68 = arith.mulf %62, %67 : vector<8x1xf32>
    %cst_39 = arith.constant dense<0.000000e+00> : vector<8xf32>
    %69 = vector.multi_reduction <add>, %65, %cst_39 [1] : vector<8x8xf32> to vector<8xf32>
    %70 = vector.shape_cast %69 : vector<8xf32> to vector<8x1xf32>
    %71 = arith.addf %68, %70 : vector<8x1xf32>
    %c1_40 = arith.constant 1 : index
    %c0_41 = arith.constant 0 : index
    %c0_42 = arith.constant 0 : index
    %72 = vector.load %arg9[%c1_40, %c0_41, %c0_42] : memref<4x8x1xf32, #tpu.memory_space<vmem>>, vector<1x8x1xf32>
    %73 = vector.shape_cast %72 : vector<1x8x1xf32> to vector<8x1xf32>
    %74 = vector.shape_cast %71 : vector<8x1xf32> to vector<1x8x1xf32>
    tpu.vector_store %arg9[%c1_40, %c0_41, %c0_42], %74 {strides = array<i32>} : memref<4x8x1xf32, #tpu.memory_space<vmem>>, vector<1x8x1xf32>,
    %c0_43 = arith.constant 0 : index
    %c32 = arith.constant 32 : index
    %75 = vector.load %arg10[%c0_43, %c32] : memref<8x128xf32, #tpu.memory_space<vmem>>, vector<8x32xf32>
    %76 = vector.broadcast %62 : vector<8x1xf32> to vector<8x32xf32>
    %77 = arith.mulf %76, %75 : vector<8x32xf32>
    %78 = arith.truncf %65 : vector<8x8xf32> to vector<8x8xbf16>
    %79 = vector.extract_strided_slice %13 {offsets = [0, 32], sizes = [8, 32], strides = [1, 1]} : vector<8x128xbf16> to vector<8x32xbf16>
    %cst_44 = arith.constant dense<0.000000e+00> : vector<8x32xf32>
    %80 = tpu.matmul %78, %79, %cst_44 {dimension_numbers = #tpu.dot_dimension_numbers<[1], [0], [0], [1], [0, 0, 1, 1], [], []>} : vector<8x8xbf16>, vector<8x32xbf16>, vector<8x32xf32> -> vector<8x32xf32>
    %81 = arith.addf %77, %80 : vector<8x32xf32>
    %c0_45 = arith.constant 0 : index
    %c32_46 = arith.constant 32 : index
    %82 = vector.load %arg10[%c0_45, %c32_46] : memref<8x128xf32, #tpu.memory_space<vmem>>, vector<8x32xf32>
    tpu.vector_store %arg10[%c0_45, %c32_46], %81 {strides = array<i32>} : memref<8x128xf32, #tpu.memory_space<vmem>>, vector<8x32xf32>,
    %c1_47 = arith.constant 1 : index
    %c0_48 = arith.constant 0 : index
    %c0_49 = arith.constant 0 : index
    %83 = vector.load %arg8[%c1_47, %c0_48, %c0_49] : memref<4x8x1xf32, #tpu.memory_space<vmem>>, vector<1x8x1xf32>
    %84 = vector.shape_cast %83 : vector<1x8x1xf32> to vector<8x1xf32>
    %85 = vector.shape_cast %60 : vector<8x1xf32> to vector<1x8x1xf32>
    tpu.vector_store %arg8[%c1_47, %c0_48, %c0_49], %85 {strides = array<i32>} : memref<4x8x1xf32, #tpu.memory_space<vmem>>, vector<1x8x1xf32>,
    %86 = vector.extract_strided_slice %7 {offsets = [0, 64], sizes = [8, 32], strides = [1, 1]} : vector<8x128xbf16> to vector<8x32xbf16>
    %87 = vector.extract_strided_slice %10 {offsets = [0, 64], sizes = [8, 32], strides = [1, 1]} : vector<8x128xbf16> to vector<8x32xbf16>
    %cst_50 = arith.constant dense<0.000000e+00> : vector<8x8xf32>
    %88 = tpu.matmul %86, %87, %cst_50 {dimension_numbers = #tpu.dot_dimension_numbers<[1], [1], [0], [0], [0, 0, 1, 0], [], []>} : vector<8x32xbf16>, vector<8x32xbf16>, vector<8x8xf32> -> vector<8x8xf32>
    %89 = vector.broadcast %15 : vector<1x8xf32> to vector<8x8xf32>
    %90 = arith.addf %88, %89 : vector<8x8xf32>
    %c2 = arith.constant 2 : index
    %c0_51 = arith.constant 0 : index
    %c0_52 = arith.constant 0 : index
    %91 = vector.load %arg8[%c2, %c0_51, %c0_52] : memref<4x8x1xf32, #tpu.memory_space<vmem>>, vector<1x8x1xf32>
    %92 = vector.shape_cast %91 : vector<1x8x1xf32> to vector<8x1xf32>
    %cst_53 = arith.constant dense<0xFF800000> : vector<8xf32>
    %93 = vector.multi_reduction <maximumf>, %90, %cst_53 [1] : vector<8x8xf32> to vector<8xf32>
    %94 = vector.shape_cast %93 : vector<8xf32> to vector<8x1xf32>
    %95 = arith.maximumf %92, %94 : vector<8x1xf32>
    %96 = arith.subf %92, %95 : vector<8x1xf32>
    %97 = math.exp %96 : vector<8x1xf32>
    %98 = vector.broadcast %95 : vector<8x1xf32> to vector<8x8xf32>
    %99 = arith.subf %90, %98 : vector<8x8xf32>
    %100 = math.exp %99 : vector<8x8xf32>
    %c2_54 = arith.constant 2 : index
    %c0_55 = arith.constant 0 : index
    %c0_56 = arith.constant 0 : index
    %101 = vector.load %arg9[%c2_54, %c0_55, %c0_56] : memref<4x8x1xf32, #tpu.memory_space<vmem>>, vector<1x8x1xf32>
    %102 = vector.shape_cast %101 : vector<1x8x1xf32> to vector<8x1xf32>
    %103 = arith.mulf %97, %102 : vector<8x1xf32>
    %cst_57 = arith.constant dense<0.000000e+00> : vector<8xf32>
    %104 = vector.multi_reduction <add>, %100, %cst_57 [1] : vector<8x8xf32> to vector<8xf32>
    %105 = vector.shape_cast %104 : vector<8xf32> to vector<8x1xf32>
    %106 = arith.addf %103, %105 : vector<8x1xf32>
    %c2_58 = arith.constant 2 : index
    %c0_59 = arith.constant 0 : index
    %c0_60 = arith.constant 0 : index
    %107 = vector.load %arg9[%c2_58, %c0_59, %c0_60] : memref<4x8x1xf32, #tpu.memory_space<vmem>>, vector<1x8x1xf32>
    %108 = vector.shape_cast %107 : vector<1x8x1xf32> to vector<8x1xf32>
    %109 = vector.shape_cast %106 : vector<8x1xf32> to vector<1x8x1xf32>
    tpu.vector_store %arg9[%c2_58, %c0_59, %c0_60], %109 {strides = array<i32>} : memref<4x8x1xf32, #tpu.memory_space<vmem>>, vector<1x8x1xf32>,
    %c0_61 = arith.constant 0 : index
    %c64 = arith.constant 64 : index
    %110 = vector.load %arg10[%c0_61, %c64] : memref<8x128xf32, #tpu.memory_space<vmem>>, vector<8x32xf32>
    %111 = vector.broadcast %97 : vector<8x1xf32> to vector<8x32xf32>
    %112 = arith.mulf %111, %110 : vector<8x32xf32>
    %113 = arith.truncf %100 : vector<8x8xf32> to vector<8x8xbf16>
    %114 = vector.extract_strided_slice %13 {offsets = [0, 64], sizes = [8, 32], strides = [1, 1]} : vector<8x128xbf16> to vector<8x32xbf16>
    %cst_62 = arith.constant dense<0.000000e+00> : vector<8x32xf32>
    %115 = tpu.matmul %113, %114, %cst_62 {dimension_numbers = #tpu.dot_dimension_numbers<[1], [0], [0], [1], [0, 0, 1, 1], [], []>} : vector<8x8xbf16>, vector<8x32xbf16>, vector<8x32xf32> -> vector<8x32xf32>
    %116 = arith.addf %112, %115 : vector<8x32xf32>
    %c0_63 = arith.constant 0 : index
    %c64_64 = arith.constant 64 : index
    %117 = vector.load %arg10[%c0_63, %c64_64] : memref<8x128xf32, #tpu.memory_space<vmem>>, vector<8x32xf32>
    tpu.vector_store %arg10[%c0_63, %c64_64], %116 {strides = array<i32>} : memref<8x128xf32, #tpu.memory_space<vmem>>, vector<8x32xf32>,
    %c2_65 = arith.constant 2 : index
    %c0_66 = arith.constant 0 : index
    %c0_67 = arith.constant 0 : index
    %118 = vector.load %arg8[%c2_65, %c0_66, %c0_67] : memref<4x8x1xf32, #tpu.memory_space<vmem>>, vector<1x8x1xf32>
    %119 = vector.shape_cast %118 : vector<1x8x1xf32> to vector<8x1xf32>
    %120 = vector.shape_cast %95 : vector<8x1xf32> to vector<1x8x1xf32>
    tpu.vector_store %arg8[%c2_65, %c0_66, %c0_67], %120 {strides = array<i32>} : memref<4x8x1xf32, #tpu.memory_space<vmem>>, vector<1x8x1xf32>,
    %121 = vector.extract_strided_slice %7 {offsets = [0, 96], sizes = [8, 32], strides = [1, 1]} : vector<8x128xbf16> to vector<8x32xbf16>
    %122 = vector.extract_strided_slice %10 {offsets = [0, 96], sizes = [8, 32], strides = [1, 1]} : vector<8x128xbf16> to vector<8x32xbf16>
    %cst_68 = arith.constant dense<0.000000e+00> : vector<8x8xf32>
    %123 = tpu.matmul %121, %122, %cst_68 {dimension_numbers = #tpu.dot_dimension_numbers<[1], [1], [0], [0], [0, 0, 1, 0], [], []>} : vector<8x32xbf16>, vector<8x32xbf16>, vector<8x8xf32> -> vector<8x8xf32>
    %124 = vector.broadcast %15 : vector<1x8xf32> to vector<8x8xf32>
    %125 = arith.addf %123, %124 : vector<8x8xf32>
    %c3 = arith.constant 3 : index
    %c0_69 = arith.constant 0 : index
    %c0_70 = arith.constant 0 : index
    %126 = vector.load %arg8[%c3, %c0_69, %c0_70] : memref<4x8x1xf32, #tpu.memory_space<vmem>>, vector<1x8x1xf32>
    %127 = vector.shape_cast %126 : vector<1x8x1xf32> to vector<8x1xf32>
    %cst_71 = arith.constant dense<0xFF800000> : vector<8xf32>
    %128 = vector.multi_reduction <maximumf>, %125, %cst_71 [1] : vector<8x8xf32> to vector<8xf32>
    %129 = vector.shape_cast %128 : vector<8xf32> to vector<8x1xf32>
    %130 = arith.maximumf %127, %129 : vector<8x1xf32>
    %131 = arith.subf %127, %130 : vector<8x1xf32>
    %132 = math.exp %131 : vector<8x1xf32>
    %133 = vector.broadcast %130 : vector<8x1xf32> to vector<8x8xf32>
    %134 = arith.subf %125, %133 : vector<8x8xf32>
    %135 = math.exp %134 : vector<8x8xf32>
    %c3_72 = arith.constant 3 : index
    %c0_73 = arith.constant 0 : index
    %c0_74 = arith.constant 0 : index
    %136 = vector.load %arg9[%c3_72, %c0_73, %c0_74] : memref<4x8x1xf32, #tpu.memory_space<vmem>>, vector<1x8x1xf32>
    %137 = vector.shape_cast %136 : vector<1x8x1xf32> to vector<8x1xf32>
    %138 = arith.mulf %132, %137 : vector<8x1xf32>
    %cst_75 = arith.constant dense<0.000000e+00> : vector<8xf32>
    %139 = vector.multi_reduction <add>, %135, %cst_75 [1] : vector<8x8xf32> to vector<8xf32>
    %140 = vector.shape_cast %139 : vector<8xf32> to vector<8x1xf32>
    %141 = arith.addf %138, %140 : vector<8x1xf32>
    %c3_76 = arith.constant 3 : index
    %c0_77 = arith.constant 0 : index
    %c0_78 = arith.constant 0 : index
    %142 = vector.load %arg9[%c3_76, %c0_77, %c0_78] : memref<4x8x1xf32, #tpu.memory_space<vmem>>, vector<1x8x1xf32>
    %143 = vector.shape_cast %142 : vector<1x8x1xf32> to vector<8x1xf32>
    %144 = vector.shape_cast %141 : vector<8x1xf32> to vector<1x8x1xf32>
    tpu.vector_store %arg9[%c3_76, %c0_77, %c0_78], %144 {strides = array<i32>} : memref<4x8x1xf32, #tpu.memory_space<vmem>>, vector<1x8x1xf32>,
    %c0_79 = arith.constant 0 : index
    %c96 = arith.constant 96 : index
    %145 = vector.load %arg10[%c0_79, %c96] : memref<8x128xf32, #tpu.memory_space<vmem>>, vector<8x32xf32>
    %146 = vector.broadcast %132 : vector<8x1xf32> to vector<8x32xf32>
    %147 = arith.mulf %146, %145 : vector<8x32xf32>
    %148 = arith.truncf %135 : vector<8x8xf32> to vector<8x8xbf16>
    %149 = vector.extract_strided_slice %13 {offsets = [0, 96], sizes = [8, 32], strides = [1, 1]} : vector<8x128xbf16> to vector<8x32xbf16>
    %cst_80 = arith.constant dense<0.000000e+00> : vector<8x32xf32>
    %150 = tpu.matmul %148, %149, %cst_80 {dimension_numbers = #tpu.dot_dimension_numbers<[1], [0], [0], [1], [0, 0, 1, 1], [], []>} : vector<8x8xbf16>, vector<8x32xbf16>, vector<8x32xf32> -> vector<8x32xf32>
    %151 = arith.addf %147, %150 : vector<8x32xf32>
    %c0_81 = arith.constant 0 : index
    %c96_82 = arith.constant 96 : index
    %152 = vector.load %arg10[%c0_81, %c96_82] : memref<8x128xf32, #tpu.memory_space<vmem>>, vector<8x32xf32>
    tpu.vector_store %arg10[%c0_81, %c96_82], %151 {strides = array<i32>} : memref<8x128xf32, #tpu.memory_space<vmem>>, vector<8x32xf32>,
    %c3_83 = arith.constant 3 : index
    %c0_84 = arith.constant 0 : index
    %c0_85 = arith.constant 0 : index
    %153 = vector.load %arg8[%c3_83, %c0_84, %c0_85] : memref<4x8x1xf32, #tpu.memory_space<vmem>>, vector<1x8x1xf32>
    %154 = vector.shape_cast %153 : vector<1x8x1xf32> to vector<8x1xf32>
    %155 = vector.shape_cast %130 : vector<8x1xf32> to vector<1x8x1xf32>
    tpu.vector_store %arg8[%c3_83, %c0_84, %c0_85], %155 {strides = array<i32>} : memref<4x8x1xf32, #tpu.memory_space<vmem>>, vector<1x8x1xf32>,
    %c0_i32_86 = arith.constant 0 : i32
    %156 = arith.cmpi eq, %arg2, %c0_i32_86 : i32
    %157 = arith.extui %156 : i1 to i32
    %c0_i32_87 = arith.constant 0 : i32
    %158 = arith.cmpi ne, %157, %c0_i32_87 : i32
    scf.if %158 {
      %c0_88 = arith.constant 0 : index
      %c0_89 = arith.constant 0 : index
      %159 = vector.load %arg10[%c0_88, %c0_89] : memref<8x128xf32, #tpu.memory_space<vmem>>, vector<8x32xf32>
      %c0_90 = arith.constant 0 : index
      %c0_91 = arith.constant 0 : index
      %c0_92 = arith.constant 0 : index
      %160 = vector.load %arg9[%c0_90, %c0_91, %c0_92] : memref<4x8x1xf32, #tpu.memory_space<vmem>>, vector<1x8x1xf32>
      %161 = vector.shape_cast %160 : vector<1x8x1xf32> to vector<8x1xf32>
      %162 = tpu.reciprocal %161 : vector<8x1xf32> -> vector<8x1xf32>
      %163 = vector.broadcast %162 : vector<8x1xf32> to vector<8x32xf32>
      %164 = arith.mulf %159, %163 : vector<8x32xf32>
      %c0_93 = arith.constant 0 : index
      %c0_94 = arith.constant 0 : index
      %165 = vector.load %arg10[%c0_93, %c0_94] : memref<8x128xf32, #tpu.memory_space<vmem>>, vector<8x32xf32>
      tpu.vector_store %arg10[%c0_93, %c0_94], %164 {strides = array<i32>} : memref<8x128xf32, #tpu.memory_space<vmem>>, vector<8x32xf32>,
      %c0_95 = arith.constant 0 : index
      %c32_96 = arith.constant 32 : index
      %166 = vector.load %arg10[%c0_95, %c32_96] : memref<8x128xf32, #tpu.memory_space<vmem>>, vector<8x32xf32>
      %c1_97 = arith.constant 1 : index
      %c0_98 = arith.constant 0 : index
      %c0_99 = arith.constant 0 : index
      %167 = vector.load %arg9[%c1_97, %c0_98, %c0_99] : memref<4x8x1xf32, #tpu.memory_space<vmem>>, vector<1x8x1xf32>
      %168 = vector.shape_cast %167 : vector<1x8x1xf32> to vector<8x1xf32>
      %169 = tpu.reciprocal %168 : vector<8x1xf32> -> vector<8x1xf32>
      %170 = vector.broadcast %169 : vector<8x1xf32> to vector<8x32xf32>
      %171 = arith.mulf %166, %170 : vector<8x32xf32>
      %c0_100 = arith.constant 0 : index
      %c32_101 = arith.constant 32 : index
      %172 = vector.load %arg10[%c0_100, %c32_101] : memref<8x128xf32, #tpu.memory_space<vmem>>, vector<8x32xf32>
      tpu.vector_store %arg10[%c0_100, %c32_101], %171 {strides = array<i32>} : memref<8x128xf32, #tpu.memory_space<vmem>>, vector<8x32xf32>,
      %c0_102 = arith.constant 0 : index
      %c64_103 = arith.constant 64 : index
      %173 = vector.load %arg10[%c0_102, %c64_103] : memref<8x128xf32, #tpu.memory_space<vmem>>, vector<8x32xf32>
      %c2_104 = arith.constant 2 : index
      %c0_105 = arith.constant 0 : index
      %c0_106 = arith.constant 0 : index
      %174 = vector.load %arg9[%c2_104, %c0_105, %c0_106] : memref<4x8x1xf32, #tpu.memory_space<vmem>>, vector<1x8x1xf32>
      %175 = vector.shape_cast %174 : vector<1x8x1xf32> to vector<8x1xf32>
      %176 = tpu.reciprocal %175 : vector<8x1xf32> -> vector<8x1xf32>
      %177 = vector.broadcast %176 : vector<8x1xf32> to vector<8x32xf32>
      %178 = arith.mulf %173, %177 : vector<8x32xf32>
      %c0_107 = arith.constant 0 : index
      %c64_108 = arith.constant 64 : index
      %179 = vector.load %arg10[%c0_107, %c64_108] : memref<8x128xf32, #tpu.memory_space<vmem>>, vector<8x32xf32>
      tpu.vector_store %arg10[%c0_107, %c64_108], %178 {strides = array<i32>} : memref<8x128xf32, #tpu.memory_space<vmem>>, vector<8x32xf32>,
      %c0_109 = arith.constant 0 : index
      %c96_110 = arith.constant 96 : index
      %180 = vector.load %arg10[%c0_109, %c96_110] : memref<8x128xf32, #tpu.memory_space<vmem>>, vector<8x32xf32>
      %c3_111 = arith.constant 3 : index
      %c0_112 = arith.constant 0 : index
      %c0_113 = arith.constant 0 : index
      %181 = vector.load %arg9[%c3_111, %c0_112, %c0_113] : memref<4x8x1xf32, #tpu.memory_space<vmem>>, vector<1x8x1xf32>
      %182 = vector.shape_cast %181 : vector<1x8x1xf32> to vector<8x1xf32>
      %183 = tpu.reciprocal %182 : vector<8x1xf32> -> vector<8x1xf32>
      %184 = vector.broadcast %183 : vector<8x1xf32> to vector<8x32xf32>
      %185 = arith.mulf %180, %184 : vector<8x32xf32>
      %c0_114 = arith.constant 0 : index
      %c96_115 = arith.constant 96 : index
      %186 = vector.load %arg10[%c0_114, %c96_115] : memref<8x128xf32, #tpu.memory_space<vmem>>, vector<8x32xf32>
      tpu.vector_store %arg10[%c0_114, %c96_115], %185 {strides = array<i32>} : memref<8x128xf32, #tpu.memory_space<vmem>>, vector<8x32xf32>,
      %c0_116 = arith.constant 0 : index
      %c0_117 = arith.constant 0 : index
      %187 = vector.load %arg10[%c0_116, %c0_117] : memref<8x128xf32, #tpu.memory_space<vmem>>, vector<8x128xf32>
      %c0_118 = arith.constant 0 : index
      %c0_119 = arith.constant 0 : index
      %c0_120 = arith.constant 0 : index
      %188 = vector.load %arg7[%c0_118, %c0_119, %c0_120] : memref<1x8x128xf32, #tpu.memory_space<vmem>>, vector<1x8x128xf32>
      %189 = vector.shape_cast %188 : vector<1x8x128xf32> to vector<8x128xf32>
      %190 = vector.shape_cast %187 : vector<8x128xf32> to vector<1x8x128xf32>
      tpu.vector_store %arg7[%c0_118, %c0_119, %c0_120], %190 {strides = array<i32>} : memref<1x8x128xf32, #tpu.memory_space<vmem>>, vector<1x8x128xf32>,
    } else {
    }
    return
  }
  func.func @transform_0(%arg0: i32, %arg1: i32, %arg2: i32) -> (i32, i32, i32) {
    %c0_i32 = arith.constant 0 : i32
    %c0_i32_0 = arith.constant 0 : i32
    return %arg0, %arg1, %c0_i32 : i32, i32, i32
  }
  func.func @transform_1(%arg0: i32, %arg1: i32, %arg2: i32) -> (i32, i32, i32) {
    %c1_i32 = arith.constant 1 : i32
    %c0_i32 = arith.constant 0 : i32
    return %arg0, %arg2, %c1_i32 : i32, i32, i32
  }
  func.func @transform_2(%arg0: i32, %arg1: i32, %arg2: i32) -> (i32, i32, i32) {
    %c2_i32 = arith.constant 2 : i32
    %c0_i32 = arith.constant 0 : i32
    return %arg0, %arg2, %c2_i32 : i32, i32, i32
  }
  func.func @transform_3(%arg0: i32, %arg1: i32, %arg2: i32) -> (i32, i32, i32) {
    %c0_i32 = arith.constant 0 : i32
    %c0_i32_0 = arith.constant 0 : i32
    return %arg0, %c0_i32, %arg2 : i32, i32, i32
  }
  func.func @transform_4(%arg0: i32, %arg1: i32, %arg2: i32) -> (i32, i32, i32) {
    %c0_i32 = arith.constant 0 : i32
    %c0_i32_0 = arith.constant 0 : i32
    return %arg0, %arg1, %c0_i32 : i32, i32, i32
  }
}

module attributes {stable_mosaic.version = 11 : i64} {
  func.func @_linear_kernel(%arg0: i32, %arg1: i32, %arg2: memref<16x128xf32, #tpu.memory_space<vmem>>, %arg3: memref<128x384xf32, #tpu.memory_space<vmem>>, %arg4: memref<1x384xf32, #tpu.memory_space<vmem>>, %arg5: memref<1x128xf32, #tpu.memory_space<vmem>>, %arg6: memref<1x128xf32, #tpu.memory_space<vmem>>, %arg7: memref<16x384xf32, #tpu.memory_space<vmem>>) attributes {dimension_semantics = [#tpu.dimension_semantics<parallel>, #tpu.dimension_semantics<parallel>], iteration_bounds = array<i64: 1, 1>, scalar_prefetch = 0 : i64, scratch_operands = 0 : i64, tpu.core_type = #tpu.core_type<tc>, window_params = [{transform_indices = @transform_0, window_bounds = array<i64: 16, 128>}, {transform_indices = @transform_1, window_bounds = array<i64: 128, 384>}, {transform_indices = @transform_2, window_bounds = array<i64: 1, 384>}, {pipeline_mode = #tpu.pipeline_mode<synchronous>, transform_indices = @transform_3, window_bounds = array<i64: 1, 128>}, {pipeline_mode = #tpu.pipeline_mode<synchronous>, transform_indices = @transform_4, window_bounds = array<i64: 1, 128>}, {transform_indices = @transform_5, window_bounds = array<i64: 16, 384>}]} {
    %c0 = arith.constant 0 : index
    %c0_0 = arith.constant 0 : index
    %0 = vector.load %arg2[%c0, %c0_0] : memref<16x128xf32, #tpu.memory_space<vmem>>, vector<16x128xf32>
    %cst = arith.constant dense<0.000000e+00> : vector<16xf32>
    %1 = vector.multi_reduction <add>, %0, %cst [1] : vector<16x128xf32> to vector<16xf32>
    %2 = vector.shape_cast %1 : vector<16xf32> to vector<16x1xf32>
    %cst_1 = arith.constant 1.280000e+02 : f32
    %3 = vector.broadcast %cst_1 : f32 to vector<16x1xf32>
    %4 = arith.divf %2, %3 : vector<16x1xf32>
    %5 = vector.broadcast %4 : vector<16x1xf32> to vector<16x128xf32>
    %6 = arith.subf %0, %5 : vector<16x128xf32>
    %7 = arith.mulf %6, %6 : vector<16x128xf32>
    %cst_2 = arith.constant dense<0.000000e+00> : vector<16xf32>
    %8 = vector.multi_reduction <add>, %7, %cst_2 [1] : vector<16x128xf32> to vector<16xf32>
    %9 = vector.shape_cast %8 : vector<16xf32> to vector<16x1xf32>
    %cst_3 = arith.constant 0.00787401571 : f32
    %10 = vector.broadcast %cst_3 : f32 to vector<16x1xf32>
    %11 = arith.mulf %9, %10 : vector<16x1xf32>
    %12 = math.sqrt %11 : vector<16x1xf32>
    %cst_4 = arith.constant 9.99999997E-7 : f32
    %13 = vector.broadcast %cst_4 : f32 to vector<16x1xf32>
    %14 = arith.addf %12, %13 : vector<16x1xf32>
    %15 = tpu.reciprocal %14 : vector<16x1xf32> -> vector<16x1xf32>
    %16 = vector.broadcast %4 : vector<16x1xf32> to vector<16x128xf32>
    %17 = arith.subf %0, %16 : vector<16x128xf32>
    %c0_5 = arith.constant 0 : index
    %c0_6 = arith.constant 0 : index
    %18 = vector.load %arg5[%c0_5, %c0_6] : memref<1x128xf32, #tpu.memory_space<vmem>>, vector<1x128xf32>
    %19 = vector.broadcast %18 : vector<1x128xf32> to vector<16x128xf32>
    %20 = vector.broadcast %15 : vector<16x1xf32> to vector<16x128xf32>
    %21 = arith.mulf %19, %20 : vector<16x128xf32>
    %22 = arith.mulf %17, %21 : vector<16x128xf32>
    %c0_7 = arith.constant 0 : index
    %c0_8 = arith.constant 0 : index
    %23 = vector.load %arg6[%c0_7, %c0_8] : memref<1x128xf32, #tpu.memory_space<vmem>>, vector<1x128xf32>
    %24 = vector.broadcast %23 : vector<1x128xf32> to vector<16x128xf32>
    %25 = arith.addf %22, %24 : vector<16x128xf32>
    %26 = arith.truncf %25 : vector<16x128xf32> to vector<16x128xbf16>
    %c0_9 = arith.constant 0 : index
    %c0_10 = arith.constant 0 : index
    %27 = vector.load %arg3[%c0_9, %c0_10] : memref<128x384xf32, #tpu.memory_space<vmem>>, vector<128x384xf32>
    %28 = arith.truncf %27 : vector<128x384xf32> to vector<128x384xbf16>
    %cst_11 = arith.constant dense<0.000000e+00> : vector<16x384xf32>
    %29 = tpu.matmul %26, %28, %cst_11 {dimension_numbers = #tpu.dot_dimension_numbers<[1], [0], [0], [1], [0, 0, 1, 1], [], []>} : vector<16x128xbf16>, vector<128x384xbf16>, vector<16x384xf32> -> vector<16x384xf32>
    %c0_12 = arith.constant 0 : index
    %c0_13 = arith.constant 0 : index
    %30 = vector.load %arg4[%c0_12, %c0_13] : memref<1x384xf32, #tpu.memory_space<vmem>>, vector<1x384xf32>
    %31 = vector.broadcast %30 : vector<1x384xf32> to vector<16x384xf32>
    %32 = arith.addf %29, %31 : vector<16x384xf32>
    %c0_14 = arith.constant 0 : index
    %c0_15 = arith.constant 0 : index
    %33 = vector.load %arg7[%c0_14, %c0_15] : memref<16x384xf32, #tpu.memory_space<vmem>>, vector<16x384xf32>
    tpu.vector_store %arg7[%c0_14, %c0_15], %32 {strides = array<i32>} : memref<16x384xf32, #tpu.memory_space<vmem>>, vector<16x384xf32>,
    return
  }
  func.func @transform_0(%arg0: i32, %arg1: i32) -> (i32, i32) {
    %c0_i32 = arith.constant 0 : i32
    %c0_i32_0 = arith.constant 0 : i32
    return %arg0, %c0_i32 : i32, i32
  }
  func.func @transform_1(%arg0: i32, %arg1: i32) -> (i32, i32) {
    %c0_i32 = arith.constant 0 : i32
    %c0_i32_0 = arith.constant 0 : i32
    return %c0_i32, %arg1 : i32, i32
  }
  func.func @transform_2(%arg0: i32, %arg1: i32) -> (i32, i32) {
    %c0_i32 = arith.constant 0 : i32
    %c0_i32_0 = arith.constant 0 : i32
    return %c0_i32, %arg1 : i32, i32
  }
  func.func @transform_3(%arg0: i32, %arg1: i32) -> (i32, i32) {
    %c0_i32 = arith.constant 0 : i32
    %c0_i32_0 = arith.constant 0 : i32
    %c0_i32_1 = arith.constant 0 : i32
    return %c0_i32, %c0_i32_0 : i32, i32
  }
  func.func @transform_4(%arg0: i32, %arg1: i32) -> (i32, i32) {
    %c0_i32 = arith.constant 0 : i32
    %c0_i32_0 = arith.constant 0 : i32
    %c0_i32_1 = arith.constant 0 : i32
    return %c0_i32, %c0_i32_0 : i32, i32
  }
  func.func @transform_5(%arg0: i32, %arg1: i32) -> (i32, i32) {
    %c0_i32 = arith.constant 0 : i32
    return %arg0, %arg1 : i32, i32
  }
}

module attributes {stable_mosaic.version = 11 : i64} {
  func.func @_linear_kernel(%arg0: i32, %arg1: i32, %arg2: memref<16x128xf32, #tpu.memory_space<vmem>>, %arg3: memref<128x128xf32, #tpu.memory_space<vmem>>, %arg4: memref<1x128xf32, #tpu.memory_space<vmem>>, %arg5: memref<16x128xf32, #tpu.memory_space<vmem>>, %arg6: memref<16x128xf32, #tpu.memory_space<vmem>>) attributes {dimension_semantics = [#tpu.dimension_semantics<parallel>, #tpu.dimension_semantics<parallel>], iteration_bounds = array<i64: 1, 1>, scalar_prefetch = 0 : i64, scratch_operands = 0 : i64, tpu.core_type = #tpu.core_type<tc>, window_params = [{transform_indices = @transform_0, window_bounds = array<i64: 16, 128>}, {transform_indices = @transform_1, window_bounds = array<i64: 128, 128>}, {transform_indices = @transform_2, window_bounds = array<i64: 1, 128>}, {transform_indices = @transform_3, window_bounds = array<i64: 16, 128>}, {transform_indices = @transform_4, window_bounds = array<i64: 16, 128>}]} {
    %c0 = arith.constant 0 : index
    %c0_0 = arith.constant 0 : index
    %0 = vector.load %arg2[%c0, %c0_0] : memref<16x128xf32, #tpu.memory_space<vmem>>, vector<16x128xf32>
    %1 = arith.truncf %0 : vector<16x128xf32> to vector<16x128xbf16>
    %c0_1 = arith.constant 0 : index
    %c0_2 = arith.constant 0 : index
    %2 = vector.load %arg3[%c0_1, %c0_2] : memref<128x128xf32, #tpu.memory_space<vmem>>, vector<128x128xf32>
    %3 = arith.truncf %2 : vector<128x128xf32> to vector<128x128xbf16>
    %cst = arith.constant dense<0.000000e+00> : vector<16x128xf32>
    %4 = tpu.matmul %1, %3, %cst {dimension_numbers = #tpu.dot_dimension_numbers<[1], [0], [0], [1], [0, 0, 1, 1], [], []>} : vector<16x128xbf16>, vector<128x128xbf16>, vector<16x128xf32> -> vector<16x128xf32>
    %c0_3 = arith.constant 0 : index
    %c0_4 = arith.constant 0 : index
    %5 = vector.load %arg4[%c0_3, %c0_4] : memref<1x128xf32, #tpu.memory_space<vmem>>, vector<1x128xf32>
    %6 = vector.broadcast %5 : vector<1x128xf32> to vector<16x128xf32>
    %7 = arith.addf %4, %6 : vector<16x128xf32>
    %c0_5 = arith.constant 0 : index
    %c0_6 = arith.constant 0 : index
    %8 = vector.load %arg5[%c0_5, %c0_6] : memref<16x128xf32, #tpu.memory_space<vmem>>, vector<16x128xf32>
    %9 = arith.addf %7, %8 : vector<16x128xf32>
    %c0_7 = arith.constant 0 : index
    %c0_8 = arith.constant 0 : index
    %10 = vector.load %arg6[%c0_7, %c0_8] : memref<16x128xf32, #tpu.memory_space<vmem>>, vector<16x128xf32>
    tpu.vector_store %arg6[%c0_7, %c0_8], %9 {strides = array<i32>} : memref<16x128xf32, #tpu.memory_space<vmem>>, vector<16x128xf32>,
    return
  }
  func.func @transform_0(%arg0: i32, %arg1: i32) -> (i32, i32) {
    %c0_i32 = arith.constant 0 : i32
    %c0_i32_0 = arith.constant 0 : i32
    return %arg0, %c0_i32 : i32, i32
  }
  func.func @transform_1(%arg0: i32, %arg1: i32) -> (i32, i32) {
    %c0_i32 = arith.constant 0 : i32
    %c0_i32_0 = arith.constant 0 : i32
    return %c0_i32, %arg1 : i32, i32
  }
  func.func @transform_2(%arg0: i32, %arg1: i32) -> (i32, i32) {
    %c0_i32 = arith.constant 0 : i32
    %c0_i32_0 = arith.constant 0 : i32
    return %c0_i32, %arg1 : i32, i32
  }
  func.func @transform_3(%arg0: i32, %arg1: i32) -> (i32, i32) {
    %c0_i32 = arith.constant 0 : i32
    return %arg0, %arg1 : i32, i32
  }
  func.func @transform_4(%arg0: i32, %arg1: i32) -> (i32, i32) {
    %c0_i32 = arith.constant 0 : i32
    return %arg0, %arg1 : i32, i32
  }
}

module attributes {stable_mosaic.version = 11 : i64} {
  func.func @_linear_kernel(%arg0: i32, %arg1: i32, %arg2: memref<16x128xf32, #tpu.memory_space<vmem>>, %arg3: memref<128x256xf32, #tpu.memory_space<vmem>>, %arg4: memref<1x256xf32, #tpu.memory_space<vmem>>, %arg5: memref<1x128xf32, #tpu.memory_space<vmem>>, %arg6: memref<1x128xf32, #tpu.memory_space<vmem>>, %arg7: memref<16x256xf32, #tpu.memory_space<vmem>>) attributes {dimension_semantics = [#tpu.dimension_semantics<parallel>, #tpu.dimension_semantics<parallel>], iteration_bounds = array<i64: 1, 1>, scalar_prefetch = 0 : i64, scratch_operands = 0 : i64, tpu.core_type = #tpu.core_type<tc>, window_params = [{transform_indices = @transform_0, window_bounds = array<i64: 16, 128>}, {transform_indices = @transform_1, window_bounds = array<i64: 128, 256>}, {transform_indices = @transform_2, window_bounds = array<i64: 1, 256>}, {pipeline_mode = #tpu.pipeline_mode<synchronous>, transform_indices = @transform_3, window_bounds = array<i64: 1, 128>}, {pipeline_mode = #tpu.pipeline_mode<synchronous>, transform_indices = @transform_4, window_bounds = array<i64: 1, 128>}, {transform_indices = @transform_5, window_bounds = array<i64: 16, 256>}]} {
    %c0 = arith.constant 0 : index
    %c0_0 = arith.constant 0 : index
    %0 = vector.load %arg2[%c0, %c0_0] : memref<16x128xf32, #tpu.memory_space<vmem>>, vector<16x128xf32>
    %cst = arith.constant dense<0.000000e+00> : vector<16xf32>
    %1 = vector.multi_reduction <add>, %0, %cst [1] : vector<16x128xf32> to vector<16xf32>
    %2 = vector.shape_cast %1 : vector<16xf32> to vector<16x1xf32>
    %cst_1 = arith.constant 1.280000e+02 : f32
    %3 = vector.broadcast %cst_1 : f32 to vector<16x1xf32>
    %4 = arith.divf %2, %3 : vector<16x1xf32>
    %5 = vector.broadcast %4 : vector<16x1xf32> to vector<16x128xf32>
    %6 = arith.subf %0, %5 : vector<16x128xf32>
    %7 = arith.mulf %6, %6 : vector<16x128xf32>
    %cst_2 = arith.constant dense<0.000000e+00> : vector<16xf32>
    %8 = vector.multi_reduction <add>, %7, %cst_2 [1] : vector<16x128xf32> to vector<16xf32>
    %9 = vector.shape_cast %8 : vector<16xf32> to vector<16x1xf32>
    %cst_3 = arith.constant 0.00787401571 : f32
    %10 = vector.broadcast %cst_3 : f32 to vector<16x1xf32>
    %11 = arith.mulf %9, %10 : vector<16x1xf32>
    %12 = math.sqrt %11 : vector<16x1xf32>
    %cst_4 = arith.constant 9.99999997E-7 : f32
    %13 = vector.broadcast %cst_4 : f32 to vector<16x1xf32>
    %14 = arith.addf %12, %13 : vector<16x1xf32>
    %15 = tpu.reciprocal %14 : vector<16x1xf32> -> vector<16x1xf32>
    %16 = vector.broadcast %4 : vector<16x1xf32> to vector<16x128xf32>
    %17 = arith.subf %0, %16 : vector<16x128xf32>
    %c0_5 = arith.constant 0 : index
    %c0_6 = arith.constant 0 : index
    %18 = vector.load %arg5[%c0_5, %c0_6] : memref<1x128xf32, #tpu.memory_space<vmem>>, vector<1x128xf32>
    %19 = vector.broadcast %18 : vector<1x128xf32> to vector<16x128xf32>
    %20 = vector.broadcast %15 : vector<16x1xf32> to vector<16x128xf32>
    %21 = arith.mulf %19, %20 : vector<16x128xf32>
    %22 = arith.mulf %17, %21 : vector<16x128xf32>
    %c0_7 = arith.constant 0 : index
    %c0_8 = arith.constant 0 : index
    %23 = vector.load %arg6[%c0_7, %c0_8] : memref<1x128xf32, #tpu.memory_space<vmem>>, vector<1x128xf32>
    %24 = vector.broadcast %23 : vector<1x128xf32> to vector<16x128xf32>
    %25 = arith.addf %22, %24 : vector<16x128xf32>
    %26 = arith.truncf %25 : vector<16x128xf32> to vector<16x128xbf16>
    %c0_9 = arith.constant 0 : index
    %c0_10 = arith.constant 0 : index
    %27 = vector.load %arg3[%c0_9, %c0_10] : memref<128x256xf32, #tpu.memory_space<vmem>>, vector<128x256xf32>
    %28 = arith.truncf %27 : vector<128x256xf32> to vector<128x256xbf16>
    %cst_11 = arith.constant dense<0.000000e+00> : vector<16x256xf32>
    %29 = tpu.matmul %26, %28, %cst_11 {dimension_numbers = #tpu.dot_dimension_numbers<[1], [0], [0], [1], [0, 0, 1, 1], [], []>} : vector<16x128xbf16>, vector<128x256xbf16>, vector<16x256xf32> -> vector<16x256xf32>
    %c0_12 = arith.constant 0 : index
    %c0_13 = arith.constant 0 : index
    %30 = vector.load %arg4[%c0_12, %c0_13] : memref<1x256xf32, #tpu.memory_space<vmem>>, vector<1x256xf32>
    %31 = vector.broadcast %30 : vector<1x256xf32> to vector<16x256xf32>
    %32 = arith.addf %29, %31 : vector<16x256xf32>
    %cst_14 = arith.constant 0.000000e+00 : f32
    %33 = vector.broadcast %cst_14 : f32 to vector<16x256xf32>
    %34 = arith.maximumf %32, %33 : vector<16x256xf32>
    %c0_15 = arith.constant 0 : index
    %c0_16 = arith.constant 0 : index
    %35 = vector.load %arg7[%c0_15, %c0_16] : memref<16x256xf32, #tpu.memory_space<vmem>>, vector<16x256xf32>
    tpu.vector_store %arg7[%c0_15, %c0_16], %34 {strides = array<i32>} : memref<16x256xf32, #tpu.memory_space<vmem>>, vector<16x256xf32>,
    return
  }
  func.func @transform_0(%arg0: i32, %arg1: i32) -> (i32, i32) {
    %c0_i32 = arith.constant 0 : i32
    %c0_i32_0 = arith.constant 0 : i32
    return %arg0, %c0_i32 : i32, i32
  }
  func.func @transform_1(%arg0: i32, %arg1: i32) -> (i32, i32) {
    %c0_i32 = arith.constant 0 : i32
    %c0_i32_0 = arith.constant 0 : i32
    return %c0_i32, %arg1 : i32, i32
  }
  func.func @transform_2(%arg0: i32, %arg1: i32) -> (i32, i32) {
    %c0_i32 = arith.constant 0 : i32
    %c0_i32_0 = arith.constant 0 : i32
    return %c0_i32, %arg1 : i32, i32
  }
  func.func @transform_3(%arg0: i32, %arg1: i32) -> (i32, i32) {
    %c0_i32 = arith.constant 0 : i32
    %c0_i32_0 = arith.constant 0 : i32
    %c0_i32_1 = arith.constant 0 : i32
    return %c0_i32, %c0_i32_0 : i32, i32
  }
  func.func @transform_4(%arg0: i32, %arg1: i32) -> (i32, i32) {
    %c0_i32 = arith.constant 0 : i32
    %c0_i32_0 = arith.constant 0 : i32
    %c0_i32_1 = arith.constant 0 : i32
    return %c0_i32, %c0_i32_0 : i32, i32
  }
  func.func @transform_5(%arg0: i32, %arg1: i32) -> (i32, i32) {
    %c0_i32 = arith.constant 0 : i32
    return %arg0, %arg1 : i32, i32
  }
}

module attributes {stable_mosaic.version = 11 : i64} {
  func.func @_linear_kernel(%arg0: i32, %arg1: i32, %arg2: memref<16x256xf32, #tpu.memory_space<vmem>>, %arg3: memref<256x128xf32, #tpu.memory_space<vmem>>, %arg4: memref<1x128xf32, #tpu.memory_space<vmem>>, %arg5: memref<16x128xf32, #tpu.memory_space<vmem>>, %arg6: memref<16x128xf32, #tpu.memory_space<vmem>>) attributes {dimension_semantics = [#tpu.dimension_semantics<parallel>, #tpu.dimension_semantics<parallel>], iteration_bounds = array<i64: 1, 1>, scalar_prefetch = 0 : i64, scratch_operands = 0 : i64, tpu.core_type = #tpu.core_type<tc>, window_params = [{transform_indices = @transform_0, window_bounds = array<i64: 16, 256>}, {transform_indices = @transform_1, window_bounds = array<i64: 256, 128>}, {transform_indices = @transform_2, window_bounds = array<i64: 1, 128>}, {transform_indices = @transform_3, window_bounds = array<i64: 16, 128>}, {transform_indices = @transform_4, window_bounds = array<i64: 16, 128>}]} {
    %c0 = arith.constant 0 : index
    %c0_0 = arith.constant 0 : index
    %0 = vector.load %arg2[%c0, %c0_0] : memref<16x256xf32, #tpu.memory_space<vmem>>, vector<16x256xf32>
    %1 = arith.truncf %0 : vector<16x256xf32> to vector<16x256xbf16>
    %c0_1 = arith.constant 0 : index
    %c0_2 = arith.constant 0 : index
    %2 = vector.load %arg3[%c0_1, %c0_2] : memref<256x128xf32, #tpu.memory_space<vmem>>, vector<256x128xf32>
    %3 = arith.truncf %2 : vector<256x128xf32> to vector<256x128xbf16>
    %cst = arith.constant dense<0.000000e+00> : vector<16x128xf32>
    %4 = tpu.matmul %1, %3, %cst {dimension_numbers = #tpu.dot_dimension_numbers<[1], [0], [0], [1], [0, 0, 1, 1], [], []>} : vector<16x256xbf16>, vector<256x128xbf16>, vector<16x128xf32> -> vector<16x128xf32>
    %c0_3 = arith.constant 0 : index
    %c0_4 = arith.constant 0 : index
    %5 = vector.load %arg4[%c0_3, %c0_4] : memref<1x128xf32, #tpu.memory_space<vmem>>, vector<1x128xf32>
    %6 = vector.broadcast %5 : vector<1x128xf32> to vector<16x128xf32>
    %7 = arith.addf %4, %6 : vector<16x128xf32>
    %c0_5 = arith.constant 0 : index
    %c0_6 = arith.constant 0 : index
    %8 = vector.load %arg5[%c0_5, %c0_6] : memref<16x128xf32, #tpu.memory_space<vmem>>, vector<16x128xf32>
    %9 = arith.addf %7, %8 : vector<16x128xf32>
    %c0_7 = arith.constant 0 : index
    %c0_8 = arith.constant 0 : index
    %10 = vector.load %arg6[%c0_7, %c0_8] : memref<16x128xf32, #tpu.memory_space<vmem>>, vector<16x128xf32>
    tpu.vector_store %arg6[%c0_7, %c0_8], %9 {strides = array<i32>} : memref<16x128xf32, #tpu.memory_space<vmem>>, vector<16x128xf32>,
    return
  }
  func.func @transform_0(%arg0: i32, %arg1: i32) -> (i32, i32) {
    %c0_i32 = arith.constant 0 : i32
    %c0_i32_0 = arith.constant 0 : i32
    return %arg0, %c0_i32 : i32, i32
  }
  func.func @transform_1(%arg0: i32, %arg1: i32) -> (i32, i32) {
    %c0_i32 = arith.constant 0 : i32
    %c0_i32_0 = arith.constant 0 : i32
    return %c0_i32, %arg1 : i32, i32
  }
  func.func @transform_2(%arg0: i32, %arg1: i32) -> (i32, i32) {
    %c0_i32 = arith.constant 0 : i32
    %c0_i32_0 = arith.constant 0 : i32
    return %c0_i32, %arg1 : i32, i32
  }
  func.func @transform_3(%arg0: i32, %arg1: i32) -> (i32, i32) {
    %c0_i32 = arith.constant 0 : i32
    return %arg0, %arg1 : i32, i32
  }
  func.func @transform_4(%arg0: i32, %arg1: i32) -> (i32, i32) {
    %c0_i32 = arith.constant 0 : i32
    return %arg0, %arg1 : i32, i32
  }
}

module attributes {stable_mosaic.version = 11 : i64} {
  func.func @_linear_kernel(%arg0: i32, %arg1: i32, %arg2: memref<16x128xf32, #tpu.memory_space<vmem>>, %arg3: memref<128x384xf32, #tpu.memory_space<vmem>>, %arg4: memref<1x384xf32, #tpu.memory_space<vmem>>, %arg5: memref<1x128xf32, #tpu.memory_space<vmem>>, %arg6: memref<1x128xf32, #tpu.memory_space<vmem>>, %arg7: memref<16x384xf32, #tpu.memory_space<vmem>>) attributes {dimension_semantics = [#tpu.dimension_semantics<parallel>, #tpu.dimension_semantics<parallel>], iteration_bounds = array<i64: 1, 1>, scalar_prefetch = 0 : i64, scratch_operands = 0 : i64, tpu.core_type = #tpu.core_type<tc>, window_params = [{transform_indices = @transform_0, window_bounds = array<i64: 16, 128>}, {transform_indices = @transform_1, window_bounds = array<i64: 128, 384>}, {transform_indices = @transform_2, window_bounds = array<i64: 1, 384>}, {pipeline_mode = #tpu.pipeline_mode<synchronous>, transform_indices = @transform_3, window_bounds = array<i64: 1, 128>}, {pipeline_mode = #tpu.pipeline_mode<synchronous>, transform_indices = @transform_4, window_bounds = array<i64: 1, 128>}, {transform_indices = @transform_5, window_bounds = array<i64: 16, 384>}]} {
    %c0 = arith.constant 0 : index
    %c0_0 = arith.constant 0 : index
    %0 = vector.load %arg2[%c0, %c0_0] : memref<16x128xf32, #tpu.memory_space<vmem>>, vector<16x128xf32>
    %cst = arith.constant dense<0.000000e+00> : vector<16xf32>
    %1 = vector.multi_reduction <add>, %0, %cst [1] : vector<16x128xf32> to vector<16xf32>
    %2 = vector.shape_cast %1 : vector<16xf32> to vector<16x1xf32>
    %cst_1 = arith.constant 1.280000e+02 : f32
    %3 = vector.broadcast %cst_1 : f32 to vector<16x1xf32>
    %4 = arith.divf %2, %3 : vector<16x1xf32>
    %5 = vector.broadcast %4 : vector<16x1xf32> to vector<16x128xf32>
    %6 = arith.subf %0, %5 : vector<16x128xf32>
    %7 = arith.mulf %6, %6 : vector<16x128xf32>
    %cst_2 = arith.constant dense<0.000000e+00> : vector<16xf32>
    %8 = vector.multi_reduction <add>, %7, %cst_2 [1] : vector<16x128xf32> to vector<16xf32>
    %9 = vector.shape_cast %8 : vector<16xf32> to vector<16x1xf32>
    %cst_3 = arith.constant 0.00787401571 : f32
    %10 = vector.broadcast %cst_3 : f32 to vector<16x1xf32>
    %11 = arith.mulf %9, %10 : vector<16x1xf32>
    %12 = math.sqrt %11 : vector<16x1xf32>
    %cst_4 = arith.constant 9.99999997E-7 : f32
    %13 = vector.broadcast %cst_4 : f32 to vector<16x1xf32>
    %14 = arith.addf %12, %13 : vector<16x1xf32>
    %15 = tpu.reciprocal %14 : vector<16x1xf32> -> vector<16x1xf32>
    %16 = vector.broadcast %4 : vector<16x1xf32> to vector<16x128xf32>
    %17 = arith.subf %0, %16 : vector<16x128xf32>
    %c0_5 = arith.constant 0 : index
    %c0_6 = arith.constant 0 : index
    %18 = vector.load %arg5[%c0_5, %c0_6] : memref<1x128xf32, #tpu.memory_space<vmem>>, vector<1x128xf32>
    %19 = vector.broadcast %18 : vector<1x128xf32> to vector<16x128xf32>
    %20 = vector.broadcast %15 : vector<16x1xf32> to vector<16x128xf32>
    %21 = arith.mulf %19, %20 : vector<16x128xf32>
    %22 = arith.mulf %17, %21 : vector<16x128xf32>
    %c0_7 = arith.constant 0 : index
    %c0_8 = arith.constant 0 : index
    %23 = vector.load %arg6[%c0_7, %c0_8] : memref<1x128xf32, #tpu.memory_space<vmem>>, vector<1x128xf32>
    %24 = vector.broadcast %23 : vector<1x128xf32> to vector<16x128xf32>
    %25 = arith.addf %22, %24 : vector<16x128xf32>
    %26 = arith.truncf %25 : vector<16x128xf32> to vector<16x128xbf16>
    %c0_9 = arith.constant 0 : index
    %c0_10 = arith.constant 0 : index
    %27 = vector.load %arg3[%c0_9, %c0_10] : memref<128x384xf32, #tpu.memory_space<vmem>>, vector<128x384xf32>
    %28 = arith.truncf %27 : vector<128x384xf32> to vector<128x384xbf16>
    %cst_11 = arith.constant dense<0.000000e+00> : vector<16x384xf32>
    %29 = tpu.matmul %26, %28, %cst_11 {dimension_numbers = #tpu.dot_dimension_numbers<[1], [0], [0], [1], [0, 0, 1, 1], [], []>} : vector<16x128xbf16>, vector<128x384xbf16>, vector<16x384xf32> -> vector<16x384xf32>
    %c0_12 = arith.constant 0 : index
    %c0_13 = arith.constant 0 : index
    %30 = vector.load %arg4[%c0_12, %c0_13] : memref<1x384xf32, #tpu.memory_space<vmem>>, vector<1x384xf32>
    %31 = vector.broadcast %30 : vector<1x384xf32> to vector<16x384xf32>
    %32 = arith.addf %29, %31 : vector<16x384xf32>
    %c0_14 = arith.constant 0 : index
    %c0_15 = arith.constant 0 : index
    %33 = vector.load %arg7[%c0_14, %c0_15] : memref<16x384xf32, #tpu.memory_space<vmem>>, vector<16x384xf32>
    tpu.vector_store %arg7[%c0_14, %c0_15], %32 {strides = array<i32>} : memref<16x384xf32, #tpu.memory_space<vmem>>, vector<16x384xf32>,
    return
  }
  func.func @transform_0(%arg0: i32, %arg1: i32) -> (i32, i32) {
    %c0_i32 = arith.constant 0 : i32
    %c0_i32_0 = arith.constant 0 : i32
    return %arg0, %c0_i32 : i32, i32
  }
  func.func @transform_1(%arg0: i32, %arg1: i32) -> (i32, i32) {
    %c0_i32 = arith.constant 0 : i32
    %c0_i32_0 = arith.constant 0 : i32
    return %c0_i32, %arg1 : i32, i32
  }
  func.func @transform_2(%arg0: i32, %arg1: i32) -> (i32, i32) {
    %c0_i32 = arith.constant 0 : i32
    %c0_i32_0 = arith.constant 0 : i32
    return %c0_i32, %arg1 : i32, i32
  }
  func.func @transform_3(%arg0: i32, %arg1: i32) -> (i32, i32) {
    %c0_i32 = arith.constant 0 : i32
    %c0_i32_0 = arith.constant 0 : i32
    %c0_i32_1 = arith.constant 0 : i32
    return %c0_i32, %c0_i32_0 : i32, i32
  }
  func.func @transform_4(%arg0: i32, %arg1: i32) -> (i32, i32) {
    %c0_i32 = arith.constant 0 : i32
    %c0_i32_0 = arith.constant 0 : i32
    %c0_i32_1 = arith.constant 0 : i32
    return %c0_i32, %c0_i32_0 : i32, i32
  }
  func.func @transform_5(%arg0: i32, %arg1: i32) -> (i32, i32) {
    %c0_i32 = arith.constant 0 : i32
    return %arg0, %arg1 : i32, i32
  }
}

module attributes {stable_mosaic.version = 11 : i64} {
  func.func @_layernorm_kernel(%arg0: i32, %arg1: memref<16x128xf32, #tpu.memory_space<vmem>>, %arg2: memref<1x128xf32, #tpu.memory_space<vmem>>, %arg3: memref<1x128xf32, #tpu.memory_space<vmem>>, %arg4: memref<16x128xf32, #tpu.memory_space<vmem>>) attributes {dimension_semantics = [#tpu.dimension_semantics<parallel>], iteration_bounds = array<i64: 1>, scalar_prefetch = 0 : i64, scratch_operands = 0 : i64, tpu.core_type = #tpu.core_type<tc>, window_params = [{transform_indices = @transform_0, window_bounds = array<i64: 16, 128>}, {pipeline_mode = #tpu.pipeline_mode<synchronous>, transform_indices = @transform_1, window_bounds = array<i64: 1, 128>}, {pipeline_mode = #tpu.pipeline_mode<synchronous>, transform_indices = @transform_2, window_bounds = array<i64: 1, 128>}, {transform_indices = @transform_3, window_bounds = array<i64: 16, 128>}]} {
    %c0 = arith.constant 0 : index
    %c0_0 = arith.constant 0 : index
    %0 = vector.load %arg1[%c0, %c0_0] : memref<16x128xf32, #tpu.memory_space<vmem>>, vector<16x128xf32>
    %cst = arith.constant dense<0.000000e+00> : vector<16xf32>
    %1 = vector.multi_reduction <add>, %0, %cst [1] : vector<16x128xf32> to vector<16xf32>
    %2 = vector.shape_cast %1 : vector<16xf32> to vector<16x1xf32>
    %cst_1 = arith.constant 1.280000e+02 : f32
    %3 = vector.broadcast %cst_1 : f32 to vector<16x1xf32>
    %4 = arith.divf %2, %3 : vector<16x1xf32>
    %5 = vector.broadcast %4 : vector<16x1xf32> to vector<16x128xf32>
    %6 = arith.subf %0, %5 : vector<16x128xf32>
    %7 = arith.mulf %6, %6 : vector<16x128xf32>
    %cst_2 = arith.constant dense<0.000000e+00> : vector<16xf32>
    %8 = vector.multi_reduction <add>, %7, %cst_2 [1] : vector<16x128xf32> to vector<16xf32>
    %9 = vector.shape_cast %8 : vector<16xf32> to vector<16x1xf32>
    %cst_3 = arith.constant 0.00787401571 : f32
    %10 = vector.broadcast %cst_3 : f32 to vector<16x1xf32>
    %11 = arith.mulf %9, %10 : vector<16x1xf32>
    %12 = math.sqrt %11 : vector<16x1xf32>
    %cst_4 = arith.constant 9.99999997E-7 : f32
    %13 = vector.broadcast %cst_4 : f32 to vector<16x1xf32>
    %14 = arith.addf %12, %13 : vector<16x1xf32>
    %15 = tpu.reciprocal %14 : vector<16x1xf32> -> vector<16x1xf32>
    %c0_5 = arith.constant 0 : index
    %c0_6 = arith.constant 0 : index
    %16 = vector.load %arg2[%c0_5, %c0_6] : memref<1x128xf32, #tpu.memory_space<vmem>>, vector<1x128xf32>
    %17 = vector.broadcast %16 : vector<1x128xf32> to vector<16x128xf32>
    %18 = vector.broadcast %15 : vector<16x1xf32> to vector<16x128xf32>
    %19 = arith.mulf %17, %18 : vector<16x128xf32>
    %20 = vector.broadcast %4 : vector<16x1xf32> to vector<16x128xf32>
    %21 = arith.subf %0, %20 : vector<16x128xf32>
    %22 = arith.mulf %21, %19 : vector<16x128xf32>
    %c0_7 = arith.constant 0 : index
    %c0_8 = arith.constant 0 : index
    %23 = vector.load %arg3[%c0_7, %c0_8] : memref<1x128xf32, #tpu.memory_space<vmem>>, vector<1x128xf32>
    %24 = vector.broadcast %23 : vector<1x128xf32> to vector<16x128xf32>
    %25 = arith.addf %22, %24 : vector<16x128xf32>
    %c0_9 = arith.constant 0 : index
    %c0_10 = arith.constant 0 : index
    %26 = vector.load %arg4[%c0_9, %c0_10] : memref<16x128xf32, #tpu.memory_space<vmem>>, vector<16x128xf32>
    tpu.vector_store %arg4[%c0_9, %c0_10], %25 {strides = array<i32>} : memref<16x128xf32, #tpu.memory_space<vmem>>, vector<16x128xf32>,
    return
  }
  func.func @transform_0(%arg0: i32) -> (i32, i32) {
    %c0_i32 = arith.constant 0 : i32
    %c0_i32_0 = arith.constant 0 : i32
    return %arg0, %c0_i32 : i32, i32
  }
  func.func @transform_1(%arg0: i32) -> (i32, i32) {
    %c0_i32 = arith.constant 0 : i32
    %c0_i32_0 = arith.constant 0 : i32
    %c0_i32_1 = arith.constant 0 : i32
    return %c0_i32, %c0_i32_0 : i32, i32
  }
  func.func @transform_2(%arg0: i32) -> (i32, i32) {
    %c0_i32 = arith.constant 0 : i32
    %c0_i32_0 = arith.constant 0 : i32
    %c0_i32_1 = arith.constant 0 : i32
    return %c0_i32, %c0_i32_0 : i32, i32
  }
  func.func @transform_3(%arg0: i32) -> (i32, i32) {
    %c0_i32 = arith.constant 0 : i32
    %c0_i32_0 = arith.constant 0 : i32
    return %arg0, %c0_i32 : i32, i32
  }
}

</mosaic_0001>

<llo_original>
// kernel: encoder_forward.13
$region0: #{encoder_forward.13}
  #allocation0 [shape = 'u32[]', space=smem, size = 0x4, offset = 0x4, fixed_abs, tag = 'smem constant byte address 0x4 - core index']
  #allocation1 [shape = 'u32[144,128]{1,0:T(1,128)}', space=vmem, size = 0x12000, scoped, tag = 'internal scratch']
  %s0 = inlined_call_operand.vmem [shape: f32[16,128], index: 0, kind: input, shape index: {}]
  %s1 = inlined_call_operand.vmem [shape: f32[128,128], index: 1, kind: input, shape index: {}]
  %s2 = inlined_call_operand.vmem [shape: f32[1,128], index: 2, kind: input, shape index: {}]
  %s3 = inlined_call_operand.vmem [shape: f32[16,128], index: 3, kind: input, shape index: {}]
  %s4 = inlined_call_operand.vmem [shape: f32[16,128], index: 4, kind: output, shape index: {}]
  %s5 = sld [smem:[#allocation0]]
  $region26: #{encoder_forward.13} parent=0
    _
  %s7 = ssub.s32 1, %s5
  %s8 = scalar_select 0, %s7, %s5
  // Predicated region
  $region2: #{encoder_forward.13} parent=0 // pred_check
    _
  $region3: #{encoder_forward.13} parent=0 // pred_check_branch
    %10 = sbr.rel (0) target = $region5
  $region4: #{encoder_forward.13} parent=0 // pred_region
    _
  $region5: #{encoder_forward.13} parent=0 // pred_fallthru
    _
  // Predicated region
  $region6: #{encoder_forward.13} parent=0 // pred_check
    _
  $region7: #{encoder_forward.13} parent=0 // pred_check_branch
    %12 = sbr.rel (0) target = $region9
  $region8: #{encoder_forward.13} parent=0 // pred_region
    _
  $region9: #{encoder_forward.13} parent=0 // pred_fallthru
    _
  // Predicated region
  $region10: #{encoder_forward.13} parent=0 // pred_check
    _
  $region11: #{encoder_forward.13} parent=0 // pred_check_branch
    %14 = sbr.rel (0) target = $region13
  $region12: #{encoder_forward.13} parent=0 // pred_region
    _
  $region13: #{encoder_forward.13} parent=0 // pred_fallthru
    _
  // Predicated region
  $region14: #{encoder_forward.13} parent=0 // pred_check
    _
  $region15: #{encoder_forward.13} parent=0 // pred_check_branch
    %16 = sbr.rel (0) target = $region17
  $region16: #{encoder_forward.13} parent=0 // pred_region
    _
  $region17: #{encoder_forward.13} parent=0 // pred_fallthru
    _
  %v18 = vld [vmem:[%s0] sm:$0xff]
  %v19 = vld [vmem:[%s0 + $0x8] sm:$0xff]
  %v20 = vpack.c.bf16 %v19, %v18
  %v21 = vld [vmem:[%s1] sm:$0xff]
  %v22 = vld [vmem:[%s1 + $0x8] sm:$0xff]
  %v23 = vld [vmem:[%s1 + $0x10] sm:$0xff]
  %v24 = vld [vmem:[%s1 + $0x18] sm:$0xff]
  %v25 = vld [vmem:[%s1 + $0x20] sm:$0xff]
  %v26 = vld [vmem:[%s1 + $0x28] sm:$0xff]
  %v27 = vld [vmem:[%s1 + $0x30] sm:$0xff]
  %v28 = vld [vmem:[%s1 + $0x38] sm:$0xff]
  %v29 = vld [vmem:[%s1 + $0x40] sm:$0xff]
  %v30 = vld [vmem:[%s1 + $0x48] sm:$0xff]
  %v31 = vld [vmem:[%s1 + $0x50] sm:$0xff]
  %v32 = vld [vmem:[%s1 + $0x58] sm:$0xff]
  %v33 = vld [vmem:[%s1 + $0x60] sm:$0xff]
  %v34 = vld [vmem:[%s1 + $0x68] sm:$0xff]
  %v35 = vld [vmem:[%s1 + $0x70] sm:$0xff]
  %v36 = vld [vmem:[%s1 + $0x78] sm:$0xff]
  %v37 = vpack.c.bf16 %v22, %v21
  %v38 = vpack.c.bf16 %v24, %v23
  %v39 = vpack.c.bf16 %v26, %v25
  %v40 = vpack.c.bf16 %v28, %v27
  %v41 = vpack.c.bf16 %v30, %v29
  %v42 = vpack.c.bf16 %v32, %v31
  %v43 = vpack.c.bf16 %v34, %v33
  %v44 = vpack.c.bf16 %v36, %v35
  %v45 = vld [vmem:[%s2] sm:$0x1]
  %v47 = vlaneseq
  %v48 = vshrl.u32 %v47, 7
  %v49 = vsub.s32 0, %v48
  %v50 = vrot.slane %v45, %v49
  %52 = vmatprep.subr.bf16.mxu0 0
  %53 = vmatpush1.bf16.msra.mxu0 %v37
  %54 = vmatprep.subr.bf16.mxu0 0
  %55 = vmatpush1.bf16.msra.mxu0 %v38
  %56 = vmatprep.subr.bf16.mxu0 0
  %57 = vmatpush1.bf16.msra.mxu0 %v39
  %58 = vmatprep.subr.bf16.mxu0 0
  %59 = vmatpush1.bf16.msra.mxu0 %v40
  %60 = vmatprep.subr.bf16.mxu0 0
  %61 = vmatpush1.bf16.msra.mxu0 %v41
  %62 = vmatprep.subr.bf16.mxu0 0
  %63 = vmatpush1.bf16.msra.mxu0 %v42
  %64 = vmatprep.subr.bf16.mxu0 0
  %65 = vmatpush1.bf16.msra.mxu0 %v43
  %66 = vmatprep.subr.bf16.mxu0 0
  %67 = vmatpush1.bf16.msra.mxu0 %v44
  %68 = vmatprep.subr.bf16.mxu0 0
  %69 = vmatpush1.bf16.msra.mxu0 0
  %70 = vmatprep.subr.bf16.mxu0 0
  %71 = vmatpush1.bf16.msra.mxu0 0
  %72 = vmatprep.subr.bf16.mxu0 0
  %73 = vmatpush1.bf16.msra.mxu0 0
  %74 = vmatprep.subr.bf16.mxu0 0
  %75 = vmatpush1.bf16.msra.mxu0 0
  %76 = vmatprep.subr.bf16.mxu0 0
  %77 = vmatpush1.bf16.msra.mxu0 0
  %78 = vmatprep.subr.bf16.mxu0 0
  %79 = vmatpush1.bf16.msra.mxu0 0
  %80 = vmatprep.subr.bf16.mxu0 0
  %81 = vmatpush1.bf16.msra.mxu0 0
  %82 = vmatprep.subr.bf16.mxu0 0
  %83 = vmatpush1.bf16.msra.mxu0 0
  %84 = vmatprep.mubr.bf16.mxu0 0
  %85 = vmatmul.mubr.bf16.gmra.mrb[0].mxu0 %v20
  %v86 = vpop.f32.mrb[0].mxu0
  %v87 = vadd.f32 %v50, %v86
  %v88 = vpop.f32.mrb[0].mxu0
  %v89 = vpop.f32.mrb[0].mxu0
  %v90 = vadd.f32 %v50, %v89
  %v91 = vpop.f32.mrb[0].mxu0
  %92 = vdwg.mxu0
  %v93 = vld [vmem:[%s3] sm:$0xff]
  %v94 = vld [vmem:[%s3 + $0x8] sm:$0xff]
  %v95 = vadd.f32 %v87, %v93
  %v96 = vadd.f32 %v90, %v94
  %97 = vst [vmem:[%s4] sm:$0xff] %v95
  %98 = vst [vmem:[%s4 + $0x8] sm:$0xff] %v96
  // Predicated region
  $region18: #{encoder_forward.13} parent=0 // pred_check
    _
  $region19: #{encoder_forward.13} parent=0 // pred_check_branch
    %100 = sbr.rel (0) target = $region21
  $region20: #{encoder_forward.13} parent=0 // pred_region
    _
  $region21: #{encoder_forward.13} parent=0 // pred_fallthru
    _
  // Predicated region
  $region22: #{encoder_forward.13} parent=0 // pred_check
    _
  $region23: #{encoder_forward.13} parent=0 // pred_check_branch
    %102 = sbr.rel (0) target = $region25
  $region24: #{encoder_forward.13} parent=0 // pred_region
    _
  $region25: #{encoder_forward.13} parent=0 // pred_fallthru
    _

// kernel: encoder_forward.11
$region0: #{encoder_forward.11}
  #allocation0 [shape = 'u32[]', space=smem, size = 0x4, offset = 0x4, fixed_abs, tag = 'smem constant byte address 0x4 - core index']
  #allocation1 [shape = 'u32[144,128]{1,0:T(1,128)}', space=vmem, size = 0x12000, scoped, tag = 'internal scratch']
  %s0 = inlined_call_operand.vmem [shape: f32[16,128], index: 0, kind: input, shape index: {}]
  %s1 = inlined_call_operand.hbm [shape: f32[128,384], index: 1, kind: input, shape index: {}]
  %s2 = inlined_call_operand.vmem [shape: f32[1,384], index: 2, kind: input, shape index: {}]
  %s3 = inlined_call_operand.vmem [shape: f32[1,128], index: 3, kind: input, shape index: {}]
  %s4 = inlined_call_operand.vmem [shape: f32[1,128], index: 4, kind: input, shape index: {}]
  %s5 = inlined_call_operand.vmem [shape: f32[16,384], index: 5, kind: output, shape index: {}]
  %s6 = sld [smem:[#allocation0]]
  $region34: #{encoder_forward.11} parent=0
    _
  %s8 = ssub.s32 1, %s6
  %s9 = scalar_select 0, %s8, %s6
  $region1: #{encoder_forward.11} parent=0
    #allocation2 [shape = 'u8[196608]{0}', space=vmem, size = 0x30000, scoped, tag = 'input window, operand 1, single buffered']
    #allocation3 [shape = 's32[1]{0}', space=sflag, size = 0x4, scoped, tag = 'scoped memory for encoder_forward.11']
    %10 = vsyncpa [#allocation3], 0
    // Predicated region
    $region2: #{encoder_forward.11} parent=1 // pred_check
      _
    $region3: #{encoder_forward.11} parent=1 // pred_check_branch
      %12 = sbr.rel (0) target = $region5
    $region4: #{encoder_forward.11} parent=1 // pred_region
      _
    $region5: #{encoder_forward.11} parent=1 // pred_fallthru
      _
    // Predicated region
    $region6: #{encoder_forward.11} parent=1 // pred_check
      _
    $region7: #{encoder_forward.11} parent=1 // pred_check_branch
      %14 = sbr.rel (0) target = $region9
    $region8: #{encoder_forward.11} parent=1 // pred_region
      %s16 = ssub.s32 6144, 6144
      %17 = vsyncadd [#allocation3], %s16
      %s18 = sshll.u32 [#allocation2], 4
      %s19 = int_to_ptr.vmem [resolvable:$true] %s18
      %24 = dma.hbm_to_vmem [thread:$0]  %s1, 6144, %s19, [#allocation3], 384, 384, 24
    $region9: #{encoder_forward.11} parent=1 // pred_fallthru
      _
    // Predicated region
    $region10: #{encoder_forward.11} parent=1 // pred_check
      _
    $region11: #{encoder_forward.11} parent=1 // pred_check_branch
      %26 = sbr.rel (0) target = $region13
    $region12: #{encoder_forward.11} parent=1 // pred_region
      _
    $region13: #{encoder_forward.11} parent=1 // pred_fallthru
      _
    // Predicated region
    $region14: #{encoder_forward.11} parent=1 // pred_check
      _
    $region15: #{encoder_forward.11} parent=1 // pred_check_branch
      %28 = sbr.rel (0) target = $region17
    $region16: #{encoder_forward.11} parent=1 // pred_region
      _
    $region17: #{encoder_forward.11} parent=1 // pred_fallthru
      _
    // Predicated region
    $region18: #{encoder_forward.11} parent=1 // pred_check
      _
    $region19: #{encoder_forward.11} parent=1 // pred_check_branch
      %30 = sbr.rel (0) target = $region21
    $region20: #{encoder_forward.11} parent=1 // pred_region
      _
    $region21: #{encoder_forward.11} parent=1 // pred_fallthru
      _
    // Predicated region
    $region22: #{encoder_forward.11} parent=1 // pred_check
      _
    $region23: #{encoder_forward.11} parent=1 // pred_check_branch
      %32 = sbr.rel (0) target = $region25
    $region24: #{encoder_forward.11} parent=1 // pred_region
      %33 = dma.done [#allocation3], 6144
    $region25: #{encoder_forward.11} parent=1 // pred_fallthru
      _
    %v35 = vld [vmem:[%s0] sm:$0xff]
    %v36 = vld [vmem:[%s0 + $0x8] sm:$0xff]
    %37 = vadd.xlane.f32.xlu0 %v35
    %v38 = vpop.xlane.xlu0 %37
    %39 = vadd.xlane.f32.xlu0 %v36
    %v40 = vpop.xlane.xlu0 %39
    %v41 = vrcp.pop 128.0
    %v42 = vmul.f32 %v38, %v41
    %v43 = vmul.f32 %v40, %v41
    %v44 = vsub.f32 %v35, %v42
    %v45 = vsub.f32 %v36, %v43
    %v46 = vmul.f32 %v44, %v44
    %v47 = vmul.f32 %v45, %v45
    %48 = vadd.xlane.f32.xlu0 %v46
    %v49 = vpop.xlane.xlu0 %48
    %50 = vadd.xlane.f32.xlu0 %v47
    %v51 = vpop.xlane.xlu0 %50
    %v52 = vmul.f32 %v49, 0.007874016
    %v53 = vmul.f32 %v51, 0.007874016
    %v54 = vrsqrt.pop %v52
    %v55 = vmul.f32 %v52, %v54
    %vm56 = vcmp.eq.f32.partialorder %v52, inf
    %v57 = vsel %vm56, %v52, %v55
    %vm58 = vcmp.eq.f32.partialorder %v52, 0.0
    %v59 = vand.u32 %v52, 2147483648
    %v60 = vsel %vm58, %v59, %v57
    %v61 = vrsqrt.pop %v53
    %v62 = vmul.f32 %v53, %v61
    %vm63 = vcmp.eq.f32.partialorder %v53, inf
    %v64 = vsel %vm63, %v53, %v62
    %vm65 = vcmp.eq.f32.partialorder %v53, 0.0
    %v66 = vand.u32 %v53, 2147483648
    %v67 = vsel %vm65, %v66, %v64
    %v68 = vadd.f32 %v60, 1e-06
    %v69 = vadd.f32 %v67, 1e-06
    %v70 = vrcp.pop %v68
    %v71 = vrcp.pop %v69
    %v72 = vld [vmem:[%s3] sm:$0x1]
    %v74 = vlaneseq
    %v75 = vshrl.u32 %v74, 7
    %v76 = vsub.s32 0, %v75
    %v77 = vrot.slane %v72, %v76
    %v79 = vmul.f32 %v77, %v70
    %v80 = vmul.f32 %v77, %v71
    %v81 = vmul.f32 %v44, %v79
    %v82 = vmul.f32 %v45, %v80
    %v83 = vld [vmem:[%s4] sm:$0x1]
    %v85 = vlaneseq
    %v86 = vshrl.u32 %v85, 7
    %v87 = vsub.s32 0, %v86
    %v88 = vrot.slane %v83, %v87
    %v90 = vadd.f32 %v81, %v88
    %v91 = vadd.f32 %v82, %v88
    %v92 = vpack.c.bf16 %v91, %v90
    %v93 = vld [vmem:[#allocation2] sm:$0xff]
    %v94 = vld [vmem:[#allocation2 + $0x8] sm:$0xff]
    %v95 = vld [vmem:[#allocation2 + $0x10] sm:$0xff]
    %v96 = vld [vmem:[#allocation2 + $0x18] sm:$0xff]
    %v97 = vld [vmem:[#allocation2 + $0x20] sm:$0xff]
    %v98 = vld [vmem:[#allocation2 + $0x28] sm:$0xff]
    %v99 = vld [vmem:[#allocation2 + $0x30] sm:$0xff]
    %v100 = vld [vmem:[#allocation2 + $0x38] sm:$0xff]
    %v101 = vld [vmem:[#allocation2 + $0x40] sm:$0xff]
    %v102 = vld [vmem:[#allocation2 + $0x48] sm:$0xff]
    %v103 = vld [vmem:[#allocation2 + $0x50] sm:$0xff]
    %v104 = vld [vmem:[#allocation2 + $0x58] sm:$0xff]
    %v105 = vld [vmem:[#allocation2 + $0x60] sm:$0xff]
    %v106 = vld [vmem:[#allocation2 + $0x68] sm:$0xff]
    %v107 = vld [vmem:[#allocation2 + $0x70] sm:$0xff]
    %v108 = vld [vmem:[#allocation2 + $0x78] sm:$0xff]
    %v109 = vld [vmem:[#allocation2 + $0x80] sm:$0xff]
    %v110 = vld [vmem:[#allocation2 + $0x88] sm:$0xff]
    %v111 = vld [vmem:[#allocation2 + $0x90] sm:$0xff]
    %v112 = vld [vmem:[#allocation2 + $0x98] sm:$0xff]
    %v113 = vld [vmem:[#allocation2 + $0xa0] sm:$0xff]
    %v114 = vld [vmem:[#allocation2 + $0xa8] sm:$0xff]
    %v115 = vld [vmem:[#allocation2 + $0xb0] sm:$0xff]
    %v116 = vld [vmem:[#allocation2 + $0xb8] sm:$0xff]
    %v117 = vld [vmem:[#allocation2 + $0xc0] sm:$0xff]
    %v118 = vld [vmem:[#allocation2 + $0xc8] sm:$0xff]
    %v119 = vld [vmem:[#allocation2 + $0xd0] sm:$0xff]
    %v120 = vld [vmem:[#allocation2 + $0xd8] sm:$0xff]
    %v121 = vld [vmem:[#allocation2 + $0xe0] sm:$0xff]
    %v122 = vld [vmem:[#allocation2 + $0xe8] sm:$0xff]
    %v123 = vld [vmem:[#allocation2 + $0xf0] sm:$0xff]
    %v124 = vld [vmem:[#allocation2 + $0xf8] sm:$0xff]
    %v125 = vld [vmem:[#allocation2 + $0x100] sm:$0xff]
    %v126 = vld [vmem:[#allocation2 + $0x108] sm:$0xff]
    %v127 = vld [vmem:[#allocation2 + $0x110] sm:$0xff]
    %v128 = vld [vmem:[#allocation2 + $0x118] sm:$0xff]
    %v129 = vld [vmem:[#allocation2 + $0x120] sm:$0xff]
    %v130 = vld [vmem:[#allocation2 + $0x128] sm:$0xff]
    %v131 = vld [vmem:[#allocation2 + $0x130] sm:$0xff]
    %v132 = vld [vmem:[#allocation2 + $0x138] sm:$0xff]
    %v133 = vld [vmem:[#allocation2 + $0x140] sm:$0xff]
    %v134 = vld [vmem:[#allocation2 + $0x148] sm:$0xff]
    %v135 = vld [vmem:[#allocation2 + $0x150] sm:$0xff]
    %v136 = vld [vmem:[#allocation2 + $0x158] sm:$0xff]
    %v137 = vld [vmem:[#allocation2 + $0x160] sm:$0xff]
    %v138 = vld [vmem:[#allocation2 + $0x168] sm:$0xff]
    %v139 = vld [vmem:[#allocation2 + $0x170] sm:$0xff]
    %v140 = vld [vmem:[#allocation2 + $0x178] sm:$0xff]
    %v141 = vpack.c.bf16 %v96, %v93
    %v142 = vpack.c.bf16 %v97, %v94
    %v143 = vpack.c.bf16 %v98, %v95
    %v144 = vpack.c.bf16 %v102, %v99
    %v145 = vpack.c.bf16 %v103, %v100
    %v146 = vpack.c.bf16 %v104, %v101
    %v147 = vpack.c.bf16 %v108, %v105
    %v148 = vpack.c.bf16 %v109, %v106
    %v149 = vpack.c.bf16 %v110, %v107
    %v150 = vpack.c.bf16 %v114, %v111
    %v151 = vpack.c.bf16 %v115, %v112
    %v152 = vpack.c.bf16 %v116, %v113
    %v153 = vpack.c.bf16 %v120, %v117
    %v154 = vpack.c.bf16 %v121, %v118
    %v155 = vpack.c.bf16 %v122, %v119
    %v156 = vpack.c.bf16 %v126, %v123
    %v157 = vpack.c.bf16 %v127, %v124
    %v158 = vpack.c.bf16 %v128, %v125
    %v159 = vpack.c.bf16 %v132, %v129
    %v160 = vpack.c.bf16 %v133, %v130
    %v161 = vpack.c.bf16 %v134, %v131
    %v162 = vpack.c.bf16 %v138, %v135
    %v163 = vpack.c.bf16 %v139, %v136
    %v164 = vpack.c.bf16 %v140, %v137
    %v165 = vld [vmem:[%s2] sm:$0x7]
    %v167 = vlaneseq
    %v168 = vshrl.u32 %v167, 7
    %v169 = vsub.s32 0, %v168
    %v170 = vrot.slane %v165, %v169
    %v171 = vlaneseq
    %v172 = vshrl.u32 %v171, 7
    %v173 = vsub.s32 1, %v172
    %v174 = vrot.slane %v165, %v173
    %v175 = vlaneseq
    %v176 = vshrl.u32 %v175, 7
    %v177 = vsub.s32 2, %v176
    %v178 = vrot.slane %v165, %v177
    %182 = vmatprep.subr.bf16.mxu0 %v142
    %183 = vmatpush1.bf16.msra.mxu0 %v141
    %184 = vmatprep.subr.bf16.mxu0 %v145
    %185 = vmatpush1.bf16.msra.mxu0 %v144
    %186 = vmatprep.subr.bf16.mxu0 %v148
    %187 = vmatpush1.bf16.msra.mxu0 %v147
    %188 = vmatprep.subr.bf16.mxu0 %v151
    %189 = vmatpush1.bf16.msra.mxu0 %v150
    %190 = vmatprep.subr.bf16.mxu0 %v154
    %191 = vmatpush1.bf16.msra.mxu0 %v153
    %192 = vmatprep.subr.bf16.mxu0 %v157
    %193 = vmatpush1.bf16.msra.mxu0 %v156
    %194 = vmatprep.subr.bf16.mxu0 %v160
    %195 = vmatpush1.bf16.msra.mxu0 %v159
    %196 = vmatprep.subr.bf16.mxu0 %v163
    %197 = vmatpush1.bf16.msra.mxu0 %v162
    %198 = vmatprep.subr.bf16.mxu0 0
    %199 = vmatpush1.bf16.msra.mxu0 0
    %200 = vmatprep.subr.bf16.mxu0 0
    %201 = vmatpush1.bf16.msra.mxu0 0
    %202 = vmatprep.subr.bf16.mxu0 0
    %203 = vmatpush1.bf16.msra.mxu0 0
    %204 = vmatprep.subr.bf16.mxu0 0
    %205 = vmatpush1.bf16.msra.mxu0 0
    %206 = vmatprep.subr.bf16.mxu0 0
    %207 = vmatpush1.bf16.msra.mxu0 0
    %208 = vmatprep.subr.bf16.mxu0 0
    %209 = vmatpush1.bf16.msra.mxu0 0
    %210 = vmatprep.subr.bf16.mxu0 0
    %211 = vmatpush1.bf16.msra.mxu0 0
    %212 = vmatprep.subr.bf16.mxu0 0
    %213 = vmatpush1.bf16.msra.mxu0 0
    %214 = vmatprep.mubr.bf16.mxu0 0
    %215 = vmatmul.mubr.bf16.gmra.mrb[0].mxu0 %v92
    %v216 = vpop.f32.mrb[0].mxu0
    %v217 = vadd.f32 %v170, %v216
    %v218 = vpop.f32.mrb[0].mxu0
    %v219 = vadd.f32 %v174, %v218
    %v220 = vpop.f32.mrb[0].mxu0
    %v221 = vadd.f32 %v170, %v220
    %v222 = vpop.f32.mrb[0].mxu0
    %v223 = vadd.f32 %v174, %v222
    %224 = vdwg.mxu0
    %225 = vmatprep.subr.bf16.mxu0 0
    %226 = vmatpush1.bf16.msra.mxu0 %v143
    %227 = vmatprep.subr.bf16.mxu0 0
    %228 = vmatpush1.bf16.msra.mxu0 %v146
    %229 = vmatprep.subr.bf16.mxu0 0
    %230 = vmatpush1.bf16.msra.mxu0 %v149
    %231 = vmatprep.subr.bf16.mxu0 0
    %232 = vmatpush1.bf16.msra.mxu0 %v152
    %233 = vmatprep.subr.bf16.mxu0 0
    %234 = vmatpush1.bf16.msra.mxu0 %v155
    %235 = vmatprep.subr.bf16.mxu0 0
    %236 = vmatpush1.bf16.msra.mxu0 %v158
    %237 = vmatprep.subr.bf16.mxu0 0
    %238 = vmatpush1.bf16.msra.mxu0 %v161
    %239 = vmatprep.subr.bf16.mxu0 0
    %240 = vmatpush1.bf16.msra.mxu0 %v164
    %241 = vmatprep.subr.bf16.mxu0 0
    %242 = vmatpush1.bf16.msra.mxu0 0
    %243 = vmatprep.subr.bf16.mxu0 0
    %244 = vmatpush1.bf16.msra.mxu0 0
    %245 = vmatprep.subr.bf16.mxu0 0
    %246 = vmatpush1.bf16.msra.mxu0 0
    %247 = vmatprep.subr.bf16.mxu0 0
    %248 = vmatpush1.bf16.msra.mxu0 0
    %249 = vmatprep.subr.bf16.mxu0 0
    %250 = vmatpush1.bf16.msra.mxu0 0
    %251 = vmatprep.subr.bf16.mxu0 0
    %252 = vmatpush1.bf16.msra.mxu0 0
    %253 = vmatprep.subr.bf16.mxu0 0
    %254 = vmatpush1.bf16.msra.mxu0 0
    %255 = vmatprep.subr.bf16.mxu0 0
    %256 = vmatpush1.bf16.msra.mxu0 0
    %257 = vmatprep.mubr.bf16.mxu0 0
    %258 = vmatmul.mubr.bf16.gmra.mrb[0].mxu0 %v92
    %v259 = vpop.f32.mrb[0].mxu0
    %v260 = vadd.f32 %v178, %v259
    %v261 = vpop.f32.mrb[0].mxu0
    %v262 = vpop.f32.mrb[0].mxu0
    %v263 = vadd.f32 %v178, %v262
    %v264 = vpop.f32.mrb[0].mxu0
    %265 = vdwg.mxu0
    %266 = vst [vmem:[%s5] sm:$0xff] %v217
    %267 = vst [vmem:[%s5 + $0x8] sm:$0xff] %v219
    %268 = vst [vmem:[%s5 + $0x10] sm:$0xff] %v260
    %269 = vst [vmem:[%s5 + $0x18] sm:$0xff] %v221
    %270 = vst [vmem:[%s5 + $0x20] sm:$0xff] %v223
    %271 = vst [vmem:[%s5 + $0x28] sm:$0xff] %v263
    // Predicated region
    $region26: #{encoder_forward.11} parent=1 // pred_check
      _
    $region27: #{encoder_forward.11} parent=1 // pred_check_branch
      %273 = sbr.rel (0) target = $region29
    $region28: #{encoder_forward.11} parent=1 // pred_region
      _
    $region29: #{encoder_forward.11} parent=1 // pred_fallthru
      _
    // Predicated region
    $region30: #{encoder_forward.11} parent=1 // pred_check
      _
    $region31: #{encoder_forward.11} parent=1 // pred_check_branch
      %275 = sbr.rel (0) target = $region33
    $region32: #{encoder_forward.11} parent=1 // pred_region
      _
    $region33: #{encoder_forward.11} parent=1 // pred_fallthru
      _
    %276 = vsyncpa [#allocation3], 1

// kernel: encoder_forward.12
$region0: #{encoder_forward.12}
  #allocation0 [shape = 'u32[]', space=smem, size = 0x4, offset = 0x4, fixed_abs, tag = 'smem constant byte address 0x4 - core index']
  #allocation1 [shape = 'u32[144,128]{1,0:T(1,128)}', space=vmem, size = 0x12000, scoped, tag = 'internal scratch']
  #allocation2 [shape = 'f32[4,8,1]{2,1,0:T(8,128)}', space=vmem, size = 0x4000, scoped, tag = 'scratch operand']
  #allocation3 [shape = 'f32[4,8,1]{2,1,0:T(8,128)}', space=vmem, size = 0x4000, scoped, tag = 'scratch operand']
  #allocation4 [shape = 'f32[8,128]{1,0:T(8,128)}', space=vmem, size = 0x1000, scoped, tag = 'scratch operand']
  %s0 = inlined_call_operand.vmem [shape: f32[2,8,384], index: 0, kind: input, shape index: {}, may-alias: {0,1,2}]
  %s1 = inlined_call_operand.vmem [shape: f32[2,8,384], index: 1, kind: input, shape index: {}, may-alias: {0,1,2}]
  %s2 = inlined_call_operand.vmem [shape: f32[2,8,384], index: 2, kind: input, shape index: {}, may-alias: {0,1,2}]
  %s3 = inlined_call_operand.vmem [shape: f32[2,1,8], index: 3, kind: input, shape index: {}]
  %s4 = inlined_call_operand.vmem [shape: f32[2,8,128], index: 4, kind: output, shape index: {}]
  %s5 = sld [smem:[#allocation0]]
  $region57: #{encoder_forward.12} parent=0
    _
  %s7 = ssub.s32 1, %s5
  %s8 = scalar_select 0, %s7, %s5
  loop: start=0, step=1, limit=4
  $region2: #{encoder_forward.12} parent=0 // loop_pre_header
    _
  $region3: #{encoder_forward.12} parent=0 // loop_header
    %s10 = sphi 0, %s14
    %p11 = scmp.ge.s32.totalorder %s10, 4
    %s17 = sphi 0, %s36
    %s18 = sphi 0, %s32
    %s19 = sphi 0, %s28
    %s20 = sphi 0, %s17
    %s21 = sphi 0, %s18
    %s22 = sphi 0, %s19
    %s23 = sphi 0, %s20
    %s24 = sphi 0, %s21
    %s25 = sphi 0, %s22
    %s41 = sphi 0, %s43
    %s44 = sphi 0, %s41
    %s45 = sphi 0, %s44
    %s61 = sphi 0, %s45
    %s69 = sphi 0, %s71
    %s72 = sphi 0, %s69
    %s73 = sphi 0, %s72
    %s89 = sphi 0, %s73
    %s97 = sphi 0, %s99
    %s100 = sphi 0, %s97
    %s101 = sphi 0, %s100
    %s117 = sphi 0, %s101
    %s125 = sphi 0, %s127
    %s128 = sphi 0, %s125
    %s129 = sphi 0, %s128
    %s145 = sphi 0, %s129
    %s153 = sphi 0, %s155
    %s156 = sphi 0, %s153
    %s157 = sphi 0, %s156
    %s173 = sphi 0, %s157
  $region4: #{encoder_forward.12} parent=0 // loop_header_branch
    %13 = sbr.rel (%p11) target = $region8
  $region5: #{encoder_forward.12} parent=0 // loop_body
    %s15 = ssub.s32 %s10, 1
    %s16 = ssub.s32 %s10, 2
    %s26 = sadd.s32 1, %s19
    %p27 = scmp.ge.s32.totalorder %s26, 1
    %s28 = scalar_select %p27, 0, %s26
    %s29 = sadd.s32 1, %s18
    %s30 = scalar_select %p27, %s29, %s18
    %p31 = scmp.ge.s32.totalorder %s30, 1
    %s32 = scalar_select %p31, 0, %s30
    %s33 = sadd.s32 1, %s17
    %s34 = scalar_select %p31, %s33, %s17
    %p35 = scmp.ge.s32.totalorder %s34, 2
    %s36 = scalar_select %p35, 0, %s34
    %s37 = ssub.s32 %s17, %s36
    %s38 = ssub.s32 %s18, %s32
    %s39 = sor.u32 %s37, %s38
    %p40 = scmp.eq.s32.totalorder %s39, 0
    %s42 = sadd.s32 %s41, 1
    %s43 = scalar_select %p40, %s41, %s42
    %p46 = pneg %p40
    %p47 = scmp.eq.s32.totalorder %s10, 1
    %p48 = por %p46, %p47
    %p49 = scmp.ne.s32.totalorder %s41, %s44
    %p50 = scmp.eq.s32.totalorder %s10, 0
    %p51 = por %p49, %p50
    %p52 = scmp.ne.s32.totalorder %s41, %s44
    %p53 = scmp.eq.s32.totalorder %s15, 1
    %p54 = por %p52, %p53
    %p55 = scmp.ne.s32.totalorder %s44, %s45
    %p56 = scmp.eq.s32.totalorder %s15, 0
    %p57 = por %p55, %p56
    %p58 = scmp.ne.s32.totalorder %s44, %s45
    %p59 = scmp.eq.s32.totalorder %s16, 1
    %p60 = por %p58, %p59
    %p62 = scmp.ne.s32.totalorder %s45, %s61
    %p63 = scmp.eq.s32.totalorder %s16, 0
    %p64 = por %p62, %p63
    %s65 = ssub.s32 %s17, %s36
    %s66 = ssub.s32 %s19, %s28
    %s67 = sor.u32 %s65, %s66
    %p68 = scmp.eq.s32.totalorder %s67, 0
    %s70 = sadd.s32 %s69, 1
    %s71 = scalar_select %p68, %s69, %s70
    %p74 = pneg %p68
    %p75 = scmp.eq.s32.totalorder %s10, 1
    %p76 = por %p74, %p75
    %p77 = scmp.ne.s32.totalorder %s69, %s72
    %p78 = scmp.eq.s32.totalorder %s10, 0
    %p79 = por %p77, %p78
    %p80 = scmp.ne.s32.totalorder %s69, %s72
    %p81 = scmp.eq.s32.totalorder %s15, 1
    %p82 = por %p80, %p81
    %p83 = scmp.ne.s32.totalorder %s72, %s73
    %p84 = scmp.eq.s32.totalorder %s15, 0
    %p85 = por %p83, %p84
    %p86 = scmp.ne.s32.totalorder %s72, %s73
    %p87 = scmp.eq.s32.totalorder %s16, 1
    %p88 = por %p86, %p87
    %p90 = scmp.ne.s32.totalorder %s73, %s89
    %p91 = scmp.eq.s32.totalorder %s16, 0
    %p92 = por %p90, %p91
    %s93 = ssub.s32 %s17, %s36
    %s94 = ssub.s32 %s19, %s28
    %s95 = sor.u32 %s93, %s94
    %p96 = scmp.eq.s32.totalorder %s95, 0
    %s98 = sadd.s32 %s97, 1
    %s99 = scalar_select %p96, %s97, %s98
    %p102 = pneg %p96
    %p103 = scmp.eq.s32.totalorder %s10, 1
    %p104 = por %p102, %p103
    %p105 = scmp.ne.s32.totalorder %s97, %s100
    %p106 = scmp.eq.s32.totalorder %s10, 0
    %p107 = por %p105, %p106
    %p108 = scmp.ne.s32.totalorder %s97, %s100
    %p109 = scmp.eq.s32.totalorder %s15, 1
    %p110 = por %p108, %p109
    %p111 = scmp.ne.s32.totalorder %s100, %s101
    %p112 = scmp.eq.s32.totalorder %s15, 0
    %p113 = por %p111, %p112
    %p114 = scmp.ne.s32.totalorder %s100, %s101
    %p115 = scmp.eq.s32.totalorder %s16, 1
    %p116 = por %p114, %p115
    %p118 = scmp.ne.s32.totalorder %s101, %s117
    %p119 = scmp.eq.s32.totalorder %s16, 0
    %p120 = por %p118, %p119
    %s121 = ssub.s32 %s17, %s36
    %s122 = ssub.s32 %s19, %s28
    %s123 = sor.u32 %s121, %s122
    %p124 = scmp.eq.s32.totalorder %s123, 0
    %s126 = sadd.s32 %s125, 1
    %s127 = scalar_select %p124, %s125, %s126
    %p130 = pneg %p124
    %p131 = scmp.eq.s32.totalorder %s10, 1
    %p132 = por %p130, %p131
    %p133 = scmp.ne.s32.totalorder %s125, %s128
    %p134 = scmp.eq.s32.totalorder %s10, 0
    %p135 = por %p133, %p134
    %p136 = scmp.ne.s32.totalorder %s125, %s128
    %p137 = scmp.eq.s32.totalorder %s15, 1
    %p138 = por %p136, %p137
    %p139 = scmp.ne.s32.totalorder %s128, %s129
    %p140 = scmp.eq.s32.totalorder %s15, 0
    %p141 = por %p139, %p140
    %p142 = scmp.ne.s32.totalorder %s128, %s129
    %p143 = scmp.eq.s32.totalorder %s16, 1
    %p144 = por %p142, %p143
    %p146 = scmp.ne.s32.totalorder %s129, %s145
    %p147 = scmp.eq.s32.totalorder %s16, 0
    %p148 = por %p146, %p147
    %s149 = ssub.s32 %s17, %s36
    %s150 = ssub.s32 %s18, %s32
    %s151 = sor.u32 %s149, %s150
    %p152 = scmp.eq.s32.totalorder %s151, 0
    %s154 = sadd.s32 %s153, 1
    %s155 = scalar_select %p152, %s153, %s154
    %p158 = pneg %p152
    %p159 = scmp.eq.s32.totalorder %s10, 1
    %p160 = por %p158, %p159
    %p161 = scmp.ne.s32.totalorder %s153, %s156
    %p162 = scmp.eq.s32.totalorder %s10, 0
    %p163 = por %p161, %p162
    %p164 = scmp.ne.s32.totalorder %s153, %s156
    %p165 = scmp.eq.s32.totalorder %s15, 1
    %p166 = por %p164, %p165
    %p167 = scmp.ne.s32.totalorder %s156, %s157
    %p168 = scmp.eq.s32.totalorder %s15, 0
    %p169 = por %p167, %p168
    %p170 = scmp.ne.s32.totalorder %s156, %s157
    %p171 = scmp.eq.s32.totalorder %s16, 1
    %p172 = por %p170, %p171
    %p174 = scmp.ne.s32.totalorder %s157, %s173
    %p175 = scmp.eq.s32.totalorder %s16, 0
    %p176 = por %p174, %p175
    %p177 = scmp.le.s32.totalorder 1, %s10
    %p178 = scmp.lt.s32.totalorder %s10, 3
    %p179 = pnand %p177, %p178
    %p180 = pneg %p179
    // Predicated region
    $region9: #{encoder_forward.12} parent=5 // pred_check
      _
    $region10: #{encoder_forward.12} parent=5 // pred_check_branch
      %182 = sbr.rel (%p179) target = $region12
    $region11: #{encoder_forward.12} parent=5 // pred_region
      %s183 = ssub.s32 %s10, 1
    $region12: #{encoder_forward.12} parent=5 // pred_fallthru
      _
    %p184 = scmp.lt.s32.totalorder %s10, 2
    // Predicated region
    $region13: #{encoder_forward.12} parent=5 // pred_check
      %p185 = pneg %p184
    $region14: #{encoder_forward.12} parent=5 // pred_check_branch
      %187 = sbr.rel (%p185) target = $region16
    $region15: #{encoder_forward.12} parent=5 // pred_region
      // Predicated region
      $region17: #{encoder_forward.12} parent=15 // pred_check
        %p188 = pneg %p51
      $region18: #{encoder_forward.12} parent=15 // pred_check_branch
        %190 = sbr.rel (%p188) target = $region20
      $region19: #{encoder_forward.12} parent=15 // pred_region
        %p191 = scmp.lt.s32.totalorder %s17, 1
        %s192 = scalar_select %p191, %s17, 1
        %p193 = scmp.lt.s32.totalorder %s18, 0
        %s194 = scalar_select %p193, %s18, 0
        %s195 = smul.addr %s194, 3
        %s196 = smul.addr %s192, 3
        %s197 = sadd.s32 %s195, %s196
        %s198 = smul.addr %s197, 8
        %s199 = scalar_lea.vmem %s0, %s198
      $region20: #{encoder_forward.12} parent=15 // pred_fallthru
        _
      // Predicated region
      $region21: #{encoder_forward.12} parent=15 // pred_check
        %p200 = pneg %p79
      $region22: #{encoder_forward.12} parent=15 // pred_check_branch
        %202 = sbr.rel (%p200) target = $region24
      $region23: #{encoder_forward.12} parent=15 // pred_region
        %p203 = scmp.lt.s32.totalorder %s17, 1
        %s204 = scalar_select %p203, %s17, 1
        %p205 = scmp.lt.s32.totalorder %s19, 0
        %s206 = scalar_select %p205, %s19, 0
        %s207 = smul.addr %s206, 3
        %s208 = sadd.s32 1, %s207
        %s209 = smul.addr %s204, 3
        %s210 = sadd.s32 %s208, %s209
        %s211 = smul.addr %s210, 8
        %s212 = scalar_lea.vmem %s1, %s211
      $region24: #{encoder_forward.12} parent=15 // pred_fallthru
        _
      // Predicated region
      $region25: #{encoder_forward.12} parent=15 // pred_check
        %p213 = pneg %p107
      $region26: #{encoder_forward.12} parent=15 // pred_check_branch
        %215 = sbr.rel (%p213) target = $region28
      $region27: #{encoder_forward.12} parent=15 // pred_region
        %p216 = scmp.lt.s32.totalorder %s17, 1
        %s217 = scalar_select %p216, %s17, 1
        %p218 = scmp.lt.s32.totalorder %s19, 0
        %s219 = scalar_select %p218, %s19, 0
        %s220 = smul.addr %s219, 3
        %s221 = sadd.s32 2, %s220
        %s222 = smul.addr %s217, 3
        %s223 = sadd.s32 %s221, %s222
        %s224 = smul.addr %s223, 8
        %s225 = scalar_lea.vmem %s2, %s224
      $region28: #{encoder_forward.12} parent=15 // pred_fallthru
        _
      // Predicated region
      $region29: #{encoder_forward.12} parent=15 // pred_check
        %p226 = pneg %p135
      $region30: #{encoder_forward.12} parent=15 // pred_check_branch
        %228 = sbr.rel (%p226) target = $region32
      $region31: #{encoder_forward.12} parent=15 // pred_region
        %p229 = scmp.lt.s32.totalorder %s17, 1
        %s230 = scalar_select %p229, %s17, 1
        %p231 = scmp.lt.s32.totalorder %s19, 0
        %s232 = scalar_select %p231, %s19, 0
        %s233 = sadd.s32 %s232, %s230
        %s234 = scalar_lea.vmem %s3, %s233
      $region32: #{encoder_forward.12} parent=15 // pred_fallthru
        _
    $region16: #{encoder_forward.12} parent=5 // pred_fallthru
      _
    %p235 = scmp.le.s32.totalorder 1, %s10
    %p236 = scmp.lt.s32.totalorder %s10, 3
    %p237 = pnand %p235, %p236
    %p238 = pneg %p237
    // Predicated region
    $region33: #{encoder_forward.12} parent=5 // pred_check
      _
    $region34: #{encoder_forward.12} parent=5 // pred_check_branch
      %240 = sbr.rel (%p237) target = $region36
    $region35: #{encoder_forward.12} parent=5 // pred_region
      %s241 = ssub.s32 %s10, 1
      %p242 = scmp.lt.s32.totalorder %s20, 1
      %s243 = scalar_select %p242, %s20, 1
      %p244 = scmp.lt.s32.totalorder %s21, 0
      %s245 = scalar_select %p244, %s21, 0
      %s246 = smul.addr %s245, 3
      %s247 = smul.addr %s243, 3
      %s248 = sadd.s32 %s246, %s247
      %s249 = smul.addr %s248, 8
      %s250 = scalar_lea.vmem %s0, %s249
      %p251 = pneg %p57
      %p252 = pneg %p54
      %p253 = scmp.lt.s32.totalorder %s20, 1
      %s254 = scalar_select %p253, %s20, 1
      %p255 = scmp.lt.s32.totalorder %s22, 0
      %s256 = scalar_select %p255, %s22, 0
      %s257 = smul.addr %s256, 3
      %s258 = sadd.s32 1, %s257
      %s259 = smul.addr %s254, 3
      %s260 = sadd.s32 %s258, %s259
      %s261 = smul.addr %s260, 8
      %s262 = scalar_lea.vmem %s1, %s261
      %p263 = pneg %p85
      %p264 = pneg %p82
      %p265 = scmp.lt.s32.totalorder %s20, 1
      %s266 = scalar_select %p265, %s20, 1
      %p267 = scmp.lt.s32.totalorder %s22, 0
      %s268 = scalar_select %p267, %s22, 0
      %s269 = smul.addr %s268, 3
      %s270 = sadd.s32 2, %s269
      %s271 = smul.addr %s266, 3
      %s272 = sadd.s32 %s270, %s271
      %s273 = smul.addr %s272, 8
      %s274 = scalar_lea.vmem %s2, %s273
      %p275 = pneg %p113
      %p276 = pneg %p110
      %p277 = scmp.lt.s32.totalorder %s20, 1
      %s278 = scalar_select %p277, %s20, 1
      %p279 = scmp.lt.s32.totalorder %s22, 0
      %s280 = scalar_select %p279, %s22, 0
      %s281 = sadd.s32 %s280, %s278
      %s282 = scalar_lea.vmem %s3, %s281
      %p283 = pneg %p141
      %p284 = pneg %p138
      %p285 = pneg %p169
      %p286 = pneg %p166
      %p287 = scmp.lt.s32.totalorder %s20, 1
      %s288 = scalar_select %p287, %s20, 1
      %p289 = scmp.lt.s32.totalorder %s21, 0
      %s290 = scalar_select %p289, %s21, 0
      %s291 = sadd.s32 %s290, %s288
      %s292 = smul.addr %s291, 8
      %s293 = scalar_lea.vmem %s4, %s292
      %p294 = scmp.lt.s32.totalorder %s20, 1
      %s295 = scalar_select %p294, %s20, 1
      %p296 = scmp.lt.s32.totalorder %s21, 0
      %s297 = scalar_select %p296, %s21, 0
      %s298 = smul.addr %s297, 3
      %s299 = smul.addr %s295, 3
      %s300 = sadd.s32 %s298, %s299
      %s301 = smul.addr %s300, 8
      %s302 = scalar_lea.vmem %s0, %s301
      %p303 = scmp.lt.s32.totalorder %s20, 1
      %s304 = scalar_select %p303, %s20, 1
      %p305 = scmp.lt.s32.totalorder %s22, 0
      %s306 = scalar_select %p305, %s22, 0
      %s307 = smul.addr %s306, 3
      %s308 = sadd.s32 1, %s307
      %s309 = smul.addr %s304, 3
      %s310 = sadd.s32 %s308, %s309
      %s311 = smul.addr %s310, 8
      %s312 = scalar_lea.vmem %s1, %s311
      %p313 = scmp.lt.s32.totalorder %s20, 1
      %s314 = scalar_select %p313, %s20, 1
      %p315 = scmp.lt.s32.totalorder %s22, 0
      %s316 = scalar_select %p315, %s22, 0
      %s317 = smul.addr %s316, 3
      %s318 = sadd.s32 2, %s317
      %s319 = smul.addr %s314, 3
      %s320 = sadd.s32 %s318, %s319
      %s321 = smul.addr %s320, 8
      %s322 = scalar_lea.vmem %s2, %s321
      %p323 = scmp.lt.s32.totalorder %s20, 1
      %s324 = scalar_select %p323, %s20, 1
      %p325 = scmp.lt.s32.totalorder %s22, 0
      %s326 = scalar_select %p325, %s22, 0
      %s327 = sadd.s32 %s326, %s324
      %s328 = scalar_lea.vmem %s3, %s327
      %p329 = scmp.lt.s32.totalorder %s20, 1
      %s330 = scalar_select %p329, %s20, 1
      %p331 = scmp.lt.s32.totalorder %s21, 0
      %s332 = scalar_select %p331, %s21, 0
      %s333 = sadd.s32 %s332, %s330
      %s334 = smul.addr %s333, 8
      %s335 = scalar_lea.vmem %s4, %s334
      %p337 = scmp.eq.s32.totalorder %s22, 0
      // Predicated region
      $region37: #{encoder_forward.12} parent=35 // pred_check
        %p338 = pneg %p337
      $region38: #{encoder_forward.12} parent=35 // pred_check_branch
        %340 = sbr.rel (%p338) target = $region40
      $region39: #{encoder_forward.12} parent=35 // pred_region
        %vm341 = vcmask 7168
        %342 = vst.msk [vmem:[#allocation2] sm:$0xff] %vm341, -inf
        %343 = vst.msk [vmem:[#allocation2 + $0x8] sm:$0xff] %vm341, -inf
        %344 = vst.msk [vmem:[#allocation2 + $0x10] sm:$0xff] %vm341, -inf
        %345 = vst.msk [vmem:[#allocation2 + $0x18] sm:$0xff] %vm341, -inf
        %346 = vst.msk [vmem:[#allocation3] sm:$0xff] %vm341, 0.0
        %347 = vst.msk [vmem:[#allocation3 + $0x8] sm:$0xff] %vm341, 0.0
        %348 = vst.msk [vmem:[#allocation3 + $0x10] sm:$0xff] %vm341, 0.0
        %349 = vst.msk [vmem:[#allocation3 + $0x18] sm:$0xff] %vm341, 0.0
        %350 = vst [vmem:[#allocation4] sm:$0xff] 0.0
      $region40: #{encoder_forward.12} parent=35 // pred_fallthru
        _
      %v351 = vld [vmem:[%s302] sm:$0xff]
      %v352 = vmul.f32 %v351, 0.17677669
      %v353 = vpack.c.bf16 %v352, %v352
      %v354 = vld [vmem:[%s312] sm:$0xff]
      %v355 = vpack.c.bf16 %v354, %v354
      %v356 = vld [vmem:[%s322] sm:$0xff]
      %v357 = vpack.c.bf16 %v356, %v356
      %v358 = vld [vmem:[%s328] sm:$0x1]
      %v360 = vlaneseq
      %v361 = vshrl.u32 %v360, 7
      %v362 = vsub.s32 0, %v361
      %v363 = vrot.slane %v358, %v362
      %vm365 = vcmask 261120
      %v367 = vsel %vm365, %v353, 0
      %v370 = vsel %vm365, %v355, 0
      %372 = vmatprep.subr.bf16.mxu0 0
      %373 = vmatpush1.bf16.xpose.msra.mxu0 %v370
      %374 = vmatprep.subr.bf16.mxu0 0
      %375 = vmatpush1.bf16.xpose.msra.mxu0 0
      %376 = vmatprep.subr.bf16.mxu0 0
      %377 = vmatpush1.bf16.xpose.msra.mxu0 0
      %378 = vmatprep.subr.bf16.mxu0 0
      %379 = vmatpush1.bf16.xpose.msra.mxu0 0
      %380 = vmatprep.subr.bf16.mxu0 0
      %381 = vmatpush1.bf16.xpose.msra.mxu0 0
      %382 = vmatprep.subr.bf16.mxu0 0
      %383 = vmatpush1.bf16.xpose.msra.mxu0 0
      %384 = vmatprep.subr.bf16.mxu0 0
      %385 = vmatpush1.bf16.xpose.msra.mxu0 0
      %386 = vmatprep.subr.bf16.mxu0 0
      %387 = vmatpush1.bf16.xpose.msra.mxu0 0
      %388 = vmatprep.subr.bf16.mxu0 0
      %389 = vmatpush1.bf16.xpose.msra.mxu0 0
      %390 = vmatprep.subr.bf16.mxu0 0
      %391 = vmatpush1.bf16.xpose.msra.mxu0 0
      %392 = vmatprep.subr.bf16.mxu0 0
      %393 = vmatpush1.bf16.xpose.msra.mxu0 0
      %394 = vmatprep.subr.bf16.mxu0 0
      %395 = vmatpush1.bf16.xpose.msra.mxu0 0
      %396 = vmatprep.subr.bf16.mxu0 0
      %397 = vmatpush1.bf16.xpose.msra.mxu0 0
      %398 = vmatprep.subr.bf16.mxu0 0
      %399 = vmatpush1.bf16.xpose.msra.mxu0 0
      %400 = vmatprep.subr.bf16.mxu0 0
      %401 = vmatpush1.bf16.xpose.msra.mxu0 0
      %402 = vmatprep.subr.bf16.mxu0 0
      %403 = vmatpush1.bf16.xpose.msra.mxu0 0
      %404 = vmatprep.mubr.bf16.mxu0 0
      %405 = vmatmul.mubr.bf16.gmra.mrb[0].mxu0 %v367
      %v406 = vpop.f32.mrb[0].mxu0
      %v407 = vadd.f32 %v363, %v406
      %v408 = vpop.f32.mrb[0].mxu0
      %v409 = vpop.f32.mrb[0].mxu0
      %v410 = vpop.f32.mrb[0].mxu0
      %411 = vdwg.mxu0
      %v412 = vld [vmem:[#allocation2] sm:$0xff]
      %vm413 = vcmask 64512
      %v414 = vsel %vm413, %v407, -inf
      %415 = vmax.xlane.f32.xlu0 %v414
      %v416 = vpop.xlane.xlu0 %415
      %v417 = vmax.f32 %v412, %v416
      %v418 = vsub.f32 %v412, %v417
      %v419 = vmul.f32 %v418, 1.442695
      %v420 = vpow.pop %v419
      %422 = vset.pattern.permute.xlu0 0
      %423 = vperm.xlu0 %422, %v417
      %v424 = vpop.permute.xlu0 %423
      %v426 = vsub.f32 %v407, %v424
      %v427 = vmul.f32 %v426, 1.442695
      %v428 = vpow.pop %v427
      %v429 = vld [vmem:[#allocation3] sm:$0xff]
      %v430 = vmul.f32 %v420, %v429
      %v431 = vsel %vm413, %v428, 0.0
      %432 = vadd.xlane.f32.xlu0 %v431
      %v433 = vpop.xlane.xlu0 %432
      %v434 = vadd.f32 %v430, %v433
      %vm435 = vcmask 7168
      %436 = vst.msk [vmem:[#allocation3] sm:$0xff] %vm435, %v434
      %v437 = vld [vmem:[#allocation4] sm:$0xff]
      %439 = vset.pattern.permute.xlu0 0
      %440 = vperm.xlu0 %439, %v420
      %v441 = vpop.permute.xlu0 %440
      %v443 = vmul.f32 %v441, %v437
      %v444 = vpack.c.bf16 %v428, %v428
      %v446 = vsel %vm413, %v444, 0
      %vm448 = vcmask 1043456
      %v450 = vsel %vm448, %v357, 0
      %452 = vmatprep.subr.bf16.mxu0 0
      %453 = vmatpush1.bf16.msra.mxu0 %v450
      %454 = vmatprep.subr.bf16.mxu0 0
      %455 = vmatpush1.bf16.msra.mxu0 0
      %456 = vmatprep.subr.bf16.mxu0 0
      %457 = vmatpush1.bf16.msra.mxu0 0
      %458 = vmatprep.subr.bf16.mxu0 0
      %459 = vmatpush1.bf16.msra.mxu0 0
      %460 = vmatprep.subr.bf16.mxu0 0
      %461 = vmatpush1.bf16.msra.mxu0 0
      %462 = vmatprep.subr.bf16.mxu0 0
      %463 = vmatpush1.bf16.msra.mxu0 0
      %464 = vmatprep.subr.bf16.mxu0 0
      %465 = vmatpush1.bf16.msra.mxu0 0
      %466 = vmatprep.subr.bf16.mxu0 0
      %467 = vmatpush1.bf16.msra.mxu0 0
      %468 = vmatprep.subr.bf16.mxu0 0
      %469 = vmatpush1.bf16.msra.mxu0 0
      %470 = vmatprep.subr.bf16.mxu0 0
      %471 = vmatpush1.bf16.msra.mxu0 0
      %472 = vmatprep.subr.bf16.mxu0 0
      %473 = vmatpush1.bf16.msra.mxu0 0
      %474 = vmatprep.subr.bf16.mxu0 0
      %475 = vmatpush1.bf16.msra.mxu0 0
      %476 = vmatprep.subr.bf16.mxu0 0
      %477 = vmatpush1.bf16.msra.mxu0 0
      %478 = vmatprep.subr.bf16.mxu0 0
      %479 = vmatpush1.bf16.msra.mxu0 0
      %480 = vmatprep.subr.bf16.mxu0 0
      %481 = vmatpush1.bf16.msra.mxu0 0
      %482 = vmatprep.subr.bf16.mxu0 0
      %483 = vmatpush1.bf16.msra.mxu0 0
      %484 = vmatprep.mubr.bf16.mxu0 0
      %485 = vmatmul.mubr.bf16.gmra.mrb[0].mxu0 %v446
      %v486 = vpop.f32.mrb[0].mxu0
      %v487 = vadd.f32 0.0, %v486
      %v488 = vpop.f32.mrb[0].mxu0
      %v489 = vpop.f32.mrb[0].mxu0
      %v490 = vpop.f32.mrb[0].mxu0
      %491 = vdwg.mxu0
      %v492 = vadd.f32 %v443, %v487
      %493 = vst.msk [vmem:[#allocation4] sm:$0xff] %vm365, %v492
      %494 = vst.msk [vmem:[#allocation2] sm:$0xff] %vm435, %v417
      %496 = vrot.lane.b32.xlu0 %v353, 96
      %v497 = vpop.permute.xlu0 %496
      %499 = vrot.lane.b32.xlu0 %v355, 96
      %v500 = vpop.permute.xlu0 %499
      %v502 = vsel %vm365, %v497, 0
      %v505 = vsel %vm365, %v500, 0
      %507 = vmatprep.subr.bf16.mxu0 0
      %508 = vmatpush1.bf16.xpose.msra.mxu0 %v505
      %509 = vmatprep.subr.bf16.mxu0 0
      %510 = vmatpush1.bf16.xpose.msra.mxu0 0
      %511 = vmatprep.subr.bf16.mxu0 0
      %512 = vmatpush1.bf16.xpose.msra.mxu0 0
      %513 = vmatprep.subr.bf16.mxu0 0
      %514 = vmatpush1.bf16.xpose.msra.mxu0 0
      %515 = vmatprep.subr.bf16.mxu0 0
      %516 = vmatpush1.bf16.xpose.msra.mxu0 0
      %517 = vmatprep.subr.bf16.mxu0 0
      %518 = vmatpush1.bf16.xpose.msra.mxu0 0
      %519 = vmatprep.subr.bf16.mxu0 0
      %520 = vmatpush1.bf16.xpose.msra.mxu0 0
      %521 = vmatprep.subr.bf16.mxu0 0
      %522 = vmatpush1.bf16.xpose.msra.mxu0 0
      %523 = vmatprep.subr.bf16.mxu0 0
      %524 = vmatpush1.bf16.xpose.msra.mxu0 0
      %525 = vmatprep.subr.bf16.mxu0 0
      %526 = vmatpush1.bf16.xpose.msra.mxu0 0
      %527 = vmatprep.subr.bf16.mxu0 0
      %528 = vmatpush1.bf16.xpose.msra.mxu0 0
      %529 = vmatprep.subr.bf16.mxu0 0
      %530 = vmatpush1.bf16.xpose.msra.mxu0 0
      %531 = vmatprep.subr.bf16.mxu0 0
      %532 = vmatpush1.bf16.xpose.msra.mxu0 0
      %533 = vmatprep.subr.bf16.mxu0 0
      %534 = vmatpush1.bf16.xpose.msra.mxu0 0
      %535 = vmatprep.subr.bf16.mxu0 0
      %536 = vmatpush1.bf16.xpose.msra.mxu0 0
      %537 = vmatprep.subr.bf16.mxu0 0
      %538 = vmatpush1.bf16.xpose.msra.mxu0 0
      %539 = vmatprep.mubr.bf16.mxu0 0
      %540 = vmatmul.mubr.bf16.gmra.mrb[0].mxu0 %v502
      %v541 = vpop.f32.mrb[0].mxu0
      %v542 = vadd.f32 %v363, %v541
      %v543 = vpop.f32.mrb[0].mxu0
      %v544 = vpop.f32.mrb[0].mxu0
      %v545 = vpop.f32.mrb[0].mxu0
      %546 = vdwg.mxu0
      %s547 = scalar_lea.vmem [#allocation2], 8
      %v548 = vld [vmem:[%s547] sm:$0xff]
      %v549 = vsel %vm413, %v542, -inf
      %550 = vmax.xlane.f32.xlu0 %v549
      %v551 = vpop.xlane.xlu0 %550
      %v552 = vmax.f32 %v548, %v551
      %v553 = vsub.f32 %v548, %v552
      %v554 = vmul.f32 %v553, 1.442695
      %v555 = vpow.pop %v554
      %557 = vset.pattern.permute.xlu0 0
      %558 = vperm.xlu0 %557, %v552
      %v559 = vpop.permute.xlu0 %558
      %v561 = vsub.f32 %v542, %v559
      %v562 = vmul.f32 %v561, 1.442695
      %v563 = vpow.pop %v562
      %s564 = scalar_lea.vmem [#allocation3], 8
      %v565 = vld [vmem:[%s564] sm:$0xff]
      %v566 = vmul.f32 %v555, %v565
      %v567 = vsel %vm413, %v563, 0.0
      %568 = vadd.xlane.f32.xlu0 %v567
      %v569 = vpop.xlane.xlu0 %568
      %v570 = vadd.f32 %v566, %v569
      %571 = vst.msk [vmem:[%s564] sm:$0xff] %vm435, %v570
      %v572 = vld [vmem:[#allocation4] sm:$0xff]
      %574 = vset.pattern.permute.xlu0 0
      %575 = vperm.xlu0 %574, %v555
      %v576 = vpop.permute.xlu0 %575
      %v578 = vmul.f32 %v576, %v572
      %v579 = vpack.c.bf16 %v563, %v563
      %581 = vrot.lane.b32.xlu0 %v357, 96
      %v582 = vpop.permute.xlu0 %581
      %v584 = vsel %vm413, %v579, 0
      %v587 = vsel %vm448, %v582, 0
      %589 = vmatprep.subr.bf16.mxu0 0
      %590 = vmatpush1.bf16.msra.mxu0 %v587
      %591 = vmatprep.subr.bf16.mxu0 0
      %592 = vmatpush1.bf16.msra.mxu0 0
      %593 = vmatprep.subr.bf16.mxu0 0
      %594 = vmatpush1.bf16.msra.mxu0 0
      %595 = vmatprep.subr.bf16.mxu0 0
      %596 = vmatpush1.bf16.msra.mxu0 0
      %597 = vmatprep.subr.bf16.mxu0 0
      %598 = vmatpush1.bf16.msra.mxu0 0
      %599 = vmatprep.subr.bf16.mxu0 0
      %600 = vmatpush1.bf16.msra.mxu0 0
      %601 = vmatprep.subr.bf16.mxu0 0
      %602 = vmatpush1.bf16.msra.mxu0 0
      %603 = vmatprep.subr.bf16.mxu0 0
      %604 = vmatpush1.bf16.msra.mxu0 0
      %605 = vmatprep.subr.bf16.mxu0 0
      %606 = vmatpush1.bf16.msra.mxu0 0
      %607 = vmatprep.subr.bf16.mxu0 0
      %608 = vmatpush1.bf16.msra.mxu0 0
      %609 = vmatprep.subr.bf16.mxu0 0
      %610 = vmatpush1.bf16.msra.mxu0 0
      %611 = vmatprep.subr.bf16.mxu0 0
      %612 = vmatpush1.bf16.msra.mxu0 0
      %613 = vmatprep.subr.bf16.mxu0 0
      %614 = vmatpush1.bf16.msra.mxu0 0
      %615 = vmatprep.subr.bf16.mxu0 0
      %616 = vmatpush1.bf16.msra.mxu0 0
      %617 = vmatprep.subr.bf16.mxu0 0
      %618 = vmatpush1.bf16.msra.mxu0 0
      %619 = vmatprep.subr.bf16.mxu0 0
      %620 = vmatpush1.bf16.msra.mxu0 0
      %621 = vmatprep.mubr.bf16.mxu0 0
      %622 = vmatmul.mubr.bf16.gmra.mrb[0].mxu0 %v584
      %v623 = vpop.f32.mrb[0].mxu0
      %v624 = vadd.f32 0.0, %v623
      %v625 = vpop.f32.mrb[0].mxu0
      %v626 = vpop.f32.mrb[0].mxu0
      %v627 = vpop.f32.mrb[0].mxu0
      %628 = vdwg.mxu0
      %630 = vrot.lane.b32.xlu0 %v624, 32
      %v631 = vpop.permute.xlu0 %630
      %v633 = vadd.f32 %v578, %v631
      %vm634 = vcmask 523520
      %635 = vst.msk [vmem:[#allocation4] sm:$0xff] %vm634, %v633
      %636 = vst.msk [vmem:[%s547] sm:$0xff] %vm435, %v552
      %637 = vrot.lane.b32.xlu0 %v353, 64
      %v638 = vpop.permute.xlu0 %637
      %639 = vrot.lane.b32.xlu0 %v355, 64
      %v640 = vpop.permute.xlu0 %639
      %v642 = vsel %vm365, %v638, 0
      %v645 = vsel %vm365, %v640, 0
      %647 = vmatprep.subr.bf16.mxu0 0
      %648 = vmatpush1.bf16.xpose.msra.mxu0 %v645
      %649 = vmatprep.subr.bf16.mxu0 0
      %650 = vmatpush1.bf16.xpose.msra.mxu0 0
      %651 = vmatprep.subr.bf16.mxu0 0
      %652 = vmatpush1.bf16.xpose.msra.mxu0 0
      %653 = vmatprep.subr.bf16.mxu0 0
      %654 = vmatpush1.bf16.xpose.msra.mxu0 0
      %655 = vmatprep.subr.bf16.mxu0 0
      %656 = vmatpush1.bf16.xpose.msra.mxu0 0
      %657 = vmatprep.subr.bf16.mxu0 0
      %658 = vmatpush1.bf16.xpose.msra.mxu0 0
      %659 = vmatprep.subr.bf16.mxu0 0
      %660 = vmatpush1.bf16.xpose.msra.mxu0 0
      %661 = vmatprep.subr.bf16.mxu0 0
      %662 = vmatpush1.bf16.xpose.msra.mxu0 0
      %663 = vmatprep.subr.bf16.mxu0 0
      %664 = vmatpush1.bf16.xpose.msra.mxu0 0
      %665 = vmatprep.subr.bf16.mxu0 0
      %666 = vmatpush1.bf16.xpose.msra.mxu0 0
      %667 = vmatprep.subr.bf16.mxu0 0
      %668 = vmatpush1.bf16.xpose.msra.mxu0 0
      %669 = vmatprep.subr.bf16.mxu0 0
      %670 = vmatpush1.bf16.xpose.msra.mxu0 0
      %671 = vmatprep.subr.bf16.mxu0 0
      %672 = vmatpush1.bf16.xpose.msra.mxu0 0
      %673 = vmatprep.subr.bf16.mxu0 0
      %674 = vmatpush1.bf16.xpose.msra.mxu0 0
      %675 = vmatprep.subr.bf16.mxu0 0
      %676 = vmatpush1.bf16.xpose.msra.mxu0 0
      %677 = vmatprep.subr.bf16.mxu0 0
      %678 = vmatpush1.bf16.xpose.msra.mxu0 0
      %679 = vmatprep.mubr.bf16.mxu0 0
      %680 = vmatmul.mubr.bf16.gmra.mrb[0].mxu0 %v642
      %v681 = vpop.f32.mrb[0].mxu0
      %v682 = vadd.f32 %v363, %v681
      %v683 = vpop.f32.mrb[0].mxu0
      %v684 = vpop.f32.mrb[0].mxu0
      %v685 = vpop.f32.mrb[0].mxu0
      %686 = vdwg.mxu0
      %s687 = scalar_lea.vmem [#allocation2], 16
      %v688 = vld [vmem:[%s687] sm:$0xff]
      %v689 = vsel %vm413, %v682, -inf
      %690 = vmax.xlane.f32.xlu0 %v689
      %v691 = vpop.xlane.xlu0 %690
      %v692 = vmax.f32 %v688, %v691
      %v693 = vsub.f32 %v688, %v692
      %v694 = vmul.f32 %v693, 1.442695
      %v695 = vpow.pop %v694
      %697 = vset.pattern.permute.xlu0 0
      %698 = vperm.xlu0 %697, %v692
      %v699 = vpop.permute.xlu0 %698
      %v701 = vsub.f32 %v682, %v699
      %v702 = vmul.f32 %v701, 1.442695
      %v703 = vpow.pop %v702
      %s704 = scalar_lea.vmem [#allocation3], 16
      %v705 = vld [vmem:[%s704] sm:$0xff]
      %v706 = vmul.f32 %v695, %v705
      %v707 = vsel %vm413, %v703, 0.0
      %708 = vadd.xlane.f32.xlu0 %v707
      %v709 = vpop.xlane.xlu0 %708
      %v710 = vadd.f32 %v706, %v709
      %711 = vst.msk [vmem:[%s704] sm:$0xff] %vm435, %v710
      %v712 = vld [vmem:[#allocation4] sm:$0xff]
      %714 = vset.pattern.permute.xlu0 0
      %715 = vperm.xlu0 %714, %v695
      %v716 = vpop.permute.xlu0 %715
      %v718 = vmul.f32 %v716, %v712
      %v719 = vpack.c.bf16 %v703, %v703
      %720 = vrot.lane.b32.xlu0 %v357, 64
      %v721 = vpop.permute.xlu0 %720
      %v723 = vsel %vm413, %v719, 0
      %v726 = vsel %vm448, %v721, 0
      %728 = vmatprep.subr.bf16.mxu0 0
      %729 = vmatpush1.bf16.msra.mxu0 %v726
      %730 = vmatprep.subr.bf16.mxu0 0
      %731 = vmatpush1.bf16.msra.mxu0 0
      %732 = vmatprep.subr.bf16.mxu0 0
      %733 = vmatpush1.bf16.msra.mxu0 0
      %734 = vmatprep.subr.bf16.mxu0 0
      %735 = vmatpush1.bf16.msra.mxu0 0
      %736 = vmatprep.subr.bf16.mxu0 0
      %737 = vmatpush1.bf16.msra.mxu0 0
      %738 = vmatprep.subr.bf16.mxu0 0
      %739 = vmatpush1.bf16.msra.mxu0 0
      %740 = vmatprep.subr.bf16.mxu0 0
      %741 = vmatpush1.bf16.msra.mxu0 0
      %742 = vmatprep.subr.bf16.mxu0 0
      %743 = vmatpush1.bf16.msra.mxu0 0
      %744 = vmatprep.subr.bf16.mxu0 0
      %745 = vmatpush1.bf16.msra.mxu0 0
      %746 = vmatprep.subr.bf16.mxu0 0
      %747 = vmatpush1.bf16.msra.mxu0 0
      %748 = vmatprep.subr.bf16.mxu0 0
      %749 = vmatpush1.bf16.msra.mxu0 0
      %750 = vmatprep.subr.bf16.mxu0 0
      %751 = vmatpush1.bf16.msra.mxu0 0
      %752 = vmatprep.subr.bf16.mxu0 0
      %753 = vmatpush1.bf16.msra.mxu0 0
      %754 = vmatprep.subr.bf16.mxu0 0
      %755 = vmatpush1.bf16.msra.mxu0 0
      %756 = vmatprep.subr.bf16.mxu0 0
      %757 = vmatpush1.bf16.msra.mxu0 0
      %758 = vmatprep.subr.bf16.mxu0 0
      %759 = vmatpush1.bf16.msra.mxu0 0
      %760 = vmatprep.mubr.bf16.mxu0 0
      %761 = vmatmul.mubr.bf16.gmra.mrb[0].mxu0 %v723
      %v762 = vpop.f32.mrb[0].mxu0
      %v763 = vadd.f32 0.0, %v762
      %v764 = vpop.f32.mrb[0].mxu0
      %v765 = vpop.f32.mrb[0].mxu0
      %v766 = vpop.f32.mrb[0].mxu0
      %767 = vdwg.mxu0
      %769 = vrot.lane.b32.xlu0 %v763, 64
      %v770 = vpop.permute.xlu0 %769
      %v772 = vadd.f32 %v718, %v770
      %vm773 = vcmask 785920
      %774 = vst.msk [vmem:[#allocation4] sm:$0xff] %vm773, %v772
      %775 = vst.msk [vmem:[%s687] sm:$0xff] %vm435, %v692
      %776 = vrot.lane.b32.xlu0 %v353, 32
      %v777 = vpop.permute.xlu0 %776
      %778 = vrot.lane.b32.xlu0 %v355, 32
      %v779 = vpop.permute.xlu0 %778
      %v781 = vsel %vm365, %v777, 0
      %v784 = vsel %vm365, %v779, 0
      %786 = vmatprep.subr.bf16.mxu0 0
      %787 = vmatpush1.bf16.xpose.msra.mxu0 %v784
      %788 = vmatprep.subr.bf16.mxu0 0
      %789 = vmatpush1.bf16.xpose.msra.mxu0 0
      %790 = vmatprep.subr.bf16.mxu0 0
      %791 = vmatpush1.bf16.xpose.msra.mxu0 0
      %792 = vmatprep.subr.bf16.mxu0 0
      %793 = vmatpush1.bf16.xpose.msra.mxu0 0
      %794 = vmatprep.subr.bf16.mxu0 0
      %795 = vmatpush1.bf16.xpose.msra.mxu0 0
      %796 = vmatprep.subr.bf16.mxu0 0
      %797 = vmatpush1.bf16.xpose.msra.mxu0 0
      %798 = vmatprep.subr.bf16.mxu0 0
      %799 = vmatpush1.bf16.xpose.msra.mxu0 0
      %800 = vmatprep.subr.bf16.mxu0 0
      %801 = vmatpush1.bf16.xpose.msra.mxu0 0
      %802 = vmatprep.subr.bf16.mxu0 0
      %803 = vmatpush1.bf16.xpose.msra.mxu0 0
      %804 = vmatprep.subr.bf16.mxu0 0
      %805 = vmatpush1.bf16.xpose.msra.mxu0 0
      %806 = vmatprep.subr.bf16.mxu0 0
      %807 = vmatpush1.bf16.xpose.msra.mxu0 0
      %808 = vmatprep.subr.bf16.mxu0 0
      %809 = vmatpush1.bf16.xpose.msra.mxu0 0
      %810 = vmatprep.subr.bf16.mxu0 0
      %811 = vmatpush1.bf16.xpose.msra.mxu0 0
      %812 = vmatprep.subr.bf16.mxu0 0
      %813 = vmatpush1.bf16.xpose.msra.mxu0 0
      %814 = vmatprep.subr.bf16.mxu0 0
      %815 = vmatpush1.bf16.xpose.msra.mxu0 0
      %816 = vmatprep.subr.bf16.mxu0 0
      %817 = vmatpush1.bf16.xpose.msra.mxu0 0
      %818 = vmatprep.mubr.bf16.mxu0 0
      %819 = vmatmul.mubr.bf16.gmra.mrb[0].mxu0 %v781
      %v820 = vpop.f32.mrb[0].mxu0
      %v821 = vadd.f32 %v363, %v820
      %v822 = vpop.f32.mrb[0].mxu0
      %v823 = vpop.f32.mrb[0].mxu0
      %v824 = vpop.f32.mrb[0].mxu0
      %825 = vdwg.mxu0
      %s826 = scalar_lea.vmem [#allocation2], 24
      %v827 = vld [vmem:[%s826] sm:$0xff]
      %v828 = vsel %vm413, %v821, -inf
      %829 = vmax.xlane.f32.xlu0 %v828
      %v830 = vpop.xlane.xlu0 %829
      %v831 = vmax.f32 %v827, %v830
      %v832 = vsub.f32 %v827, %v831
      %v833 = vmul.f32 %v832, 1.442695
      %v834 = vpow.pop %v833
      %836 = vset.pattern.permute.xlu0 0
      %837 = vperm.xlu0 %836, %v831
      %v838 = vpop.permute.xlu0 %837
      %v840 = vsub.f32 %v821, %v838
      %v841 = vmul.f32 %v840, 1.442695
      %v842 = vpow.pop %v841
      %s843 = scalar_lea.vmem [#allocation3], 24
      %v844 = vld [vmem:[%s843] sm:$0xff]
      %v845 = vmul.f32 %v834, %v844
      %v846 = vsel %vm413, %v842, 0.0
      %847 = vadd.xlane.f32.xlu0 %v846
      %v848 = vpop.xlane.xlu0 %847
      %v849 = vadd.f32 %v845, %v848
      %850 = vst.msk [vmem:[%s843] sm:$0xff] %vm435, %v849
      %v851 = vld [vmem:[#allocation4] sm:$0xff]
      %853 = vset.pattern.permute.xlu0 0
      %854 = vperm.xlu0 %853, %v834
      %v855 = vpop.permute.xlu0 %854
      %v857 = vmul.f32 %v855, %v851
      %v858 = vpack.c.bf16 %v842, %v842
      %859 = vrot.lane.b32.xlu0 %v357, 32
      %v860 = vpop.permute.xlu0 %859
      %v862 = vsel %vm413, %v858, 0
      %v865 = vsel %vm448, %v860, 0
      %867 = vmatprep.subr.bf16.mxu0 0
      %868 = vmatpush1.bf16.msra.mxu0 %v865
      %869 = vmatprep.subr.bf16.mxu0 0
      %870 = vmatpush1.bf16.msra.mxu0 0
      %871 = vmatprep.subr.bf16.mxu0 0
      %872 = vmatpush1.bf16.msra.mxu0 0
      %873 = vmatprep.subr.bf16.mxu0 0
      %874 = vmatpush1.bf16.msra.mxu0 0
      %875 = vmatprep.subr.bf16.mxu0 0
      %876 = vmatpush1.bf16.msra.mxu0 0
      %877 = vmatprep.subr.bf16.mxu0 0
      %878 = vmatpush1.bf16.msra.mxu0 0
      %879 = vmatprep.subr.bf16.mxu0 0
      %880 = vmatpush1.bf16.msra.mxu0 0
      %881 = vmatprep.subr.bf16.mxu0 0
      %882 = vmatpush1.bf16.msra.mxu0 0
      %883 = vmatprep.subr.bf16.mxu0 0
      %884 = vmatpush1.bf16.msra.mxu0 0
      %885 = vmatprep.subr.bf16.mxu0 0
      %886 = vmatpush1.bf16.msra.mxu0 0
      %887 = vmatprep.subr.bf16.mxu0 0
      %888 = vmatpush1.bf16.msra.mxu0 0
      %889 = vmatprep.subr.bf16.mxu0 0
      %890 = vmatpush1.bf16.msra.mxu0 0
      %891 = vmatprep.subr.bf16.mxu0 0
      %892 = vmatpush1.bf16.msra.mxu0 0
      %893 = vmatprep.subr.bf16.mxu0 0
      %894 = vmatpush1.bf16.msra.mxu0 0
      %895 = vmatprep.subr.bf16.mxu0 0
      %896 = vmatpush1.bf16.msra.mxu0 0
      %897 = vmatprep.subr.bf16.mxu0 0
      %898 = vmatpush1.bf16.msra.mxu0 0
      %899 = vmatprep.mubr.bf16.mxu0 0
      %900 = vmatmul.mubr.bf16.gmra.mrb[0].mxu0 %v862
      %v901 = vpop.f32.mrb[0].mxu0
      %v902 = vadd.f32 0.0, %v901
      %v903 = vpop.f32.mrb[0].mxu0
      %v904 = vpop.f32.mrb[0].mxu0
      %v905 = vpop.f32.mrb[0].mxu0
      %906 = vdwg.mxu0
      %908 = vrot.lane.b32.xlu0 %v902, 96
      %v909 = vpop.permute.xlu0 %908
      %v911 = vadd.f32 %v857, %v909
      %vm912 = vcmask 1048320
      %913 = vst.msk [vmem:[#allocation4] sm:$0xff] %vm912, %v911
      %914 = vst.msk [vmem:[%s826] sm:$0xff] %vm435, %v831
      // Predicated region
      $region41: #{encoder_forward.12} parent=35 // pred_check
        %p915 = pneg %p337
      $region42: #{encoder_forward.12} parent=35 // pred_check_branch
        %917 = sbr.rel (%p915) target = $region44
      $region43: #{encoder_forward.12} parent=35 // pred_region
        %v918 = vld [vmem:[#allocation4] sm:$0xff]
        %v919 = vld [vmem:[#allocation3] sm:$0xff]
        %v920 = vrcp.pop %v919
        %922 = vset.pattern.permute.xlu0 0
        %923 = vperm.xlu0 %922, %v920
        %v924 = vpop.permute.xlu0 %923
        %v926 = vmul.f32 %v918, %v924
        %927 = vst.msk [vmem:[#allocation4] sm:$0xff] %vm365, %v926
        %v928 = vld [vmem:[#allocation4] sm:$0xff]
        %v929 = vld [vmem:[%s564] sm:$0xff]
        %v930 = vrcp.pop %v929
        %932 = vset.pattern.permute.xlu0 0
        %933 = vperm.xlu0 %932, %v930
        %v934 = vpop.permute.xlu0 %933
        %v936 = vmul.f32 %v928, %v934
        %937 = vst.msk [vmem:[#allocation4] sm:$0xff] %vm634, %v936
        %v938 = vld [vmem:[#allocation4] sm:$0xff]
        %v939 = vld [vmem:[%s704] sm:$0xff]
        %v940 = vrcp.pop %v939
        %942 = vset.pattern.permute.xlu0 0
        %943 = vperm.xlu0 %942, %v940
        %v944 = vpop.permute.xlu0 %943
        %v946 = vmul.f32 %v938, %v944
        %947 = vst.msk [vmem:[#allocation4] sm:$0xff] %vm773, %v946
        %v948 = vld [vmem:[#allocation4] sm:$0xff]
        %v949 = vld [vmem:[%s843] sm:$0xff]
        %v950 = vrcp.pop %v949
        %952 = vset.pattern.permute.xlu0 0
        %953 = vperm.xlu0 %952, %v950
        %v954 = vpop.permute.xlu0 %953
        %v956 = vmul.f32 %v948, %v954
        %957 = vst.msk [vmem:[#allocation4] sm:$0xff] %vm912, %v956
        %v958 = vld [vmem:[#allocation4] sm:$0xff]
        %959 = vst [vmem:[%s335] sm:$0xff] %v958
      $region44: #{encoder_forward.12} parent=35 // pred_fallthru
        _
      %p960 = scmp.lt.s32.totalorder %s20, 1
      %s961 = scalar_select %p960, %s20, 1
      %p962 = scmp.lt.s32.totalorder %s21, 0
      %s963 = scalar_select %p962, %s21, 0
      %s964 = sadd.s32 %s963, %s961
      %s965 = smul.addr %s964, 8
      %s966 = scalar_lea.vmem %s4, %s965
      // Predicated region
      $region45: #{encoder_forward.12} parent=35 // pred_check
        %p967 = pneg %p166
      $region46: #{encoder_forward.12} parent=35 // pred_check_branch
        %969 = sbr.rel (%p967) target = $region48
      $region47: #{encoder_forward.12} parent=35 // pred_region
        _
      $region48: #{encoder_forward.12} parent=35 // pred_fallthru
        _
    $region36: #{encoder_forward.12} parent=5 // pred_fallthru
      _
    %p970 = scmp.le.s32.totalorder 2, %s10
    // Predicated region
    $region49: #{encoder_forward.12} parent=5 // pred_check
      %p971 = pneg %p970
    $region50: #{encoder_forward.12} parent=5 // pred_check_branch
      %973 = sbr.rel (%p971) target = $region52
    $region51: #{encoder_forward.12} parent=5 // pred_region
      %s974 = ssub.s32 %s10, 2
      // Predicated region
      $region53: #{encoder_forward.12} parent=51 // pred_check
        %p975 = pneg %p172
      $region54: #{encoder_forward.12} parent=51 // pred_check_branch
        %977 = sbr.rel (%p975) target = $region56
      $region55: #{encoder_forward.12} parent=51 // pred_region
        %p978 = scmp.lt.s32.totalorder %s23, 1
        %s979 = scalar_select %p978, %s23, 1
        %p980 = scmp.lt.s32.totalorder %s24, 0
        %s981 = scalar_select %p980, %s24, 0
        %s982 = sadd.s32 %s981, %s979
        %s983 = smul.addr %s982, 8
        %s984 = scalar_lea.vmem %s4, %s983
      $region56: #{encoder_forward.12} parent=51 // pred_fallthru
        _
    $region52: #{encoder_forward.12} parent=5 // pred_fallthru
      _
  $region6: #{encoder_forward.12} parent=0 // loop_footer
    %s14 = sadd.s32 1, %s10
  $region7: #{encoder_forward.12} parent=0 // loop_footer_branch
    %9 = sbr.rel target = $region3
  $region8: #{encoder_forward.12} parent=0 // loop_exit
    _

// kernel: encoder_forward.14
$region0: #{encoder_forward.14}
  #allocation0 [shape = 'u32[]', space=smem, size = 0x4, offset = 0x4, fixed_abs, tag = 'smem constant byte address 0x4 - core index']
  #allocation1 [shape = 'u32[144,128]{1,0:T(1,128)}', space=vmem, size = 0x12000, scoped, tag = 'internal scratch']
  %s0 = inlined_call_operand.vmem [shape: f32[16,128], index: 0, kind: input, shape index: {}]
  %s1 = inlined_call_operand.vmem [shape: f32[128,256], index: 1, kind: input, shape index: {}]
  %s2 = inlined_call_operand.vmem [shape: f32[1,256], index: 2, kind: input, shape index: {}]
  %s3 = inlined_call_operand.vmem [shape: f32[1,128], index: 3, kind: input, shape index: {}]
  %s4 = inlined_call_operand.vmem [shape: f32[1,128], index: 4, kind: input, shape index: {}]
  %s5 = inlined_call_operand.vmem [shape: f32[16,256], index: 5, kind: output, shape index: {}]
  %s6 = sld [smem:[#allocation0]]
  $region30: #{encoder_forward.14} parent=0
    _
  %s8 = ssub.s32 1, %s6
  %s9 = scalar_select 0, %s8, %s6
  // Predicated region
  $region2: #{encoder_forward.14} parent=0 // pred_check
    _
  $region3: #{encoder_forward.14} parent=0 // pred_check_branch
    %11 = sbr.rel (0) target = $region5
  $region4: #{encoder_forward.14} parent=0 // pred_region
    _
  $region5: #{encoder_forward.14} parent=0 // pred_fallthru
    _
  // Predicated region
  $region6: #{encoder_forward.14} parent=0 // pred_check
    _
  $region7: #{encoder_forward.14} parent=0 // pred_check_branch
    %13 = sbr.rel (0) target = $region9
  $region8: #{encoder_forward.14} parent=0 // pred_region
    _
  $region9: #{encoder_forward.14} parent=0 // pred_fallthru
    _
  // Predicated region
  $region10: #{encoder_forward.14} parent=0 // pred_check
    _
  $region11: #{encoder_forward.14} parent=0 // pred_check_branch
    %15 = sbr.rel (0) target = $region13
  $region12: #{encoder_forward.14} parent=0 // pred_region
    _
  $region13: #{encoder_forward.14} parent=0 // pred_fallthru
    _
  // Predicated region
  $region14: #{encoder_forward.14} parent=0 // pred_check
    _
  $region15: #{encoder_forward.14} parent=0 // pred_check_branch
    %17 = sbr.rel (0) target = $region17
  $region16: #{encoder_forward.14} parent=0 // pred_region
    _
  $region17: #{encoder_forward.14} parent=0 // pred_fallthru
    _
  // Predicated region
  $region18: #{encoder_forward.14} parent=0 // pred_check
    _
  $region19: #{encoder_forward.14} parent=0 // pred_check_branch
    %19 = sbr.rel (0) target = $region21
  $region20: #{encoder_forward.14} parent=0 // pred_region
    _
  $region21: #{encoder_forward.14} parent=0 // pred_fallthru
    _
  %v21 = vld [vmem:[%s0] sm:$0xff]
  %v22 = vld [vmem:[%s0 + $0x8] sm:$0xff]
  %23 = vadd.xlane.f32.xlu0 %v21
  %v24 = vpop.xlane.xlu0 %23
  %25 = vadd.xlane.f32.xlu0 %v22
  %v26 = vpop.xlane.xlu0 %25
  %v27 = vrcp.pop 128.0
  %v28 = vmul.f32 %v24, %v27
  %v29 = vmul.f32 %v26, %v27
  %v30 = vsub.f32 %v21, %v28
  %v31 = vsub.f32 %v22, %v29
  %v32 = vmul.f32 %v30, %v30
  %v33 = vmul.f32 %v31, %v31
  %34 = vadd.xlane.f32.xlu0 %v32
  %v35 = vpop.xlane.xlu0 %34
  %36 = vadd.xlane.f32.xlu0 %v33
  %v37 = vpop.xlane.xlu0 %36
  %v38 = vmul.f32 %v35, 0.007874016
  %v39 = vmul.f32 %v37, 0.007874016
  %v40 = vrsqrt.pop %v38
  %v41 = vmul.f32 %v38, %v40
  %vm42 = vcmp.eq.f32.partialorder %v38, inf
  %v43 = vsel %vm42, %v38, %v41
  %vm44 = vcmp.eq.f32.partialorder %v38, 0.0
  %v45 = vand.u32 %v38, 2147483648
  %v46 = vsel %vm44, %v45, %v43
  %v47 = vrsqrt.pop %v39
  %v48 = vmul.f32 %v39, %v47
  %vm49 = vcmp.eq.f32.partialorder %v39, inf
  %v50 = vsel %vm49, %v39, %v48
  %vm51 = vcmp.eq.f32.partialorder %v39, 0.0
  %v52 = vand.u32 %v39, 2147483648
  %v53 = vsel %vm51, %v52, %v50
  %v54 = vadd.f32 %v46, 1e-06
  %v55 = vadd.f32 %v53, 1e-06
  %v56 = vrcp.pop %v54
  %v57 = vrcp.pop %v55
  %v58 = vld [vmem:[%s3] sm:$0x1]
  %v60 = vlaneseq
  %v61 = vshrl.u32 %v60, 7
  %v62 = vsub.s32 0, %v61
  %v63 = vrot.slane %v58, %v62
  %v65 = vmul.f32 %v63, %v56
  %v66 = vmul.f32 %v63, %v57
  %v67 = vmul.f32 %v30, %v65
  %v68 = vmul.f32 %v31, %v66
  %v69 = vld [vmem:[%s4] sm:$0x1]
  %v71 = vlaneseq
  %v72 = vshrl.u32 %v71, 7
  %v73 = vsub.s32 0, %v72
  %v74 = vrot.slane %v69, %v73
  %v76 = vadd.f32 %v67, %v74
  %v77 = vadd.f32 %v68, %v74
  %v78 = vpack.c.bf16 %v77, %v76
  %v79 = vld [vmem:[%s1] sm:$0xff]
  %v80 = vld [vmem:[%s1 + $0x8] sm:$0xff]
  %v81 = vld [vmem:[%s1 + $0x10] sm:$0xff]
  %v82 = vld [vmem:[%s1 + $0x18] sm:$0xff]
  %v83 = vld [vmem:[%s1 + $0x20] sm:$0xff]
  %v84 = vld [vmem:[%s1 + $0x28] sm:$0xff]
  %v85 = vld [vmem:[%s1 + $0x30] sm:$0xff]
  %v86 = vld [vmem:[%s1 + $0x38] sm:$0xff]
  %v87 = vld [vmem:[%s1 + $0x40] sm:$0xff]
  %v88 = vld [vmem:[%s1 + $0x48] sm:$0xff]
  %v89 = vld [vmem:[%s1 + $0x50] sm:$0xff]
  %v90 = vld [vmem:[%s1 + $0x58] sm:$0xff]
  %v91 = vld [vmem:[%s1 + $0x60] sm:$0xff]
  %v92 = vld [vmem:[%s1 + $0x68] sm:$0xff]
  %v93 = vld [vmem:[%s1 + $0x70] sm:$0xff]
  %v94 = vld [vmem:[%s1 + $0x78] sm:$0xff]
  %v95 = vld [vmem:[%s1 + $0x80] sm:$0xff]
  %v96 = vld [vmem:[%s1 + $0x88] sm:$0xff]
  %v97 = vld [vmem:[%s1 + $0x90] sm:$0xff]
  %v98 = vld [vmem:[%s1 + $0x98] sm:$0xff]
  %v99 = vld [vmem:[%s1 + $0xa0] sm:$0xff]
  %v100 = vld [vmem:[%s1 + $0xa8] sm:$0xff]
  %v101 = vld [vmem:[%s1 + $0xb0] sm:$0xff]
  %v102 = vld [vmem:[%s1 + $0xb8] sm:$0xff]
  %v103 = vld [vmem:[%s1 + $0xc0] sm:$0xff]
  %v104 = vld [vmem:[%s1 + $0xc8] sm:$0xff]
  %v105 = vld [vmem:[%s1 + $0xd0] sm:$0xff]
  %v106 = vld [vmem:[%s1 + $0xd8] sm:$0xff]
  %v107 = vld [vmem:[%s1 + $0xe0] sm:$0xff]
  %v108 = vld [vmem:[%s1 + $0xe8] sm:$0xff]
  %v109 = vld [vmem:[%s1 + $0xf0] sm:$0xff]
  %v110 = vld [vmem:[%s1 + $0xf8] sm:$0xff]
  %v111 = vpack.c.bf16 %v81, %v79
  %v112 = vpack.c.bf16 %v82, %v80
  %v113 = vpack.c.bf16 %v85, %v83
  %v114 = vpack.c.bf16 %v86, %v84
  %v115 = vpack.c.bf16 %v89, %v87
  %v116 = vpack.c.bf16 %v90, %v88
  %v117 = vpack.c.bf16 %v93, %v91
  %v118 = vpack.c.bf16 %v94, %v92
  %v119 = vpack.c.bf16 %v97, %v95
  %v120 = vpack.c.bf16 %v98, %v96
  %v121 = vpack.c.bf16 %v101, %v99
  %v122 = vpack.c.bf16 %v102, %v100
  %v123 = vpack.c.bf16 %v105, %v103
  %v124 = vpack.c.bf16 %v106, %v104
  %v125 = vpack.c.bf16 %v109, %v107
  %v126 = vpack.c.bf16 %v110, %v108
  %v127 = vld [vmem:[%s2] sm:$0x3]
  %v129 = vlaneseq
  %v130 = vshrl.u32 %v129, 7
  %v131 = vsub.s32 0, %v130
  %v132 = vrot.slane %v127, %v131
  %v133 = vlaneseq
  %v134 = vshrl.u32 %v133, 7
  %v135 = vsub.s32 1, %v134
  %v136 = vrot.slane %v127, %v135
  %139 = vmatprep.subr.bf16.mxu0 %v112
  %140 = vmatpush1.bf16.msra.mxu0 %v111
  %141 = vmatprep.subr.bf16.mxu0 %v114
  %142 = vmatpush1.bf16.msra.mxu0 %v113
  %143 = vmatprep.subr.bf16.mxu0 %v116
  %144 = vmatpush1.bf16.msra.mxu0 %v115
  %145 = vmatprep.subr.bf16.mxu0 %v118
  %146 = vmatpush1.bf16.msra.mxu0 %v117
  %147 = vmatprep.subr.bf16.mxu0 %v120
  %148 = vmatpush1.bf16.msra.mxu0 %v119
  %149 = vmatprep.subr.bf16.mxu0 %v122
  %150 = vmatpush1.bf16.msra.mxu0 %v121
  %151 = vmatprep.subr.bf16.mxu0 %v124
  %152 = vmatpush1.bf16.msra.mxu0 %v123
  %153 = vmatprep.subr.bf16.mxu0 %v126
  %154 = vmatpush1.bf16.msra.mxu0 %v125
  %155 = vmatprep.subr.bf16.mxu0 0
  %156 = vmatpush1.bf16.msra.mxu0 0
  %157 = vmatprep.subr.bf16.mxu0 0
  %158 = vmatpush1.bf16.msra.mxu0 0
  %159 = vmatprep.subr.bf16.mxu0 0
  %160 = vmatpush1.bf16.msra.mxu0 0
  %161 = vmatprep.subr.bf16.mxu0 0
  %162 = vmatpush1.bf16.msra.mxu0 0
  %163 = vmatprep.subr.bf16.mxu0 0
  %164 = vmatpush1.bf16.msra.mxu0 0
  %165 = vmatprep.subr.bf16.mxu0 0
  %166 = vmatpush1.bf16.msra.mxu0 0
  %167 = vmatprep.subr.bf16.mxu0 0
  %168 = vmatpush1.bf16.msra.mxu0 0
  %169 = vmatprep.subr.bf16.mxu0 0
  %170 = vmatpush1.bf16.msra.mxu0 0
  %171 = vmatprep.mubr.bf16.mxu0 0
  %172 = vmatmul.mubr.bf16.gmra.mrb[0].mxu0 %v78
  %v173 = vpop.f32.mrb[0].mxu0
  %v174 = vadd.f32 %v132, %v173
  %v175 = vpop.f32.mrb[0].mxu0
  %v176 = vadd.f32 %v136, %v175
  %v177 = vpop.f32.mrb[0].mxu0
  %v178 = vadd.f32 %v132, %v177
  %v179 = vpop.f32.mrb[0].mxu0
  %v180 = vadd.f32 %v136, %v179
  %181 = vdwg.mxu0
  %v182 = vmax.f32 %v174, 0.0
  %v183 = vmax.f32 %v176, 0.0
  %v184 = vmax.f32 %v178, 0.0
  %v185 = vmax.f32 %v180, 0.0
  %186 = vst [vmem:[%s5] sm:$0xff] %v182
  %187 = vst [vmem:[%s5 + $0x8] sm:$0xff] %v183
  %188 = vst [vmem:[%s5 + $0x10] sm:$0xff] %v184
  %189 = vst [vmem:[%s5 + $0x18] sm:$0xff] %v185
  // Predicated region
  $region22: #{encoder_forward.14} parent=0 // pred_check
    _
  $region23: #{encoder_forward.14} parent=0 // pred_check_branch
    %191 = sbr.rel (0) target = $region25
  $region24: #{encoder_forward.14} parent=0 // pred_region
    _
  $region25: #{encoder_forward.14} parent=0 // pred_fallthru
    _
  // Predicated region
  $region26: #{encoder_forward.14} parent=0 // pred_check
    _
  $region27: #{encoder_forward.14} parent=0 // pred_check_branch
    %193 = sbr.rel (0) target = $region29
  $region28: #{encoder_forward.14} parent=0 // pred_region
    _
  $region29: #{encoder_forward.14} parent=0 // pred_fallthru
    _

// kernel: encoder_forward.15
$region0: #{encoder_forward.15}
  #allocation0 [shape = 'u32[]', space=smem, size = 0x4, offset = 0x4, fixed_abs, tag = 'smem constant byte address 0x4 - core index']
  #allocation1 [shape = 'u32[144,128]{1,0:T(1,128)}', space=vmem, size = 0x12000, scoped, tag = 'internal scratch']
  %s0 = inlined_call_operand.vmem [shape: f32[16,256], index: 0, kind: input, shape index: {}]
  %s1 = inlined_call_operand.vmem [shape: f32[256,128], index: 1, kind: input, shape index: {}]
  %s2 = inlined_call_operand.vmem [shape: f32[1,128], index: 2, kind: input, shape index: {}]
  %s3 = inlined_call_operand.vmem [shape: f32[16,128], index: 3, kind: input, shape index: {}]
  %s4 = inlined_call_operand.vmem [shape: f32[16,128], index: 4, kind: output, shape index: {}]
  %s5 = sld [smem:[#allocation0]]
  $region26: #{encoder_forward.15} parent=0
    _
  %s7 = ssub.s32 1, %s5
  %s8 = scalar_select 0, %s7, %s5
  // Predicated region
  $region2: #{encoder_forward.15} parent=0 // pred_check
    _
  $region3: #{encoder_forward.15} parent=0 // pred_check_branch
    %10 = sbr.rel (0) target = $region5
  $region4: #{encoder_forward.15} parent=0 // pred_region
    _
  $region5: #{encoder_forward.15} parent=0 // pred_fallthru
    _
  // Predicated region
  $region6: #{encoder_forward.15} parent=0 // pred_check
    _
  $region7: #{encoder_forward.15} parent=0 // pred_check_branch
    %12 = sbr.rel (0) target = $region9
  $region8: #{encoder_forward.15} parent=0 // pred_region
    _
  $region9: #{encoder_forward.15} parent=0 // pred_fallthru
    _
  // Predicated region
  $region10: #{encoder_forward.15} parent=0 // pred_check
    _
  $region11: #{encoder_forward.15} parent=0 // pred_check_branch
    %14 = sbr.rel (0) target = $region13
  $region12: #{encoder_forward.15} parent=0 // pred_region
    _
  $region13: #{encoder_forward.15} parent=0 // pred_fallthru
    _
  // Predicated region
  $region14: #{encoder_forward.15} parent=0 // pred_check
    _
  $region15: #{encoder_forward.15} parent=0 // pred_check_branch
    %16 = sbr.rel (0) target = $region17
  $region16: #{encoder_forward.15} parent=0 // pred_region
    _
  $region17: #{encoder_forward.15} parent=0 // pred_fallthru
    _
  %v18 = vld [vmem:[%s0] sm:$0xff]
  %v19 = vld [vmem:[%s0 + $0x8] sm:$0xff]
  %v20 = vld [vmem:[%s0 + $0x10] sm:$0xff]
  %v21 = vld [vmem:[%s0 + $0x18] sm:$0xff]
  %v22 = vpack.c.bf16 %v20, %v18
  %v23 = vpack.c.bf16 %v21, %v19
  %v24 = vld [vmem:[%s1] sm:$0xff]
  %v25 = vld [vmem:[%s1 + $0x8] sm:$0xff]
  %v26 = vld [vmem:[%s1 + $0x10] sm:$0xff]
  %v27 = vld [vmem:[%s1 + $0x18] sm:$0xff]
  %v28 = vld [vmem:[%s1 + $0x20] sm:$0xff]
  %v29 = vld [vmem:[%s1 + $0x28] sm:$0xff]
  %v30 = vld [vmem:[%s1 + $0x30] sm:$0xff]
  %v31 = vld [vmem:[%s1 + $0x38] sm:$0xff]
  %v32 = vld [vmem:[%s1 + $0x40] sm:$0xff]
  %v33 = vld [vmem:[%s1 + $0x48] sm:$0xff]
  %v34 = vld [vmem:[%s1 + $0x50] sm:$0xff]
  %v35 = vld [vmem:[%s1 + $0x58] sm:$0xff]
  %v36 = vld [vmem:[%s1 + $0x60] sm:$0xff]
  %v37 = vld [vmem:[%s1 + $0x68] sm:$0xff]
  %v38 = vld [vmem:[%s1 + $0x70] sm:$0xff]
  %v39 = vld [vmem:[%s1 + $0x78] sm:$0xff]
  %v40 = vld [vmem:[%s1 + $0x80] sm:$0xff]
  %v41 = vld [vmem:[%s1 + $0x88] sm:$0xff]
  %v42 = vld [vmem:[%s1 + $0x90] sm:$0xff]
  %v43 = vld [vmem:[%s1 + $0x98] sm:$0xff]
  %v44 = vld [vmem:[%s1 + $0xa0] sm:$0xff]
  %v45 = vld [vmem:[%s1 + $0xa8] sm:$0xff]
  %v46 = vld [vmem:[%s1 + $0xb0] sm:$0xff]
  %v47 = vld [vmem:[%s1 + $0xb8] sm:$0xff]
  %v48 = vld [vmem:[%s1 + $0xc0] sm:$0xff]
  %v49 = vld [vmem:[%s1 + $0xc8] sm:$0xff]
  %v50 = vld [vmem:[%s1 + $0xd0] sm:$0xff]
  %v51 = vld [vmem:[%s1 + $0xd8] sm:$0xff]
  %v52 = vld [vmem:[%s1 + $0xe0] sm:$0xff]
  %v53 = vld [vmem:[%s1 + $0xe8] sm:$0xff]
  %v54 = vld [vmem:[%s1 + $0xf0] sm:$0xff]
  %v55 = vld [vmem:[%s1 + $0xf8] sm:$0xff]
  %v56 = vpack.c.bf16 %v25, %v24
  %v57 = vpack.c.bf16 %v27, %v26
  %v58 = vpack.c.bf16 %v29, %v28
  %v59 = vpack.c.bf16 %v31, %v30
  %v60 = vpack.c.bf16 %v33, %v32
  %v61 = vpack.c.bf16 %v35, %v34
  %v62 = vpack.c.bf16 %v37, %v36
  %v63 = vpack.c.bf16 %v39, %v38
  %v64 = vpack.c.bf16 %v41, %v40
  %v65 = vpack.c.bf16 %v43, %v42
  %v66 = vpack.c.bf16 %v45, %v44
  %v67 = vpack.c.bf16 %v47, %v46
  %v68 = vpack.c.bf16 %v49, %v48
  %v69 = vpack.c.bf16 %v51, %v50
  %v70 = vpack.c.bf16 %v53, %v52
  %v71 = vpack.c.bf16 %v55, %v54
  %v72 = vld [vmem:[%s2] sm:$0x1]
  %v74 = vlaneseq
  %v75 = vshrl.u32 %v74, 7
  %v76 = vsub.s32 0, %v75
  %v77 = vrot.slane %v72, %v76
  %79 = vmatprep.subr.bf16.mxu0 0
  %80 = vmatpush1.bf16.msra.mxu0 %v56
  %81 = vmatprep.subr.bf16.mxu0 0
  %82 = vmatpush1.bf16.msra.mxu0 %v57
  %83 = vmatprep.subr.bf16.mxu0 0
  %84 = vmatpush1.bf16.msra.mxu0 %v58
  %85 = vmatprep.subr.bf16.mxu0 0
  %86 = vmatpush1.bf16.msra.mxu0 %v59
  %87 = vmatprep.subr.bf16.mxu0 0
  %88 = vmatpush1.bf16.msra.mxu0 %v60
  %89 = vmatprep.subr.bf16.mxu0 0
  %90 = vmatpush1.bf16.msra.mxu0 %v61
  %91 = vmatprep.subr.bf16.mxu0 0
  %92 = vmatpush1.bf16.msra.mxu0 %v62
  %93 = vmatprep.subr.bf16.mxu0 0
  %94 = vmatpush1.bf16.msra.mxu0 %v63
  %95 = vmatprep.subr.bf16.mxu0 0
  %96 = vmatpush1.bf16.msra.mxu0 %v64
  %97 = vmatprep.subr.bf16.mxu0 0
  %98 = vmatpush1.bf16.msra.mxu0 %v65
  %99 = vmatprep.subr.bf16.mxu0 0
  %100 = vmatpush1.bf16.msra.mxu0 %v66
  %101 = vmatprep.subr.bf16.mxu0 0
  %102 = vmatpush1.bf16.msra.mxu0 %v67
  %103 = vmatprep.subr.bf16.mxu0 0
  %104 = vmatpush1.bf16.msra.mxu0 %v68
  %105 = vmatprep.subr.bf16.mxu0 0
  %106 = vmatpush1.bf16.msra.mxu0 %v69
  %107 = vmatprep.subr.bf16.mxu0 0
  %108 = vmatpush1.bf16.msra.mxu0 %v70
  %109 = vmatprep.subr.bf16.mxu0 0
  %110 = vmatpush1.bf16.msra.mxu0 %v71
  %111 = vmatprep.mubr.bf16.mxu0 %v23
  %112 = vmatmul.mubr.bf16.gmra.mrb[0].mxu0 %v22
  %v113 = vpop.f32.mrb[0].mxu0
  %v114 = vadd.f32 %v77, %v113
  %v115 = vpop.f32.mrb[0].mxu0
  %v116 = vpop.f32.mrb[0].mxu0
  %v117 = vadd.f32 %v77, %v116
  %v118 = vpop.f32.mrb[0].mxu0
  %119 = vdwg.mxu0
  %v120 = vld [vmem:[%s3] sm:$0xff]
  %v121 = vld [vmem:[%s3 + $0x8] sm:$0xff]
  %v122 = vadd.f32 %v114, %v120
  %v123 = vadd.f32 %v117, %v121
  %124 = vst [vmem:[%s4] sm:$0xff] %v122
  %125 = vst [vmem:[%s4 + $0x8] sm:$0xff] %v123
  // Predicated region
  $region18: #{encoder_forward.15} parent=0 // pred_check
    _
  $region19: #{encoder_forward.15} parent=0 // pred_check_branch
    %127 = sbr.rel (0) target = $region21
  $region20: #{encoder_forward.15} parent=0 // pred_region
    _
  $region21: #{encoder_forward.15} parent=0 // pred_fallthru
    _
  // Predicated region
  $region22: #{encoder_forward.15} parent=0 // pred_check
    _
  $region23: #{encoder_forward.15} parent=0 // pred_check_branch
    %129 = sbr.rel (0) target = $region25
  $region24: #{encoder_forward.15} parent=0 // pred_region
    _
  $region25: #{encoder_forward.15} parent=0 // pred_fallthru
    _

// kernel: encoder_forward.16
$region0: #{encoder_forward.16}
  #allocation0 [shape = 'u32[]', space=smem, size = 0x4, offset = 0x4, fixed_abs, tag = 'smem constant byte address 0x4 - core index']
  #allocation1 [shape = 'u32[144,128]{1,0:T(1,128)}', space=vmem, size = 0x12000, scoped, tag = 'internal scratch']
  %s0 = inlined_call_operand.vmem [shape: f32[16,128], index: 0, kind: input, shape index: {}]
  %s1 = inlined_call_operand.vmem [shape: f32[128,384], index: 1, kind: input, shape index: {}]
  %s2 = inlined_call_operand.vmem [shape: f32[1,384], index: 2, kind: input, shape index: {}]
  %s3 = inlined_call_operand.vmem [shape: f32[1,128], index: 3, kind: input, shape index: {}]
  %s4 = inlined_call_operand.vmem [shape: f32[1,128], index: 4, kind: input, shape index: {}]
  %s5 = inlined_call_operand.vmem [shape: f32[16,384], index: 5, kind: output, shape index: {}]
  %s6 = sld [smem:[#allocation0]]
  $region30: #{encoder_forward.16} parent=0
    _
  %s8 = ssub.s32 1, %s6
  %s9 = scalar_select 0, %s8, %s6
  // Predicated region
  $region2: #{encoder_forward.16} parent=0 // pred_check
    _
  $region3: #{encoder_forward.16} parent=0 // pred_check_branch
    %11 = sbr.rel (0) target = $region5
  $region4: #{encoder_forward.16} parent=0 // pred_region
    _
  $region5: #{encoder_forward.16} parent=0 // pred_fallthru
    _
  // Predicated region
  $region6: #{encoder_forward.16} parent=0 // pred_check
    _
  $region7: #{encoder_forward.16} parent=0 // pred_check_branch
    %13 = sbr.rel (0) target = $region9
  $region8: #{encoder_forward.16} parent=0 // pred_region
    _
  $region9: #{encoder_forward.16} parent=0 // pred_fallthru
    _
  // Predicated region
  $region10: #{encoder_forward.16} parent=0 // pred_check
    _
  $region11: #{encoder_forward.16} parent=0 // pred_check_branch
    %15 = sbr.rel (0) target = $region13
  $region12: #{encoder_forward.16} parent=0 // pred_region
    _
  $region13: #{encoder_forward.16} parent=0 // pred_fallthru
    _
  // Predicated region
  $region14: #{encoder_forward.16} parent=0 // pred_check
    _
  $region15: #{encoder_forward.16} parent=0 // pred_check_branch
    %17 = sbr.rel (0) target = $region17
  $region16: #{encoder_forward.16} parent=0 // pred_region
    _
  $region17: #{encoder_forward.16} parent=0 // pred_fallthru
    _
  // Predicated region
  $region18: #{encoder_forward.16} parent=0 // pred_check
    _
  $region19: #{encoder_forward.16} parent=0 // pred_check_branch
    %19 = sbr.rel (0) target = $region21
  $region20: #{encoder_forward.16} parent=0 // pred_region
    _
  $region21: #{encoder_forward.16} parent=0 // pred_fallthru
    _
  %v21 = vld [vmem:[%s0] sm:$0xff]
  %v22 = vld [vmem:[%s0 + $0x8] sm:$0xff]
  %23 = vadd.xlane.f32.xlu0 %v21
  %v24 = vpop.xlane.xlu0 %23
  %25 = vadd.xlane.f32.xlu0 %v22
  %v26 = vpop.xlane.xlu0 %25
  %v27 = vrcp.pop 128.0
  %v28 = vmul.f32 %v24, %v27
  %v29 = vmul.f32 %v26, %v27
  %v30 = vsub.f32 %v21, %v28
  %v31 = vsub.f32 %v22, %v29
  %v32 = vmul.f32 %v30, %v30
  %v33 = vmul.f32 %v31, %v31
  %34 = vadd.xlane.f32.xlu0 %v32
  %v35 = vpop.xlane.xlu0 %34
  %36 = vadd.xlane.f32.xlu0 %v33
  %v37 = vpop.xlane.xlu0 %36
  %v38 = vmul.f32 %v35, 0.007874016
  %v39 = vmul.f32 %v37, 0.007874016
  %v40 = vrsqrt.pop %v38
  %v41 = vmul.f32 %v38, %v40
  %vm42 = vcmp.eq.f32.partialorder %v38, inf
  %v43 = vsel %vm42, %v38, %v41
  %vm44 = vcmp.eq.f32.partialorder %v38, 0.0
  %v45 = vand.u32 %v38, 2147483648
  %v46 = vsel %vm44, %v45, %v43
  %v47 = vrsqrt.pop %v39
  %v48 = vmul.f32 %v39, %v47
  %vm49 = vcmp.eq.f32.partialorder %v39, inf
  %v50 = vsel %vm49, %v39, %v48
  %vm51 = vcmp.eq.f32.partialorder %v39, 0.0
  %v52 = vand.u32 %v39, 2147483648
  %v53 = vsel %vm51, %v52, %v50
  %v54 = vadd.f32 %v46, 1e-06
  %v55 = vadd.f32 %v53, 1e-06
  %v56 = vrcp.pop %v54
  %v57 = vrcp.pop %v55
  %v58 = vld [vmem:[%s3] sm:$0x1]
  %v60 = vlaneseq
  %v61 = vshrl.u32 %v60, 7
  %v62 = vsub.s32 0, %v61
  %v63 = vrot.slane %v58, %v62
  %v65 = vmul.f32 %v63, %v56
  %v66 = vmul.f32 %v63, %v57
  %v67 = vmul.f32 %v30, %v65
  %v68 = vmul.f32 %v31, %v66
  %v69 = vld [vmem:[%s4] sm:$0x1]
  %v71 = vlaneseq
  %v72 = vshrl.u32 %v71, 7
  %v73 = vsub.s32 0, %v72
  %v74 = vrot.slane %v69, %v73
  %v76 = vadd.f32 %v67, %v74
  %v77 = vadd.f32 %v68, %v74
  %v78 = vpack.c.bf16 %v77, %v76
  %v79 = vld [vmem:[%s1] sm:$0xff]
  %v80 = vld [vmem:[%s1 + $0x8] sm:$0xff]
  %v81 = vld [vmem:[%s1 + $0x10] sm:$0xff]
  %v82 = vld [vmem:[%s1 + $0x18] sm:$0xff]
  %v83 = vld [vmem:[%s1 + $0x20] sm:$0xff]
  %v84 = vld [vmem:[%s1 + $0x28] sm:$0xff]
  %v85 = vld [vmem:[%s1 + $0x30] sm:$0xff]
  %v86 = vld [vmem:[%s1 + $0x38] sm:$0xff]
  %v87 = vld [vmem:[%s1 + $0x40] sm:$0xff]
  %v88 = vld [vmem:[%s1 + $0x48] sm:$0xff]
  %v89 = vld [vmem:[%s1 + $0x50] sm:$0xff]
  %v90 = vld [vmem:[%s1 + $0x58] sm:$0xff]
  %v91 = vld [vmem:[%s1 + $0x60] sm:$0xff]
  %v92 = vld [vmem:[%s1 + $0x68] sm:$0xff]
  %v93 = vld [vmem:[%s1 + $0x70] sm:$0xff]
  %v94 = vld [vmem:[%s1 + $0x78] sm:$0xff]
  %v95 = vld [vmem:[%s1 + $0x80] sm:$0xff]
  %v96 = vld [vmem:[%s1 + $0x88] sm:$0xff]
  %v97 = vld [vmem:[%s1 + $0x90] sm:$0xff]
  %v98 = vld [vmem:[%s1 + $0x98] sm:$0xff]
  %v99 = vld [vmem:[%s1 + $0xa0] sm:$0xff]
  %v100 = vld [vmem:[%s1 + $0xa8] sm:$0xff]
  %v101 = vld [vmem:[%s1 + $0xb0] sm:$0xff]
  %v102 = vld [vmem:[%s1 + $0xb8] sm:$0xff]
  %v103 = vld [vmem:[%s1 + $0xc0] sm:$0xff]
  %v104 = vld [vmem:[%s1 + $0xc8] sm:$0xff]
  %v105 = vld [vmem:[%s1 + $0xd0] sm:$0xff]
  %v106 = vld [vmem:[%s1 + $0xd8] sm:$0xff]
  %v107 = vld [vmem:[%s1 + $0xe0] sm:$0xff]
  %v108 = vld [vmem:[%s1 + $0xe8] sm:$0xff]
  %v109 = vld [vmem:[%s1 + $0xf0] sm:$0xff]
  %v110 = vld [vmem:[%s1 + $0xf8] sm:$0xff]
  %v111 = vld [vmem:[%s1 + $0x100] sm:$0xff]
  %v112 = vld [vmem:[%s1 + $0x108] sm:$0xff]
  %v113 = vld [vmem:[%s1 + $0x110] sm:$0xff]
  %v114 = vld [vmem:[%s1 + $0x118] sm:$0xff]
  %v115 = vld [vmem:[%s1 + $0x120] sm:$0xff]
  %v116 = vld [vmem:[%s1 + $0x128] sm:$0xff]
  %v117 = vld [vmem:[%s1 + $0x130] sm:$0xff]
  %v118 = vld [vmem:[%s1 + $0x138] sm:$0xff]
  %v119 = vld [vmem:[%s1 + $0x140] sm:$0xff]
  %v120 = vld [vmem:[%s1 + $0x148] sm:$0xff]
  %v121 = vld [vmem:[%s1 + $0x150] sm:$0xff]
  %v122 = vld [vmem:[%s1 + $0x158] sm:$0xff]
  %v123 = vld [vmem:[%s1 + $0x160] sm:$0xff]
  %v124 = vld [vmem:[%s1 + $0x168] sm:$0xff]
  %v125 = vld [vmem:[%s1 + $0x170] sm:$0xff]
  %v126 = vld [vmem:[%s1 + $0x178] sm:$0xff]
  %v127 = vpack.c.bf16 %v82, %v79
  %v128 = vpack.c.bf16 %v83, %v80
  %v129 = vpack.c.bf16 %v84, %v81
  %v130 = vpack.c.bf16 %v88, %v85
  %v131 = vpack.c.bf16 %v89, %v86
  %v132 = vpack.c.bf16 %v90, %v87
  %v133 = vpack.c.bf16 %v94, %v91
  %v134 = vpack.c.bf16 %v95, %v92
  %v135 = vpack.c.bf16 %v96, %v93
  %v136 = vpack.c.bf16 %v100, %v97
  %v137 = vpack.c.bf16 %v101, %v98
  %v138 = vpack.c.bf16 %v102, %v99
  %v139 = vpack.c.bf16 %v106, %v103
  %v140 = vpack.c.bf16 %v107, %v104
  %v141 = vpack.c.bf16 %v108, %v105
  %v142 = vpack.c.bf16 %v112, %v109
  %v143 = vpack.c.bf16 %v113, %v110
  %v144 = vpack.c.bf16 %v114, %v111
  %v145 = vpack.c.bf16 %v118, %v115
  %v146 = vpack.c.bf16 %v119, %v116
  %v147 = vpack.c.bf16 %v120, %v117
  %v148 = vpack.c.bf16 %v124, %v121
  %v149 = vpack.c.bf16 %v125, %v122
  %v150 = vpack.c.bf16 %v126, %v123
  %v151 = vld [vmem:[%s2] sm:$0x7]
  %v153 = vlaneseq
  %v154 = vshrl.u32 %v153, 7
  %v155 = vsub.s32 0, %v154
  %v156 = vrot.slane %v151, %v155
  %v157 = vlaneseq
  %v158 = vshrl.u32 %v157, 7
  %v159 = vsub.s32 1, %v158
  %v160 = vrot.slane %v151, %v159
  %v161 = vlaneseq
  %v162 = vshrl.u32 %v161, 7
  %v163 = vsub.s32 2, %v162
  %v164 = vrot.slane %v151, %v163
  %168 = vmatprep.subr.bf16.mxu0 %v128
  %169 = vmatpush1.bf16.msra.mxu0 %v127
  %170 = vmatprep.subr.bf16.mxu0 %v131
  %171 = vmatpush1.bf16.msra.mxu0 %v130
  %172 = vmatprep.subr.bf16.mxu0 %v134
  %173 = vmatpush1.bf16.msra.mxu0 %v133
  %174 = vmatprep.subr.bf16.mxu0 %v137
  %175 = vmatpush1.bf16.msra.mxu0 %v136
  %176 = vmatprep.subr.bf16.mxu0 %v140
  %177 = vmatpush1.bf16.msra.mxu0 %v139
  %178 = vmatprep.subr.bf16.mxu0 %v143
  %179 = vmatpush1.bf16.msra.mxu0 %v142
  %180 = vmatprep.subr.bf16.mxu0 %v146
  %181 = vmatpush1.bf16.msra.mxu0 %v145
  %182 = vmatprep.subr.bf16.mxu0 %v149
  %183 = vmatpush1.bf16.msra.mxu0 %v148
  %184 = vmatprep.subr.bf16.mxu0 0
  %185 = vmatpush1.bf16.msra.mxu0 0
  %186 = vmatprep.subr.bf16.mxu0 0
  %187 = vmatpush1.bf16.msra.mxu0 0
  %188 = vmatprep.subr.bf16.mxu0 0
  %189 = vmatpush1.bf16.msra.mxu0 0
  %190 = vmatprep.subr.bf16.mxu0 0
  %191 = vmatpush1.bf16.msra.mxu0 0
  %192 = vmatprep.subr.bf16.mxu0 0
  %193 = vmatpush1.bf16.msra.mxu0 0
  %194 = vmatprep.subr.bf16.mxu0 0
  %195 = vmatpush1.bf16.msra.mxu0 0
  %196 = vmatprep.subr.bf16.mxu0 0
  %197 = vmatpush1.bf16.msra.mxu0 0
  %198 = vmatprep.subr.bf16.mxu0 0
  %199 = vmatpush1.bf16.msra.mxu0 0
  %200 = vmatprep.mubr.bf16.mxu0 0
  %201 = vmatmul.mubr.bf16.gmra.mrb[0].mxu0 %v78
  %v202 = vpop.f32.mrb[0].mxu0
  %v203 = vadd.f32 %v156, %v202
  %v204 = vpop.f32.mrb[0].mxu0
  %v205 = vadd.f32 %v160, %v204
  %v206 = vpop.f32.mrb[0].mxu0
  %v207 = vadd.f32 %v156, %v206
  %v208 = vpop.f32.mrb[0].mxu0
  %v209 = vadd.f32 %v160, %v208
  %210 = vdwg.mxu0
  %211 = vmatprep.subr.bf16.mxu0 0
  %212 = vmatpush1.bf16.msra.mxu0 %v129
  %213 = vmatprep.subr.bf16.mxu0 0
  %214 = vmatpush1.bf16.msra.mxu0 %v132
  %215 = vmatprep.subr.bf16.mxu0 0
  %216 = vmatpush1.bf16.msra.mxu0 %v135
  %217 = vmatprep.subr.bf16.mxu0 0
  %218 = vmatpush1.bf16.msra.mxu0 %v138
  %219 = vmatprep.subr.bf16.mxu0 0
  %220 = vmatpush1.bf16.msra.mxu0 %v141
  %221 = vmatprep.subr.bf16.mxu0 0
  %222 = vmatpush1.bf16.msra.mxu0 %v144
  %223 = vmatprep.subr.bf16.mxu0 0
  %224 = vmatpush1.bf16.msra.mxu0 %v147
  %225 = vmatprep.subr.bf16.mxu0 0
  %226 = vmatpush1.bf16.msra.mxu0 %v150
  %227 = vmatprep.subr.bf16.mxu0 0
  %228 = vmatpush1.bf16.msra.mxu0 0
  %229 = vmatprep.subr.bf16.mxu0 0
  %230 = vmatpush1.bf16.msra.mxu0 0
  %231 = vmatprep.subr.bf16.mxu0 0
  %232 = vmatpush1.bf16.msra.mxu0 0
  %233 = vmatprep.subr.bf16.mxu0 0
  %234 = vmatpush1.bf16.msra.mxu0 0
  %235 = vmatprep.subr.bf16.mxu0 0
  %236 = vmatpush1.bf16.msra.mxu0 0
  %237 = vmatprep.subr.bf16.mxu0 0
  %238 = vmatpush1.bf16.msra.mxu0 0
  %239 = vmatprep.subr.bf16.mxu0 0
  %240 = vmatpush1.bf16.msra.mxu0 0
  %241 = vmatprep.subr.bf16.mxu0 0
  %242 = vmatpush1.bf16.msra.mxu0 0
  %243 = vmatprep.mubr.bf16.mxu0 0
  %244 = vmatmul.mubr.bf16.gmra.mrb[0].mxu0 %v78
  %v245 = vpop.f32.mrb[0].mxu0
  %v246 = vadd.f32 %v164, %v245
  %v247 = vpop.f32.mrb[0].mxu0
  %v248 = vpop.f32.mrb[0].mxu0
  %v249 = vadd.f32 %v164, %v248
  %v250 = vpop.f32.mrb[0].mxu0
  %251 = vdwg.mxu0
  %252 = vst [vmem:[%s5] sm:$0xff] %v203
  %253 = vst [vmem:[%s5 + $0x8] sm:$0xff] %v205
  %254 = vst [vmem:[%s5 + $0x10] sm:$0xff] %v246
  %255 = vst [vmem:[%s5 + $0x18] sm:$0xff] %v207
  %256 = vst [vmem:[%s5 + $0x20] sm:$0xff] %v209
  %257 = vst [vmem:[%s5 + $0x28] sm:$0xff] %v249
  // Predicated region
  $region22: #{encoder_forward.16} parent=0 // pred_check
    _
  $region23: #{encoder_forward.16} parent=0 // pred_check_branch
    %259 = sbr.rel (0) target = $region25
  $region24: #{encoder_forward.16} parent=0 // pred_region
    _
  $region25: #{encoder_forward.16} parent=0 // pred_fallthru
    _
  // Predicated region
  $region26: #{encoder_forward.16} parent=0 // pred_check
    _
  $region27: #{encoder_forward.16} parent=0 // pred_check_branch
    %261 = sbr.rel (0) target = $region29
  $region28: #{encoder_forward.16} parent=0 // pred_region
    _
  $region29: #{encoder_forward.16} parent=0 // pred_fallthru
    _

// kernel: encoder_forward.21
$region0: #{encoder_forward.21}
  #allocation0 [shape = 'u32[]', space=smem, size = 0x4, offset = 0x4, fixed_abs, tag = 'smem constant byte address 0x4 - core index']
  #allocation1 [shape = 'u32[144,128]{1,0:T(1,128)}', space=vmem, size = 0x12000, scoped, tag = 'internal scratch']
  %s0 = inlined_call_operand.vmem [shape: f32[16,128], index: 0, kind: input, shape index: {}]
  %s1 = inlined_call_operand.vmem [shape: f32[1,128], index: 1, kind: input, shape index: {}]
  %s2 = inlined_call_operand.vmem [shape: f32[1,128], index: 2, kind: input, shape index: {}]
  %s3 = inlined_call_operand.hbm [shape: f32[16,128], index: 3, kind: output, shape index: {}]
  %s4 = sld [smem:[#allocation0]]
  $region22: #{encoder_forward.21} parent=0
    _
  %s6 = ssub.s32 1, %s4
  %s7 = scalar_select 0, %s6, %s4
  $region1: #{encoder_forward.21} parent=0
    #allocation2 [shape = 'u8[8192]{0}', space=vmem, size = 0x2000, scoped, tag = 'output window, operand 0, single buffered']
    #allocation3 [shape = 's32[1]{0}', space=sflag, size = 0x4, scoped, tag = 'scoped memory for encoder_forward.21']
    %8 = vsyncpa [#allocation3], 0
    // Predicated region
    $region2: #{encoder_forward.21} parent=1 // pred_check
      _
    $region3: #{encoder_forward.21} parent=1 // pred_check_branch
      %10 = sbr.rel (0) target = $region5
    $region4: #{encoder_forward.21} parent=1 // pred_region
      _
    $region5: #{encoder_forward.21} parent=1 // pred_fallthru
      _
    // Predicated region
    $region6: #{encoder_forward.21} parent=1 // pred_check
      _
    $region7: #{encoder_forward.21} parent=1 // pred_check_branch
      %12 = sbr.rel (0) target = $region9
    $region8: #{encoder_forward.21} parent=1 // pred_region
      _
    $region9: #{encoder_forward.21} parent=1 // pred_fallthru
      _
    // Predicated region
    $region10: #{encoder_forward.21} parent=1 // pred_check
      _
    $region11: #{encoder_forward.21} parent=1 // pred_check_branch
      %14 = sbr.rel (0) target = $region13
    $region12: #{encoder_forward.21} parent=1 // pred_region
      _
    $region13: #{encoder_forward.21} parent=1 // pred_fallthru
      _
    %v15 = vld [vmem:[%s0] sm:$0xff]
    %v16 = vld [vmem:[%s0 + $0x8] sm:$0xff]
    %17 = vadd.xlane.f32.xlu0 %v15
    %v18 = vpop.xlane.xlu0 %17
    %19 = vadd.xlane.f32.xlu0 %v16
    %v20 = vpop.xlane.xlu0 %19
    %v21 = vrcp.pop 128.0
    %v22 = vmul.f32 %v18, %v21
    %v23 = vmul.f32 %v20, %v21
    %v24 = vsub.f32 %v15, %v22
    %v25 = vsub.f32 %v16, %v23
    %v26 = vmul.f32 %v24, %v24
    %v27 = vmul.f32 %v25, %v25
    %28 = vadd.xlane.f32.xlu0 %v26
    %v29 = vpop.xlane.xlu0 %28
    %30 = vadd.xlane.f32.xlu0 %v27
    %v31 = vpop.xlane.xlu0 %30
    %v32 = vmul.f32 %v29, 0.007874016
    %v33 = vmul.f32 %v31, 0.007874016
    %v34 = vrsqrt.pop %v32
    %v35 = vmul.f32 %v32, %v34
    %vm36 = vcmp.eq.f32.partialorder %v32, inf
    %v37 = vsel %vm36, %v32, %v35
    %vm38 = vcmp.eq.f32.partialorder %v32, 0.0
    %v39 = vand.u32 %v32, 2147483648
    %v40 = vsel %vm38, %v39, %v37
    %v41 = vrsqrt.pop %v33
    %v42 = vmul.f32 %v33, %v41
    %vm43 = vcmp.eq.f32.partialorder %v33, inf
    %v44 = vsel %vm43, %v33, %v42
    %vm45 = vcmp.eq.f32.partialorder %v33, 0.0
    %v46 = vand.u32 %v33, 2147483648
    %v47 = vsel %vm45, %v46, %v44
    %v48 = vadd.f32 %v40, 1e-06
    %v49 = vadd.f32 %v47, 1e-06
    %v50 = vrcp.pop %v48
    %v51 = vrcp.pop %v49
    %v52 = vld [vmem:[%s1] sm:$0x1]
    %v54 = vlaneseq
    %v55 = vshrl.u32 %v54, 7
    %v56 = vsub.s32 0, %v55
    %v57 = vrot.slane %v52, %v56
    %v59 = vmul.f32 %v57, %v50
    %v60 = vmul.f32 %v57, %v51
    %v61 = vmul.f32 %v24, %v59
    %v62 = vmul.f32 %v25, %v60
    %v63 = vld [vmem:[%s2] sm:$0x1]
    %v65 = vlaneseq
    %v66 = vshrl.u32 %v65, 7
    %v67 = vsub.s32 0, %v66
    %v68 = vrot.slane %v63, %v67
    %v70 = vadd.f32 %v61, %v68
    %v71 = vadd.f32 %v62, %v68
    %72 = vst [vmem:[#allocation2] sm:$0xff] %v70
    %73 = vst [vmem:[#allocation2 + $0x8] sm:$0xff] %v71
    // Predicated region
    $region14: #{encoder_forward.21} parent=1 // pred_check
      _
    $region15: #{encoder_forward.21} parent=1 // pred_check_branch
      %75 = sbr.rel (0) target = $region17
    $region16: #{encoder_forward.21} parent=1 // pred_region
      %s77 = ssub.s32 256, 256
      %78 = vsyncadd [#allocation3], %s77
      %s79 = sshll.u32 [#allocation2], 4
      %s80 = int_to_ptr.vmem [resolvable:$true] %s79
      %85 = dma.vmem_to_hbm [thread:$0]  %s80, 256, %s3, [#allocation3], 128, 128, 8
    $region17: #{encoder_forward.21} parent=1 // pred_fallthru
      _
    // Predicated region
    $region18: #{encoder_forward.21} parent=1 // pred_check
      _
    $region19: #{encoder_forward.21} parent=1 // pred_check_branch
      %87 = sbr.rel (0) target = $region21
    $region20: #{encoder_forward.21} parent=1 // pred_region
      %88 = dma.done [#allocation3], 256
    $region21: #{encoder_forward.21} parent=1 // pred_fallthru
      _
    %89 = vsyncpa [#allocation3], 1

</llo_original>
